<compile_context>
chip_gen: v7x
topology: tpu7x:2x2x1
jax: 0.10.0
libtpu: 0.0.40
codegen_flags: <defaults>
</compile_context>

<pallas_src>
import functools

import jax
import jax.numpy as jnp
import numpy as np
from jax.experimental import pallas as pl
from jax.experimental.pallas import tpu as pltpu

EPS = 1e-6
MLP_CHUNK = 512                       # multiple of 128; I is zero-padded to it


def _round_up(x, m):
    return (x + m - 1) // m * m


@functools.lru_cache(maxsize=1)
def _vmem_limit_bytes():
    try:
        cap = int(pltpu.get_tpu_info().vmem_capacity_bytes)
        return max(32 * 1024 * 1024, min(int(cap * 0.8), 110 * 1024 * 1024))
    except Exception:
        return 64 * 1024 * 1024


# ----------------------------- kernel helpers ------------------------------
def _layernorm(x, g, b):
    mu = jnp.mean(x, axis=-1, keepdims=True)
    var = jnp.mean((x - mu) ** 2, axis=-1, keepdims=True)
    return (x - mu) * jax.lax.rsqrt(var + EPS) * g + b


def _gelu_tanh(x):
    c = jnp.sqrt(2.0 / jnp.pi).astype(x.dtype)
    return 0.5 * x * (1.0 + jnp.tanh(c * (x + 0.044715 * x * x * x)))


def _softmax_rows(s):
    s = s - jnp.max(s, axis=-1, keepdims=True)
    p = jnp.exp(s)
    return p * pl.reciprocal(jnp.sum(p, axis=-1, keepdims=True), approx=True)


# ------------------------------ Pallas kernels ------------------------------
def encoder_kernel(patch_ref, wp_ref, bp_ref, pos_ref,
                   ln1g_ref, ln1b_ref, wqkv_ref, bqkv_ref, wo_ref, bo_ref,
                   ln2g_ref, ln2b_ref, w1_ref, b1_ref, w2_ref, b2_ref,
                   o_ref, h2_ref, *, num_heads, head_dim, hd_pad):
    """grid = (B/Bb, L, I_pad/Ic).

    o_ref (Bb,S,H) f32 is the resident activation / residual accumulator.
    h2_ref (Bb,S,H) bf16 scratch holds LayerNorm2(x+attn) across MLP chunks.
    """
    l = pl.program_id(1)
    ic = pl.program_id(2)
    Bb, S, H = o_ref.shape
    Hp = num_heads * hd_pad
    scale = 1.0 / float(np.sqrt(head_dim))

    # ---- seed the resident activation with the patch embedding -------------
    @pl.when(jnp.logical_and(l == 0, ic == 0))
    def _():
        Kp = patch_ref.shape[-1]
        p = patch_ref[...].reshape(Bb * S, Kp).astype(jnp.bfloat16)
        e = jnp.dot(p, wp_ref[...],
                    preferred_element_type=jnp.float32) + bp_ref[...]
        o_ref[...] = e.reshape(Bb, S, H) + pos_ref[...][None]

    # ---- self-attention half (once per layer, at the first MLP chunk) ------
    @pl.when(ic == 0)
    def _():
        x = o_ref[...].reshape(Bb * S, H)                     # carried act, f32
        h = _layernorm(x, ln1g_ref[0], ln1b_ref[0]).astype(jnp.bfloat16)
        qkv = jnp.dot(h, wqkv_ref[0],
                      preferred_element_type=jnp.float32) + bqkv_ref[0]
        for b in range(Bb):                                   # per-image attn
            rows = slice(b * S, (b + 1) * S)
            acc = x[rows]                                     # residual (S,H)
            for hh in range(num_heads):                       # lane-aligned
                c0 = hh * hd_pad
                qh = (qkv[rows, c0:c0 + hd_pad] * scale).astype(jnp.bfloat16)
                kh = qkv[rows, Hp + c0:Hp + c0 + hd_pad].astype(jnp.bfloat16)
                vh = qkv[rows, 2 * Hp + c0:2 * Hp + c0 + hd_pad].astype(jnp.bfloat16)
                s = jnp.dot(qh, kh.T, preferred_element_type=jnp.float32)
                p = _softmax_rows(s)
                ctx = jnp.dot(p.astype(jnp.bfloat16), vh,
                              preferred_element_type=jnp.float32)
                # fold the output projection into the head loop (no concat)
                acc = acc + jnp.dot(ctx.astype(jnp.bfloat16),
                                    wo_ref[0, c0:c0 + hd_pad, :],
                                    preferred_element_type=jnp.float32)
            acc = acc + bo_ref[0]
            h2_ref[b] = _layernorm(acc, ln2g_ref[0],
                                   ln2b_ref[0]).astype(jnp.bfloat16)
            o_ref[b] = acc + b2_ref[0]        # pre-add fc2 bias; chunks add rest

    # ---- one MLP intermediate chunk (every grid step) -----------------------
    h2 = h2_ref[...].reshape(Bb * S, H)
    m = jnp.dot(h2, w1_ref[0], preferred_element_type=jnp.float32) + b1_ref[0]
    m = _gelu_tanh(m).astype(jnp.bfloat16)
    contrib = jnp.dot(m, w2_ref[0], preferred_element_type=jnp.float32)
    o_ref[...] = o_ref[...] + contrib.reshape(Bb, S, H)


def head_kernel(x_ref, post_g, post_b, probe_ref, hwq, hbq, hwkv, hbkv,
                hwo, hbo, lng, lnb, hw1, hb1, hw2, hb2, o_ref, h2_ref,
                *, num_heads, head_dim, hd_pad):
    """post_layernorm + attention-pooling head; grid = (B, I_pad/Ic)."""
    ic = pl.program_id(1)
    Hp = num_heads * hd_pad
    scale = 1.0 / float(np.sqrt(head_dim))

    @pl.when(ic == 0)
    def _():
        xn = _layernorm(x_ref[0], post_g[...], post_b[...])   # (S, H) f32
        xb = xn.astype(jnp.bfloat16)
        q = jnp.dot(probe_ref[...].astype(jnp.bfloat16), hwq[...],
                    preferred_element_type=jnp.float32) + hbq[...]      # (1,Hp)
        kv = jnp.dot(xb, hwkv[...],
                     preferred_element_type=jnp.float32) + hbkv[...]    # (S,2Hp)
        H = x_ref.shape[-1]
        attn = jnp.zeros((1, H), jnp.float32)
        for hh in range(num_heads):
            c0 = hh * hd_pad
            qh = (q[:, c0:c0 + hd_pad] * scale).astype(jnp.bfloat16)
            kh = kv[:, c0:c0 + hd_pad].astype(jnp.bfloat16)
            vh = kv[:, Hp + c0:Hp + c0 + hd_pad].astype(jnp.bfloat16)
            s = jnp.dot(qh, kh.T, preferred_element_type=jnp.float32)   # (1,S)
            p = _softmax_rows(s)
            ctx = jnp.dot(p.astype(jnp.bfloat16), vh,
                          preferred_element_type=jnp.float32)           # (1,hp)
            attn = attn + jnp.dot(ctx.astype(jnp.bfloat16),
                                  hwo[c0:c0 + hd_pad, :],
                                  preferred_element_type=jnp.float32)
        attn = attn + hbo[...]
        h2_ref[...] = _layernorm(attn, lng[...], lnb[...]).astype(jnp.bfloat16)
        o_ref[0] = attn + hb2[...]            # residual + fc2 bias

    m = jnp.dot(h2_ref[...], hw1[...],
                preferred_element_type=jnp.float32) + hb1[...]
    m = _gelu_tanh(m).astype(jnp.bfloat16)
    o_ref[0] = o_ref[0] + jnp.dot(m, hw2[...],
                                  preferred_element_type=jnp.float32)


# ------------------------------ pallas wrappers ------------------------------
def run_encoder(patches, E, W, *, num_heads, head_dim, hd_pad,
                batch_block, chunk):
    B, S, Kp = patches.shape
    H = E['pos'].shape[1]
    L = W['wqkv'].shape[0]
    I_pad = W['w1'].shape[-1]
    NC = I_pad // chunk
    nb = B // batch_block

    def full3(a):
        return pl.BlockSpec(tuple(a.shape),
                            lambda b, l, ic, n=a.ndim: (0,) * n)

    def per_layer(a):
        return pl.BlockSpec((1,) + tuple(a.shape[1:]),
                            lambda b, l, ic, n=a.ndim - 1: (l,) + (0,) * n)

    in_specs = [
        pl.BlockSpec((batch_block, S, Kp), lambda b, l, ic: (b, 0, 0)),
        full3(E['wp']), full3(E['b']), full3(E['pos']),
        per_layer(W['ln1_g']), per_layer(W['ln1_b']),
        per_layer(W['wqkv']), per_layer(W['bqkv']),
        per_layer(W['wo']), per_layer(W['bo']),
        per_layer(W['ln2_g']), per_layer(W['ln2_b']),
        pl.BlockSpec((1, H, chunk), lambda b, l, ic: (l, 0, ic)),   # w1 chunk
        pl.BlockSpec((1, 1, chunk), lambda b, l, ic: (l, 0, ic)),   # b1 chunk
        pl.BlockSpec((1, chunk, H), lambda b, l, ic: (l, ic, 0)),   # w2 chunk
        per_layer(W['b2']),
    ]
    out_spec = pl.BlockSpec((batch_block, S, H), lambda b, l, ic: (b, 0, 0))

    return pl.pallas_call(
        functools.partial(encoder_kernel, num_heads=num_heads,
                          head_dim=head_dim, hd_pad=hd_pad),
        out_shape=jax.ShapeDtypeStruct((B, S, H), jnp.float32),
        grid=(nb, L, NC),
        in_specs=in_specs,
        out_specs=out_spec,
        scratch_shapes=[pltpu.VMEM((batch_block, S, H), jnp.bfloat16)],
        compiler_params=pltpu.CompilerParams(
            dimension_semantics=("parallel", "arbitrary", "arbitrary"),
            vmem_limit_bytes=_vmem_limit_bytes()),
    )(patches, E['wp'], E['b'], E['pos'],
      W['ln1_g'], W['ln1_b'], W['wqkv'], W['bqkv'], W['wo'], W['bo'],
      W['ln2_g'], W['ln2_b'], W['w1'], W['b1'], W['w2'], W['b2'])


def run_head(x, P, *, num_heads, head_dim, hd_pad, chunk):
    B, S, H = x.shape
    I_pad = P['hw1'].shape[-1]
    NC = I_pad // chunk

    def full(a):
        return pl.BlockSpec(tuple(a.shape), lambda b, ic, n=a.ndim: (0,) * n)

    in_specs = [
        pl.BlockSpec((1, S, H), lambda b, ic: (b, 0, 0)),
        full(P['post_g']), full(P['post_b']), full(P['probe']),
        full(P['hwq']), full(P['hbq']), full(P['hwkv']), full(P['hbkv']),
        full(P['hwo']), full(P['hbo']), full(P['hln_g']), full(P['hln_b']),
        pl.BlockSpec((H, chunk), lambda b, ic: (0, ic)),            # hw1 chunk
        pl.BlockSpec((1, chunk), lambda b, ic: (0, ic)),            # hb1 chunk
        pl.BlockSpec((chunk, H), lambda b, ic: (ic, 0)),            # hw2 chunk
        full(P['hb2']),
    ]
    out = pl.pallas_call(
        functools.partial(head_kernel, num_heads=num_heads,
                          head_dim=head_dim, hd_pad=hd_pad),
        out_shape=jax.ShapeDtypeStruct((B, 1, H), jnp.float32),
        grid=(B, NC),
        in_specs=in_specs,
        out_specs=pl.BlockSpec((1, 1, H), lambda b, ic: (b, 0, 0)),
        scratch_shapes=[pltpu.VMEM((1, H), jnp.bfloat16)],
        compiler_params=pltpu.CompilerParams(
            dimension_semantics=("parallel", "arbitrary"),
            vmem_limit_bytes=_vmem_limit_bytes()),
    )(x, P['post_g'], P['post_b'], P['probe'], P['hwq'], P['hbq'],
      P['hwkv'], P['hbkv'], P['hwo'], P['hbo'], P['hln_g'], P['hln_b'],
      P['hw1'], P['hb1'], P['hw2'], P['hb2'])
    return out[:, 0, :]


# ------------------------------ model wrapper -------------------------------
def patchify(pixels, patch, k_pad):
    """NCHW pixels -> (B, num_patches, Kp) in conv-weight order, zero-padded."""
    B, C, Him, Wim = pixels.shape
    gh, gw = Him // patch, Wim // patch
    x = pixels.reshape(B, C, gh, patch, gw, patch)
    x = x.transpose(0, 2, 4, 1, 3, 5)                # (B, gh, gw, C, p, p)
    x = x.reshape(B, gh * gw, C * patch * patch)
    K = C * patch * patch
    if k_pad > K:
        x = jnp.pad(x, ((0, 0), (0, 0), (0, k_pad - K)))
    return x


def prepare_params(params, *, num_heads, chunk=MLP_CHUNK):
    """Fuse / stack / zero-pad / bf16-cast torch-layout params for the kernels."""
    bf = jnp.bfloat16
    H = params['pos'].shape[1]
    hd = H // num_heads
    hd_pad = _round_up(hd, 128)                 # lane-aligned head dim
    I = params['hw1'].shape[1]
    I_pad = _round_up(I, chunk)
    K = int(np.prod(params['patch_w'].shape[1:]))
    Kp = _round_up(K, 128)

    def pad_cols_heads(w):        # (in, nh*hd) -> (in, nh*hd_pad), zero cols
        i = w.shape[0]
        w = w.reshape(i, num_heads, hd)
        w = jnp.pad(w, ((0, 0), (0, 0), (0, hd_pad - hd)))
        return w.reshape(i, num_heads * hd_pad)

    def pad_rows_heads(w):        # (nh*hd, out) -> (nh*hd_pad, out), zero rows
        o = w.shape[1]
        w = w.reshape(num_heads, hd, o)
        w = jnp.pad(w, ((0, 0), (0, hd_pad - hd), (0, 0)))
        return w.reshape(num_heads * hd_pad, o)

    def pad_bias_heads(b):
        b = b.reshape(1, num_heads, hd)
        b = jnp.pad(b, ((0, 0), (0, 0), (0, hd_pad - hd)))
        return b.reshape(1, num_heads * hd_pad)

    pad_w1 = lambda w: jnp.pad(w, ((0, 0), (0, I_pad - I)))
    pad_b1 = lambda b: jnp.pad(b, ((0, 0), (0, I_pad - I)))
    pad_w2 = lambda w: jnp.pad(w, ((0, I_pad - I), (0, 0)))

    wp = params['patch_w'].reshape(H, K).T                 # (K, H)
    wp = jnp.pad(wp, ((0, Kp - K), (0, 0))).astype(bf)
    embed = dict(wp=wp, b=params['patch_b'], pos=params['pos'])

    Ls = params['layers']
    enc = dict(
        ln1_g=jnp.stack([l['ln1_g'] for l in Ls]),
        ln1_b=jnp.stack([l['ln1_b'] for l in Ls]),
        wqkv=jnp.stack([jnp.concatenate(
            [pad_cols_heads(l['wq']), pad_cols_heads(l['wk']),
             pad_cols_heads(l['wv'])], axis=1) for l in Ls]).astype(bf),
        bqkv=jnp.stack([jnp.concatenate(
            [pad_bias_heads(l['bq']), pad_bias_heads(l['bk']),
             pad_bias_heads(l['bv'])], axis=1) for l in Ls]),
        wo=jnp.stack([pad_rows_heads(l['wo']) for l in Ls]).astype(bf),
        bo=jnp.stack([l['bo'] for l in Ls]),
        ln2_g=jnp.stack([l['ln2_g'] for l in Ls]),
        ln2_b=jnp.stack([l['ln2_b'] for l in Ls]),
        w1=jnp.stack([pad_w1(l['w1']) for l in Ls]).astype(bf),
        b1=jnp.stack([pad_b1(l['b1']) for l in Ls]),
        w2=jnp.stack([pad_w2(l['w2']) for l in Ls]).astype(bf),
        b2=jnp.stack([l['b2'] for l in Ls]),
    )

    head = dict(
        post_g=params['post_g'], post_b=params['post_b'], probe=params['probe'],
        hwq=pad_cols_heads(params['hwq']).astype(bf),
        hbq=pad_bias_heads(params['hbq']),
        hwkv=jnp.concatenate([pad_cols_heads(params['hwk']),
                              pad_cols_heads(params['hwv'])], axis=1).astype(bf),
        hbkv=jnp.concatenate([pad_bias_heads(params['hbk']),
                              pad_bias_heads(params['hbv'])], axis=1),
        hwo=pad_rows_heads(params['hwo']).astype(bf), hbo=params['hbo'],
        hln_g=params['hln_g'], hln_b=params['hln_b'],
        hw1=pad_w1(params['hw1']).astype(bf), hb1=pad_b1(params['hb1']),
        hw2=pad_w2(params['hw2']).astype(bf), hb2=params['hb2'],
    )
    meta = dict(hd=hd, hd_pad=hd_pad, I_pad=I_pad, K=K, Kp=Kp, chunk=chunk)
    return dict(embed=embed, enc=enc, head=head, meta=meta)


def siglip_forward(pixels, prep, *, patch, num_heads, batch_block=None):
    meta = prep['meta']
    patches = patchify(pixels, patch, meta['Kp'])
    B = patches.shape[0]
    if batch_block is None:
        batch_block = 1
        for cand in (4, 3, 2, 1):
            if B % cand == 0:
                batch_block = cand
                break
    x = run_encoder(patches, prep['embed'], prep['enc'],
                    num_heads=num_heads, head_dim=meta['hd'],
                    hd_pad=meta['hd_pad'], batch_block=batch_block,
                    chunk=meta['chunk'])
    return run_head(x, prep['head'], num_heads=num_heads,
                    head_dim=meta['hd'], hd_pad=meta['hd_pad'],
                    chunk=meta['chunk'])                       # (B, H)


# -------------------------- pure-JAX reference -------------------------------
def ref_forward(pixels, params, *, patch, num_heads):
    H = params['pos'].shape[1]
    K = int(np.prod(params['patch_w'].shape[1:]))
    patches = patchify(pixels, patch, K)
    wp = params['patch_w'].reshape(H, K).T
    x = patches @ wp + params['patch_b'] + params['pos']
    B, S, _ = x.shape
    hd = H // num_heads

    def attn(q, k, v):
        q = q.reshape(q.shape[0], q.shape[1], num_heads, hd)
        k = k.reshape(B, S, num_heads, hd)
        v = v.reshape(B, S, num_heads, hd)
        s = jnp.einsum('bqhd,bkhd->bhqk', q, k) / np.sqrt(hd)
        p = jax.nn.softmax(s, axis=-1)
        return jnp.einsum('bhqk,bkhd->bqhd', p, v).reshape(B, q.shape[1], H)

    for L in params['layers']:
        h = _layernorm(x, L['ln1_g'], L['ln1_b'])
        a = attn(h @ L['wq'] + L['bq'], h @ L['wk'] + L['bk'],
                 h @ L['wv'] + L['bv'])
        x = x + (a @ L['wo'] + L['bo'])
        h2 = _layernorm(x, L['ln2_g'], L['ln2_b'])
        x = x + (_gelu_tanh(h2 @ L['w1'] + L['b1']) @ L['w2'] + L['b2'])

    x = _layernorm(x, params['post_g'], params['post_b'])
    probe = jnp.broadcast_to(params['probe'][None], (B, 1, H))
    a = attn(probe @ params['hwq'] + params['hbq'],
             x @ params['hwk'] + params['hbk'],
             x @ params['hwv'] + params['hbv'])
    a = a @ params['hwo'] + params['hbo']
    h = _layernorm(a, params['hln_g'], params['hln_b'])
    m = _gelu_tanh(h @ params['hw1'] + params['hb1']) @ params['hw2'] + params['hb2']
    return (a + m)[:, 0]


# ------------------------------ parameter init -------------------------------
def init_params(key, *, hidden, channels, image, patch, layer_num, inner, heads):
    num_pos = (image // patch) ** 2
    keys = iter(jax.random.split(key, 16 * (layer_num + 4)))

    def nrm(shape, s=0.02):
        return jax.random.normal(next(keys), shape, jnp.float32) * s

    params = {
        'patch_w': nrm((hidden, channels, patch, patch)),   # torch conv layout
        'patch_b': nrm((1, hidden)),
        'pos': nrm((num_pos, hidden)),
        'post_g': jnp.ones((1, hidden), jnp.float32),
        'post_b': jnp.zeros((1, hidden), jnp.float32),
        'probe': nrm((1, hidden), 1.0),
        'hwq': nrm((hidden, hidden)), 'hbq': nrm((1, hidden)),
        'hwk': nrm((hidden, hidden)), 'hbk': nrm((1, hidden)),
        'hwv': nrm((hidden, hidden)), 'hbv': nrm((1, hidden)),
        'hwo': nrm((hidden, hidden)), 'hbo': nrm((1, hidden)),
        'hln_g': jnp.ones((1, hidden), jnp.float32),
        'hln_b': jnp.zeros((1, hidden), jnp.float32),
        'hw1': nrm((hidden, inner)), 'hb1': nrm((1, inner)),
        'hw2': nrm((inner, hidden)), 'hb2': nrm((1, hidden)),
        'layers': [],
    }
    for _ in range(layer_num):
        params['layers'].append(dict(
            ln1_g=jnp.ones((1, hidden), jnp.float32),
            ln1_b=jnp.zeros((1, hidden), jnp.float32),
            wq=nrm((hidden, hidden)), bq=nrm((1, hidden)),
            wk=nrm((hidden, hidden)), bk=nrm((1, hidden)),
            wv=nrm((hidden, hidden)), bv=nrm((1, hidden)),
            wo=nrm((hidden, hidden)), bo=nrm((1, hidden)),
            ln2_g=jnp.ones((1, hidden), jnp.float32),
            ln2_b=jnp.zeros((1, hidden), jnp.float32),
            w1=nrm((hidden, inner)), b1=nrm((1, inner)),
            w2=nrm((inner, hidden)), b2=nrm((1, hidden)),
        ))
    return params


# ----------------------------------- main ------------------------------------
if __name__ == "__main__":
    # small config consistent with the module's forward
    BATCH, CHANNELS, IMAGE, PATCH = 2, 4, 16, 4
    HIDDEN, INNER, HEADS, LAYERS = 32, 64, 4, 2

    key = jax.random.PRNGKey(0)
    k_pix, k_par = jax.random.split(key)
    pixels = jax.random.normal(k_pix, (BATCH, CHANNELS, IMAGE, IMAGE), jnp.float32)
    params = init_params(k_par, hidden=HIDDEN, channels=CHANNELS, image=IMAGE,
                         patch=PATCH, layer_num=LAYERS, inner=INNER, heads=HEADS)
    prep = prepare_params(params, num_heads=HEADS)

    out = siglip_forward(pixels, prep, patch=PATCH, num_heads=HEADS)
    out = jax.block_until_ready(out)
    assert out.shape == (BATCH, HIDDEN)

    ref = jax.block_until_ready(
        ref_forward(pixels, params, patch=PATCH, num_heads=HEADS))
    np.testing.assert_allclose(np.asarray(out), np.asarray(ref),
                               rtol=5e-2, atol=5e-2)
    print("KERNEL_OK")
</pallas_src>

<mosaic_0001>
module attributes {stable_mosaic.version = 11 : i64} {
  func.func @encoder_kernel(%arg0: i32, %arg1: i32, %arg2: i32, %arg3: memref<2x16x128xf32, #tpu.memory_space<vmem>>, %arg4: memref<128x32xbf16, #tpu.memory_space<vmem>>, %arg5: memref<1x32xf32, #tpu.memory_space<vmem>>, %arg6: memref<16x32xf32, #tpu.memory_space<vmem>>, %arg7: memref<1x1x32xf32, #tpu.memory_space<vmem>>, %arg8: memref<1x1x32xf32, #tpu.memory_space<vmem>>, %arg9: memref<1x32x1536xbf16, #tpu.memory_space<vmem>>, %arg10: memref<1x1x1536xf32, #tpu.memory_space<vmem>>, %arg11: memref<1x512x32xbf16, #tpu.memory_space<vmem>>, %arg12: memref<1x1x32xf32, #tpu.memory_space<vmem>>, %arg13: memref<1x1x32xf32, #tpu.memory_space<vmem>>, %arg14: memref<1x1x32xf32, #tpu.memory_space<vmem>>, %arg15: memref<1x32x512xbf16, #tpu.memory_space<vmem>>, %arg16: memref<1x1x512xf32, #tpu.memory_space<vmem>>, %arg17: memref<1x512x32xbf16, #tpu.memory_space<vmem>>, %arg18: memref<1x1x32xf32, #tpu.memory_space<vmem>>, %arg19: memref<2x16x32xf32, #tpu.memory_space<vmem>>, %arg20: memref<2x16x32xbf16, #tpu.memory_space<vmem>>) attributes {dimension_semantics = [#tpu.dimension_semantics<parallel>, #tpu.dimension_semantics<arbitrary>, #tpu.dimension_semantics<arbitrary>], iteration_bounds = array<i64: 1, 2, 1>, scalar_prefetch = 0 : i64, scratch_operands = 1 : i64, tpu.core_type = #tpu.core_type<tc>, window_params = [{transform_indices = @transform_0, window_bounds = array<i64: 2, 16, 128>}, {pipeline_mode = #tpu.pipeline_mode<synchronous>, transform_indices = @transform_1, window_bounds = array<i64: 128, 32>}, {pipeline_mode = #tpu.pipeline_mode<synchronous>, transform_indices = @transform_2, window_bounds = array<i64: 1, 32>}, {pipeline_mode = #tpu.pipeline_mode<synchronous>, transform_indices = @transform_3, window_bounds = array<i64: 16, 32>}, {transform_indices = @transform_4, window_bounds = array<i64: 1, 1, 32>}, {transform_indices = @transform_5, window_bounds = array<i64: 1, 1, 32>}, {transform_indices = @transform_6, window_bounds = array<i64: 1, 32, 1536>}, {transform_indices = @transform_7, window_bounds = array<i64: 1, 1, 1536>}, {transform_indices = @transform_8, window_bounds = array<i64: 1, 512, 32>}, {transform_indices = @transform_9, window_bounds = array<i64: 1, 1, 32>}, {transform_indices = @transform_10, window_bounds = array<i64: 1, 1, 32>}, {transform_indices = @transform_11, window_bounds = array<i64: 1, 1, 32>}, {transform_indices = @transform_12, window_bounds = array<i64: 1, 32, 512>}, {transform_indices = @transform_13, window_bounds = array<i64: 1, 1, 512>}, {transform_indices = @transform_14, window_bounds = array<i64: 1, 512, 32>}, {transform_indices = @transform_15, window_bounds = array<i64: 1, 1, 32>}, {transform_indices = @transform_16, window_bounds = array<i64: 2, 16, 32>}]} {
    %c0_i32 = arith.constant 0 : i32
    %0 = arith.cmpi eq, %arg1, %c0_i32 : i32
    %c0_i32_0 = arith.constant 0 : i32
    %1 = arith.cmpi eq, %arg2, %c0_i32_0 : i32
    %2 = arith.andi %0, %1 : i1
    %3 = arith.extui %2 : i1 to i32
    %c0_i32_1 = arith.constant 0 : i32
    %4 = arith.cmpi ne, %3, %c0_i32_1 : i32
    scf.if %4 {
      %c0_26 = arith.constant 0 : index
      %c0_27 = arith.constant 0 : index
      %c0_28 = arith.constant 0 : index
      %39 = vector.load %arg3[%c0_26, %c0_27, %c0_28] : memref<2x16x128xf32, #tpu.memory_space<vmem>>, vector<2x16x128xf32>
      %40 = vector.shape_cast %39 : vector<2x16x128xf32> to vector<32x128xf32>
      %41 = arith.truncf %40 : vector<32x128xf32> to vector<32x128xbf16>
      %c0_29 = arith.constant 0 : index
      %c0_30 = arith.constant 0 : index
      %42 = vector.load %arg4[%c0_29, %c0_30] : memref<128x32xbf16, #tpu.memory_space<vmem>>, vector<128x32xbf16>
      %cst_31 = arith.constant dense<0.000000e+00> : vector<32x32xf32>
      %43 = tpu.matmul %41, %42, %cst_31 {dimension_numbers = #tpu.dot_dimension_numbers<[1], [0], [0], [1], [0, 0, 1, 1], [], []>} : vector<32x128xbf16>, vector<128x32xbf16>, vector<32x32xf32> -> vector<32x32xf32>
      %c0_32 = arith.constant 0 : index
      %c0_33 = arith.constant 0 : index
      %44 = vector.load %arg5[%c0_32, %c0_33] : memref<1x32xf32, #tpu.memory_space<vmem>>, vector<1x32xf32>
      %45 = vector.broadcast %44 : vector<1x32xf32> to vector<32x32xf32>
      %46 = arith.addf %43, %45 : vector<32x32xf32>
      %47 = vector.shape_cast %46 : vector<32x32xf32> to vector<2x16x32xf32>
      %c0_34 = arith.constant 0 : index
      %c0_35 = arith.constant 0 : index
      %48 = vector.load %arg6[%c0_34, %c0_35] : memref<16x32xf32, #tpu.memory_space<vmem>>, vector<16x32xf32>
      %49 = vector.shape_cast %48 : vector<16x32xf32> to vector<1x16x32xf32>
      %50 = vector.broadcast %49 : vector<1x16x32xf32> to vector<2x16x32xf32>
      %51 = arith.addf %47, %50 : vector<2x16x32xf32>
      %c0_36 = arith.constant 0 : index
      %c0_37 = arith.constant 0 : index
      %c0_38 = arith.constant 0 : index
      %52 = vector.load %arg19[%c0_36, %c0_37, %c0_38] : memref<2x16x32xf32, #tpu.memory_space<vmem>>, vector<2x16x32xf32>
      tpu.vector_store %arg19[%c0_36, %c0_37, %c0_38], %51 {strides = array<i32>} : memref<2x16x32xf32, #tpu.memory_space<vmem>>, vector<2x16x32xf32>,
    } else {
    }
    %c0_i32_2 = arith.constant 0 : i32
    %5 = arith.cmpi eq, %arg2, %c0_i32_2 : i32
    %6 = arith.extui %5 : i1 to i32
    %c0_i32_3 = arith.constant 0 : i32
    %7 = arith.cmpi ne, %6, %c0_i32_3 : i32
    scf.if %7 {
      %c0_26 = arith.constant 0 : index
      %c0_27 = arith.constant 0 : index
      %c0_28 = arith.constant 0 : index
      %39 = vector.load %arg19[%c0_26, %c0_27, %c0_28] : memref<2x16x32xf32, #tpu.memory_space<vmem>>, vector<2x16x32xf32>
      %40 = vector.shape_cast %39 : vector<2x16x32xf32> to vector<32x32xf32>
      %c0_29 = arith.constant 0 : index
      %c0_30 = arith.constant 0 : index
      %c0_31 = arith.constant 0 : index
      %41 = vector.load %arg7[%c0_29, %c0_30, %c0_31] : memref<1x1x32xf32, #tpu.memory_space<vmem>>, vector<1x1x32xf32>
      %42 = vector.shape_cast %41 : vector<1x1x32xf32> to vector<1x32xf32>
      %c0_32 = arith.constant 0 : index
      %c0_33 = arith.constant 0 : index
      %c0_34 = arith.constant 0 : index
      %43 = vector.load %arg8[%c0_32, %c0_33, %c0_34] : memref<1x1x32xf32, #tpu.memory_space<vmem>>, vector<1x1x32xf32>
      %44 = vector.shape_cast %43 : vector<1x1x32xf32> to vector<1x32xf32>
      %cst_35 = arith.constant dense<0.000000e+00> : vector<32xf32>
      %45 = vector.multi_reduction <add>, %40, %cst_35 [1] : vector<32x32xf32> to vector<32xf32>
      %46 = vector.shape_cast %45 : vector<32xf32> to vector<32x1xf32>
      %cst_36 = arith.constant 3.200000e+01 : f32
      %47 = vector.broadcast %cst_36 : f32 to vector<32x1xf32>
      %48 = arith.divf %46, %47 : vector<32x1xf32>
      %49 = vector.broadcast %48 : vector<32x1xf32> to vector<32x32xf32>
      %50 = arith.subf %40, %49 : vector<32x32xf32>
      %51 = arith.mulf %50, %50 : vector<32x32xf32>
      %cst_37 = arith.constant dense<0.000000e+00> : vector<32xf32>
      %52 = vector.multi_reduction <add>, %51, %cst_37 [1] : vector<32x32xf32> to vector<32xf32>
      %53 = vector.shape_cast %52 : vector<32xf32> to vector<32x1xf32>
      %cst_38 = arith.constant 3.200000e+01 : f32
      %54 = vector.broadcast %cst_38 : f32 to vector<32x1xf32>
      %55 = arith.divf %53, %54 : vector<32x1xf32>
      %56 = vector.broadcast %48 : vector<32x1xf32> to vector<32x32xf32>
      %57 = arith.subf %40, %56 : vector<32x32xf32>
      %cst_39 = arith.constant 9.99999997E-7 : f32
      %58 = vector.broadcast %cst_39 : f32 to vector<32x1xf32>
      %59 = arith.addf %55, %58 : vector<32x1xf32>
      %60 = math.rsqrt %59 : vector<32x1xf32>
      %61 = vector.broadcast %60 : vector<32x1xf32> to vector<32x32xf32>
      %62 = arith.mulf %57, %61 : vector<32x32xf32>
      %63 = vector.broadcast %42 : vector<1x32xf32> to vector<32x32xf32>
      %64 = arith.mulf %62, %63 : vector<32x32xf32>
      %65 = vector.broadcast %44 : vector<1x32xf32> to vector<32x32xf32>
      %66 = arith.addf %64, %65 : vector<32x32xf32>
      %67 = arith.truncf %66 : vector<32x32xf32> to vector<32x32xbf16>
      %c0_40 = arith.constant 0 : index
      %c0_41 = arith.constant 0 : index
      %c0_42 = arith.constant 0 : index
      %68 = vector.load %arg9[%c0_40, %c0_41, %c0_42] : memref<1x32x1536xbf16, #tpu.memory_space<vmem>>, vector<1x32x1536xbf16>
      %69 = vector.shape_cast %68 : vector<1x32x1536xbf16> to vector<32x1536xbf16>
      %cst_43 = arith.constant dense<0.000000e+00> : vector<32x1536xf32>
      %70 = tpu.matmul %67, %69, %cst_43 {dimension_numbers = #tpu.dot_dimension_numbers<[1], [0], [0], [1], [0, 0, 1, 1], [], []>} : vector<32x32xbf16>, vector<32x1536xbf16>, vector<32x1536xf32> -> vector<32x1536xf32>
      %c0_44 = arith.constant 0 : index
      %c0_45 = arith.constant 0 : index
      %c0_46 = arith.constant 0 : index
      %71 = vector.load %arg10[%c0_44, %c0_45, %c0_46] : memref<1x1x1536xf32, #tpu.memory_space<vmem>>, vector<1x1x1536xf32>
      %72 = vector.shape_cast %71 : vector<1x1x1536xf32> to vector<1x1536xf32>
      %73 = vector.broadcast %72 : vector<1x1536xf32> to vector<32x1536xf32>
      %74 = arith.addf %70, %73 : vector<32x1536xf32>
      %75 = vector.extract_strided_slice %40 {offsets = [0, 0], sizes = [16, 32], strides = [1, 1]} : vector<32x32xf32> to vector<16x32xf32>
      %76 = vector.extract_strided_slice %74 {offsets = [0, 0], sizes = [16, 128], strides = [1, 1]} : vector<32x1536xf32> to vector<16x128xf32>
      %cst_47 = arith.constant 0.353553385 : f32
      %77 = vector.broadcast %cst_47 : f32 to vector<16x128xf32>
      %78 = arith.mulf %76, %77 : vector<16x128xf32>
      %79 = arith.truncf %78 : vector<16x128xf32> to vector<16x128xbf16>
      %80 = vector.extract_strided_slice %74 {offsets = [0, 512], sizes = [16, 128], strides = [1, 1]} : vector<32x1536xf32> to vector<16x128xf32>
      %81 = arith.truncf %80 : vector<16x128xf32> to vector<16x128xbf16>
      %82 = vector.extract_strided_slice %74 {offsets = [0, 1024], sizes = [16, 128], strides = [1, 1]} : vector<32x1536xf32> to vector<16x128xf32>
      %83 = arith.truncf %82 : vector<16x128xf32> to vector<16x128xbf16>
      %84 = tpu.transpose %81, [1, 0] : vector<16x128xbf16> -> vector<128x16xbf16>
      %cst_48 = arith.constant dense<0.000000e+00> : vector<16x16xf32>
      %85 = tpu.matmul %79, %84, %cst_48 {dimension_numbers = #tpu.dot_dimension_numbers<[1], [0], [0], [1], [0, 0, 1, 1], [], []>} : vector<16x128xbf16>, vector<128x16xbf16>, vector<16x16xf32> -> vector<16x16xf32>
      %cst_49 = arith.constant dense<0xFF800000> : vector<16xf32>
      %86 = vector.multi_reduction <maximumf>, %85, %cst_49 [1] : vector<16x16xf32> to vector<16xf32>
      %87 = vector.shape_cast %86 : vector<16xf32> to vector<16x1xf32>
      %88 = vector.broadcast %87 : vector<16x1xf32> to vector<16x16xf32>
      %89 = arith.subf %85, %88 : vector<16x16xf32>
      %90 = math.exp %89 : vector<16x16xf32>
      %cst_50 = arith.constant dense<0.000000e+00> : vector<16xf32>
      %91 = vector.multi_reduction <add>, %90, %cst_50 [1] : vector<16x16xf32> to vector<16xf32>
      %92 = vector.shape_cast %91 : vector<16xf32> to vector<16x1xf32>
      %93 = tpu.reciprocal %92 {approx = true} : vector<16x1xf32> -> vector<16x1xf32>
      %94 = vector.broadcast %93 : vector<16x1xf32> to vector<16x16xf32>
      %95 = arith.mulf %90, %94 : vector<16x16xf32>
      %96 = arith.truncf %95 : vector<16x16xf32> to vector<16x16xbf16>
      %cst_51 = arith.constant dense<0.000000e+00> : vector<16x128xf32>
      %97 = tpu.matmul %96, %83, %cst_51 {dimension_numbers = #tpu.dot_dimension_numbers<[1], [0], [0], [1], [0, 0, 1, 1], [], []>} : vector<16x16xbf16>, vector<16x128xbf16>, vector<16x128xf32> -> vector<16x128xf32>
      %98 = arith.truncf %97 : vector<16x128xf32> to vector<16x128xbf16>
      %c0_52 = arith.constant 0 : index
      %c0_53 = arith.constant 0 : index
      %c0_54 = arith.constant 0 : index
      %99 = vector.load %arg11[%c0_52, %c0_53, %c0_54] : memref<1x512x32xbf16, #tpu.memory_space<vmem>>, vector<1x128x32xbf16>
      %100 = vector.shape_cast %99 : vector<1x128x32xbf16> to vector<128x32xbf16>
      %cst_55 = arith.constant dense<0.000000e+00> : vector<16x32xf32>
      %101 = tpu.matmul %98, %100, %cst_55 {dimension_numbers = #tpu.dot_dimension_numbers<[1], [0], [0], [1], [0, 0, 1, 1], [], []>} : vector<16x128xbf16>, vector<128x32xbf16>, vector<16x32xf32> -> vector<16x32xf32>
      %102 = arith.addf %75, %101 : vector<16x32xf32>
      %103 = vector.extract_strided_slice %74 {offsets = [0, 128], sizes = [16, 128], strides = [1, 1]} : vector<32x1536xf32> to vector<16x128xf32>
      %cst_56 = arith.constant 0.353553385 : f32
      %104 = vector.broadcast %cst_56 : f32 to vector<16x128xf32>
      %105 = arith.mulf %103, %104 : vector<16x128xf32>
      %106 = arith.truncf %105 : vector<16x128xf32> to vector<16x128xbf16>
      %107 = vector.extract_strided_slice %74 {offsets = [0, 640], sizes = [16, 128], strides = [1, 1]} : vector<32x1536xf32> to vector<16x128xf32>
      %108 = arith.truncf %107 : vector<16x128xf32> to vector<16x128xbf16>
      %109 = vector.extract_strided_slice %74 {offsets = [0, 1152], sizes = [16, 128], strides = [1, 1]} : vector<32x1536xf32> to vector<16x128xf32>
      %110 = arith.truncf %109 : vector<16x128xf32> to vector<16x128xbf16>
      %111 = tpu.transpose %108, [1, 0] : vector<16x128xbf16> -> vector<128x16xbf16>
      %cst_57 = arith.constant dense<0.000000e+00> : vector<16x16xf32>
      %112 = tpu.matmul %106, %111, %cst_57 {dimension_numbers = #tpu.dot_dimension_numbers<[1], [0], [0], [1], [0, 0, 1, 1], [], []>} : vector<16x128xbf16>, vector<128x16xbf16>, vector<16x16xf32> -> vector<16x16xf32>
      %cst_58 = arith.constant dense<0xFF800000> : vector<16xf32>
      %113 = vector.multi_reduction <maximumf>, %112, %cst_58 [1] : vector<16x16xf32> to vector<16xf32>
      %114 = vector.shape_cast %113 : vector<16xf32> to vector<16x1xf32>
      %115 = vector.broadcast %114 : vector<16x1xf32> to vector<16x16xf32>
      %116 = arith.subf %112, %115 : vector<16x16xf32>
      %117 = math.exp %116 : vector<16x16xf32>
      %cst_59 = arith.constant dense<0.000000e+00> : vector<16xf32>
      %118 = vector.multi_reduction <add>, %117, %cst_59 [1] : vector<16x16xf32> to vector<16xf32>
      %119 = vector.shape_cast %118 : vector<16xf32> to vector<16x1xf32>
      %120 = tpu.reciprocal %119 {approx = true} : vector<16x1xf32> -> vector<16x1xf32>
      %121 = vector.broadcast %120 : vector<16x1xf32> to vector<16x16xf32>
      %122 = arith.mulf %117, %121 : vector<16x16xf32>
      %123 = arith.truncf %122 : vector<16x16xf32> to vector<16x16xbf16>
      %cst_60 = arith.constant dense<0.000000e+00> : vector<16x128xf32>
      %124 = tpu.matmul %123, %110, %cst_60 {dimension_numbers = #tpu.dot_dimension_numbers<[1], [0], [0], [1], [0, 0, 1, 1], [], []>} : vector<16x16xbf16>, vector<16x128xbf16>, vector<16x128xf32> -> vector<16x128xf32>
      %125 = arith.truncf %124 : vector<16x128xf32> to vector<16x128xbf16>
      %c0_61 = arith.constant 0 : index
      %c128 = arith.constant 128 : index
      %c0_62 = arith.constant 0 : index
      %126 = vector.load %arg11[%c0_61, %c128, %c0_62] : memref<1x512x32xbf16, #tpu.memory_space<vmem>>, vector<1x128x32xbf16>
      %127 = vector.shape_cast %126 : vector<1x128x32xbf16> to vector<128x32xbf16>
      %cst_63 = arith.constant dense<0.000000e+00> : vector<16x32xf32>
      %128 = tpu.matmul %125, %127, %cst_63 {dimension_numbers = #tpu.dot_dimension_numbers<[1], [0], [0], [1], [0, 0, 1, 1], [], []>} : vector<16x128xbf16>, vector<128x32xbf16>, vector<16x32xf32> -> vector<16x32xf32>
      %129 = arith.addf %102, %128 : vector<16x32xf32>
      %130 = vector.extract_strided_slice %74 {offsets = [0, 256], sizes = [16, 128], strides = [1, 1]} : vector<32x1536xf32> to vector<16x128xf32>
      %cst_64 = arith.constant 0.353553385 : f32
      %131 = vector.broadcast %cst_64 : f32 to vector<16x128xf32>
      %132 = arith.mulf %130, %131 : vector<16x128xf32>
      %133 = arith.truncf %132 : vector<16x128xf32> to vector<16x128xbf16>
      %134 = vector.extract_strided_slice %74 {offsets = [0, 768], sizes = [16, 128], strides = [1, 1]} : vector<32x1536xf32> to vector<16x128xf32>
      %135 = arith.truncf %134 : vector<16x128xf32> to vector<16x128xbf16>
      %136 = vector.extract_strided_slice %74 {offsets = [0, 1280], sizes = [16, 128], strides = [1, 1]} : vector<32x1536xf32> to vector<16x128xf32>
      %137 = arith.truncf %136 : vector<16x128xf32> to vector<16x128xbf16>
      %138 = tpu.transpose %135, [1, 0] : vector<16x128xbf16> -> vector<128x16xbf16>
      %cst_65 = arith.constant dense<0.000000e+00> : vector<16x16xf32>
      %139 = tpu.matmul %133, %138, %cst_65 {dimension_numbers = #tpu.dot_dimension_numbers<[1], [0], [0], [1], [0, 0, 1, 1], [], []>} : vector<16x128xbf16>, vector<128x16xbf16>, vector<16x16xf32> -> vector<16x16xf32>
      %cst_66 = arith.constant dense<0xFF800000> : vector<16xf32>
      %140 = vector.multi_reduction <maximumf>, %139, %cst_66 [1] : vector<16x16xf32> to vector<16xf32>
      %141 = vector.shape_cast %140 : vector<16xf32> to vector<16x1xf32>
      %142 = vector.broadcast %141 : vector<16x1xf32> to vector<16x16xf32>
      %143 = arith.subf %139, %142 : vector<16x16xf32>
      %144 = math.exp %143 : vector<16x16xf32>
      %cst_67 = arith.constant dense<0.000000e+00> : vector<16xf32>
      %145 = vector.multi_reduction <add>, %144, %cst_67 [1] : vector<16x16xf32> to vector<16xf32>
      %146 = vector.shape_cast %145 : vector<16xf32> to vector<16x1xf32>
      %147 = tpu.reciprocal %146 {approx = true} : vector<16x1xf32> -> vector<16x1xf32>
      %148 = vector.broadcast %147 : vector<16x1xf32> to vector<16x16xf32>
      %149 = arith.mulf %144, %148 : vector<16x16xf32>
      %150 = arith.truncf %149 : vector<16x16xf32> to vector<16x16xbf16>
      %cst_68 = arith.constant dense<0.000000e+00> : vector<16x128xf32>
      %151 = tpu.matmul %150, %137, %cst_68 {dimension_numbers = #tpu.dot_dimension_numbers<[1], [0], [0], [1], [0, 0, 1, 1], [], []>} : vector<16x16xbf16>, vector<16x128xbf16>, vector<16x128xf32> -> vector<16x128xf32>
      %152 = arith.truncf %151 : vector<16x128xf32> to vector<16x128xbf16>
      %c0_69 = arith.constant 0 : index
      %c256 = arith.constant 256 : index
      %c0_70 = arith.constant 0 : index
      %153 = vector.load %arg11[%c0_69, %c256, %c0_70] : memref<1x512x32xbf16, #tpu.memory_space<vmem>>, vector<1x128x32xbf16>
      %154 = vector.shape_cast %153 : vector<1x128x32xbf16> to vector<128x32xbf16>
      %cst_71 = arith.constant dense<0.000000e+00> : vector<16x32xf32>
      %155 = tpu.matmul %152, %154, %cst_71 {dimension_numbers = #tpu.dot_dimension_numbers<[1], [0], [0], [1], [0, 0, 1, 1], [], []>} : vector<16x128xbf16>, vector<128x32xbf16>, vector<16x32xf32> -> vector<16x32xf32>
      %156 = arith.addf %129, %155 : vector<16x32xf32>
      %157 = vector.extract_strided_slice %74 {offsets = [0, 384], sizes = [16, 128], strides = [1, 1]} : vector<32x1536xf32> to vector<16x128xf32>
      %cst_72 = arith.constant 0.353553385 : f32
      %158 = vector.broadcast %cst_72 : f32 to vector<16x128xf32>
      %159 = arith.mulf %157, %158 : vector<16x128xf32>
      %160 = arith.truncf %159 : vector<16x128xf32> to vector<16x128xbf16>
      %161 = vector.extract_strided_slice %74 {offsets = [0, 896], sizes = [16, 128], strides = [1, 1]} : vector<32x1536xf32> to vector<16x128xf32>
      %162 = arith.truncf %161 : vector<16x128xf32> to vector<16x128xbf16>
      %163 = vector.extract_strided_slice %74 {offsets = [0, 1408], sizes = [16, 128], strides = [1, 1]} : vector<32x1536xf32> to vector<16x128xf32>
      %164 = arith.truncf %163 : vector<16x128xf32> to vector<16x128xbf16>
      %165 = tpu.transpose %162, [1, 0] : vector<16x128xbf16> -> vector<128x16xbf16>
      %cst_73 = arith.constant dense<0.000000e+00> : vector<16x16xf32>
      %166 = tpu.matmul %160, %165, %cst_73 {dimension_numbers = #tpu.dot_dimension_numbers<[1], [0], [0], [1], [0, 0, 1, 1], [], []>} : vector<16x128xbf16>, vector<128x16xbf16>, vector<16x16xf32> -> vector<16x16xf32>
      %cst_74 = arith.constant dense<0xFF800000> : vector<16xf32>
      %167 = vector.multi_reduction <maximumf>, %166, %cst_74 [1] : vector<16x16xf32> to vector<16xf32>
      %168 = vector.shape_cast %167 : vector<16xf32> to vector<16x1xf32>
      %169 = vector.broadcast %168 : vector<16x1xf32> to vector<16x16xf32>
      %170 = arith.subf %166, %169 : vector<16x16xf32>
      %171 = math.exp %170 : vector<16x16xf32>
      %cst_75 = arith.constant dense<0.000000e+00> : vector<16xf32>
      %172 = vector.multi_reduction <add>, %171, %cst_75 [1] : vector<16x16xf32> to vector<16xf32>
      %173 = vector.shape_cast %172 : vector<16xf32> to vector<16x1xf32>
      %174 = tpu.reciprocal %173 {approx = true} : vector<16x1xf32> -> vector<16x1xf32>
      %175 = vector.broadcast %174 : vector<16x1xf32> to vector<16x16xf32>
      %176 = arith.mulf %171, %175 : vector<16x16xf32>
      %177 = arith.truncf %176 : vector<16x16xf32> to vector<16x16xbf16>
      %cst_76 = arith.constant dense<0.000000e+00> : vector<16x128xf32>
      %178 = tpu.matmul %177, %164, %cst_76 {dimension_numbers = #tpu.dot_dimension_numbers<[1], [0], [0], [1], [0, 0, 1, 1], [], []>} : vector<16x16xbf16>, vector<16x128xbf16>, vector<16x128xf32> -> vector<16x128xf32>
      %179 = arith.truncf %178 : vector<16x128xf32> to vector<16x128xbf16>
      %c0_77 = arith.constant 0 : index
      %c384 = arith.constant 384 : index
      %c0_78 = arith.constant 0 : index
      %180 = vector.load %arg11[%c0_77, %c384, %c0_78] : memref<1x512x32xbf16, #tpu.memory_space<vmem>>, vector<1x128x32xbf16>
      %181 = vector.shape_cast %180 : vector<1x128x32xbf16> to vector<128x32xbf16>
      %cst_79 = arith.constant dense<0.000000e+00> : vector<16x32xf32>
      %182 = tpu.matmul %179, %181, %cst_79 {dimension_numbers = #tpu.dot_dimension_numbers<[1], [0], [0], [1], [0, 0, 1, 1], [], []>} : vector<16x128xbf16>, vector<128x32xbf16>, vector<16x32xf32> -> vector<16x32xf32>
      %183 = arith.addf %156, %182 : vector<16x32xf32>
      %c0_80 = arith.constant 0 : index
      %c0_81 = arith.constant 0 : index
      %c0_82 = arith.constant 0 : index
      %184 = vector.load %arg12[%c0_80, %c0_81, %c0_82] : memref<1x1x32xf32, #tpu.memory_space<vmem>>, vector<1x1x32xf32>
      %185 = vector.shape_cast %184 : vector<1x1x32xf32> to vector<1x32xf32>
      %186 = vector.broadcast %185 : vector<1x32xf32> to vector<16x32xf32>
      %187 = arith.addf %183, %186 : vector<16x32xf32>
      %c0_83 = arith.constant 0 : index
      %c0_84 = arith.constant 0 : index
      %c0_85 = arith.constant 0 : index
      %188 = vector.load %arg13[%c0_83, %c0_84, %c0_85] : memref<1x1x32xf32, #tpu.memory_space<vmem>>, vector<1x1x32xf32>
      %189 = vector.shape_cast %188 : vector<1x1x32xf32> to vector<1x32xf32>
      %c0_86 = arith.constant 0 : index
      %c0_87 = arith.constant 0 : index
      %c0_88 = arith.constant 0 : index
      %190 = vector.load %arg14[%c0_86, %c0_87, %c0_88] : memref<1x1x32xf32, #tpu.memory_space<vmem>>, vector<1x1x32xf32>
      %191 = vector.shape_cast %190 : vector<1x1x32xf32> to vector<1x32xf32>
      %cst_89 = arith.constant dense<0.000000e+00> : vector<16xf32>
      %192 = vector.multi_reduction <add>, %187, %cst_89 [1] : vector<16x32xf32> to vector<16xf32>
      %193 = vector.shape_cast %192 : vector<16xf32> to vector<16x1xf32>
      %cst_90 = arith.constant 3.200000e+01 : f32
      %194 = vector.broadcast %cst_90 : f32 to vector<16x1xf32>
      %195 = arith.divf %193, %194 : vector<16x1xf32>
      %196 = vector.broadcast %195 : vector<16x1xf32> to vector<16x32xf32>
      %197 = arith.subf %187, %196 : vector<16x32xf32>
      %198 = arith.mulf %197, %197 : vector<16x32xf32>
      %cst_91 = arith.constant dense<0.000000e+00> : vector<16xf32>
      %199 = vector.multi_reduction <add>, %198, %cst_91 [1] : vector<16x32xf32> to vector<16xf32>
      %200 = vector.shape_cast %199 : vector<16xf32> to vector<16x1xf32>
      %cst_92 = arith.constant 3.200000e+01 : f32
      %201 = vector.broadcast %cst_92 : f32 to vector<16x1xf32>
      %202 = arith.divf %200, %201 : vector<16x1xf32>
      %203 = vector.broadcast %195 : vector<16x1xf32> to vector<16x32xf32>
      %204 = arith.subf %187, %203 : vector<16x32xf32>
      %cst_93 = arith.constant 9.99999997E-7 : f32
      %205 = vector.broadcast %cst_93 : f32 to vector<16x1xf32>
      %206 = arith.addf %202, %205 : vector<16x1xf32>
      %207 = math.rsqrt %206 : vector<16x1xf32>
      %208 = vector.broadcast %207 : vector<16x1xf32> to vector<16x32xf32>
      %209 = arith.mulf %204, %208 : vector<16x32xf32>
      %210 = vector.broadcast %189 : vector<1x32xf32> to vector<16x32xf32>
      %211 = arith.mulf %209, %210 : vector<16x32xf32>
      %212 = vector.broadcast %191 : vector<1x32xf32> to vector<16x32xf32>
      %213 = arith.addf %211, %212 : vector<16x32xf32>
      %214 = arith.truncf %213 : vector<16x32xf32> to vector<16x32xbf16>
      %c0_94 = arith.constant 0 : index
      %c0_95 = arith.constant 0 : index
      %c0_96 = arith.constant 0 : index
      %215 = vector.load %arg20[%c0_94, %c0_95, %c0_96] : memref<2x16x32xbf16, #tpu.memory_space<vmem>>, vector<1x16x32xbf16>
      %216 = vector.shape_cast %215 : vector<1x16x32xbf16> to vector<16x32xbf16>
      %217 = vector.shape_cast %214 : vector<16x32xbf16> to vector<1x16x32xbf16>
      tpu.vector_store %arg20[%c0_94, %c0_95, %c0_96], %217 {strides = array<i32>} : memref<2x16x32xbf16, #tpu.memory_space<vmem>>, vector<1x16x32xbf16>,
      %c0_97 = arith.constant 0 : index
      %c0_98 = arith.constant 0 : index
      %c0_99 = arith.constant 0 : index
      %218 = vector.load %arg18[%c0_97, %c0_98, %c0_99] : memref<1x1x32xf32, #tpu.memory_space<vmem>>, vector<1x1x32xf32>
      %219 = vector.shape_cast %218 : vector<1x1x32xf32> to vector<1x32xf32>
      %220 = vector.broadcast %219 : vector<1x32xf32> to vector<16x32xf32>
      %221 = arith.addf %187, %220 : vector<16x32xf32>
      %c0_100 = arith.constant 0 : index
      %c0_101 = arith.constant 0 : index
      %c0_102 = arith.constant 0 : index
      %222 = vector.load %arg19[%c0_100, %c0_101, %c0_102] : memref<2x16x32xf32, #tpu.memory_space<vmem>>, vector<1x16x32xf32>
      %223 = vector.shape_cast %222 : vector<1x16x32xf32> to vector<16x32xf32>
      %224 = vector.shape_cast %221 : vector<16x32xf32> to vector<1x16x32xf32>
      tpu.vector_store %arg19[%c0_100, %c0_101, %c0_102], %224 {strides = array<i32>} : memref<2x16x32xf32, #tpu.memory_space<vmem>>, vector<1x16x32xf32>,
      %225 = vector.extract_strided_slice %40 {offsets = [16, 0], sizes = [16, 32], strides = [1, 1]} : vector<32x32xf32> to vector<16x32xf32>
      %226 = vector.extract_strided_slice %74 {offsets = [16, 0], sizes = [16, 128], strides = [1, 1]} : vector<32x1536xf32> to vector<16x128xf32>
      %cst_103 = arith.constant 0.353553385 : f32
      %227 = vector.broadcast %cst_103 : f32 to vector<16x128xf32>
      %228 = arith.mulf %226, %227 : vector<16x128xf32>
      %229 = arith.truncf %228 : vector<16x128xf32> to vector<16x128xbf16>
      %230 = vector.extract_strided_slice %74 {offsets = [16, 512], sizes = [16, 128], strides = [1, 1]} : vector<32x1536xf32> to vector<16x128xf32>
      %231 = arith.truncf %230 : vector<16x128xf32> to vector<16x128xbf16>
      %232 = vector.extract_strided_slice %74 {offsets = [16, 1024], sizes = [16, 128], strides = [1, 1]} : vector<32x1536xf32> to vector<16x128xf32>
      %233 = arith.truncf %232 : vector<16x128xf32> to vector<16x128xbf16>
      %234 = tpu.transpose %231, [1, 0] : vector<16x128xbf16> -> vector<128x16xbf16>
      %cst_104 = arith.constant dense<0.000000e+00> : vector<16x16xf32>
      %235 = tpu.matmul %229, %234, %cst_104 {dimension_numbers = #tpu.dot_dimension_numbers<[1], [0], [0], [1], [0, 0, 1, 1], [], []>} : vector<16x128xbf16>, vector<128x16xbf16>, vector<16x16xf32> -> vector<16x16xf32>
      %cst_105 = arith.constant dense<0xFF800000> : vector<16xf32>
      %236 = vector.multi_reduction <maximumf>, %235, %cst_105 [1] : vector<16x16xf32> to vector<16xf32>
      %237 = vector.shape_cast %236 : vector<16xf32> to vector<16x1xf32>
      %238 = vector.broadcast %237 : vector<16x1xf32> to vector<16x16xf32>
      %239 = arith.subf %235, %238 : vector<16x16xf32>
      %240 = math.exp %239 : vector<16x16xf32>
      %cst_106 = arith.constant dense<0.000000e+00> : vector<16xf32>
      %241 = vector.multi_reduction <add>, %240, %cst_106 [1] : vector<16x16xf32> to vector<16xf32>
      %242 = vector.shape_cast %241 : vector<16xf32> to vector<16x1xf32>
      %243 = tpu.reciprocal %242 {approx = true} : vector<16x1xf32> -> vector<16x1xf32>
      %244 = vector.broadcast %243 : vector<16x1xf32> to vector<16x16xf32>
      %245 = arith.mulf %240, %244 : vector<16x16xf32>
      %246 = arith.truncf %245 : vector<16x16xf32> to vector<16x16xbf16>
      %cst_107 = arith.constant dense<0.000000e+00> : vector<16x128xf32>
      %247 = tpu.matmul %246, %233, %cst_107 {dimension_numbers = #tpu.dot_dimension_numbers<[1], [0], [0], [1], [0, 0, 1, 1], [], []>} : vector<16x16xbf16>, vector<16x128xbf16>, vector<16x128xf32> -> vector<16x128xf32>
      %248 = arith.truncf %247 : vector<16x128xf32> to vector<16x128xbf16>
      %c0_108 = arith.constant 0 : index
      %c0_109 = arith.constant 0 : index
      %c0_110 = arith.constant 0 : index
      %249 = vector.load %arg11[%c0_108, %c0_109, %c0_110] : memref<1x512x32xbf16, #tpu.memory_space<vmem>>, vector<1x128x32xbf16>
      %250 = vector.shape_cast %249 : vector<1x128x32xbf16> to vector<128x32xbf16>
      %cst_111 = arith.constant dense<0.000000e+00> : vector<16x32xf32>
      %251 = tpu.matmul %248, %250, %cst_111 {dimension_numbers = #tpu.dot_dimension_numbers<[1], [0], [0], [1], [0, 0, 1, 1], [], []>} : vector<16x128xbf16>, vector<128x32xbf16>, vector<16x32xf32> -> vector<16x32xf32>
      %252 = arith.addf %225, %251 : vector<16x32xf32>
      %253 = vector.extract_strided_slice %74 {offsets = [16, 128], sizes = [16, 128], strides = [1, 1]} : vector<32x1536xf32> to vector<16x128xf32>
      %cst_112 = arith.constant 0.353553385 : f32
      %254 = vector.broadcast %cst_112 : f32 to vector<16x128xf32>
      %255 = arith.mulf %253, %254 : vector<16x128xf32>
      %256 = arith.truncf %255 : vector<16x128xf32> to vector<16x128xbf16>
      %257 = vector.extract_strided_slice %74 {offsets = [16, 640], sizes = [16, 128], strides = [1, 1]} : vector<32x1536xf32> to vector<16x128xf32>
      %258 = arith.truncf %257 : vector<16x128xf32> to vector<16x128xbf16>
      %259 = vector.extract_strided_slice %74 {offsets = [16, 1152], sizes = [16, 128], strides = [1, 1]} : vector<32x1536xf32> to vector<16x128xf32>
      %260 = arith.truncf %259 : vector<16x128xf32> to vector<16x128xbf16>
      %261 = tpu.transpose %258, [1, 0] : vector<16x128xbf16> -> vector<128x16xbf16>
      %cst_113 = arith.constant dense<0.000000e+00> : vector<16x16xf32>
      %262 = tpu.matmul %256, %261, %cst_113 {dimension_numbers = #tpu.dot_dimension_numbers<[1], [0], [0], [1], [0, 0, 1, 1], [], []>} : vector<16x128xbf16>, vector<128x16xbf16>, vector<16x16xf32> -> vector<16x16xf32>
      %cst_114 = arith.constant dense<0xFF800000> : vector<16xf32>
      %263 = vector.multi_reduction <maximumf>, %262, %cst_114 [1] : vector<16x16xf32> to vector<16xf32>
      %264 = vector.shape_cast %263 : vector<16xf32> to vector<16x1xf32>
      %265 = vector.broadcast %264 : vector<16x1xf32> to vector<16x16xf32>
      %266 = arith.subf %262, %265 : vector<16x16xf32>
      %267 = math.exp %266 : vector<16x16xf32>
      %cst_115 = arith.constant dense<0.000000e+00> : vector<16xf32>
      %268 = vector.multi_reduction <add>, %267, %cst_115 [1] : vector<16x16xf32> to vector<16xf32>
      %269 = vector.shape_cast %268 : vector<16xf32> to vector<16x1xf32>
      %270 = tpu.reciprocal %269 {approx = true} : vector<16x1xf32> -> vector<16x1xf32>
      %271 = vector.broadcast %270 : vector<16x1xf32> to vector<16x16xf32>
      %272 = arith.mulf %267, %271 : vector<16x16xf32>
      %273 = arith.truncf %272 : vector<16x16xf32> to vector<16x16xbf16>
      %cst_116 = arith.constant dense<0.000000e+00> : vector<16x128xf32>
      %274 = tpu.matmul %273, %260, %cst_116 {dimension_numbers = #tpu.dot_dimension_numbers<[1], [0], [0], [1], [0, 0, 1, 1], [], []>} : vector<16x16xbf16>, vector<16x128xbf16>, vector<16x128xf32> -> vector<16x128xf32>
      %275 = arith.truncf %274 : vector<16x128xf32> to vector<16x128xbf16>
      %c0_117 = arith.constant 0 : index
      %c128_118 = arith.constant 128 : index
      %c0_119 = arith.constant 0 : index
      %276 = vector.load %arg11[%c0_117, %c128_118, %c0_119] : memref<1x512x32xbf16, #tpu.memory_space<vmem>>, vector<1x128x32xbf16>
      %277 = vector.shape_cast %276 : vector<1x128x32xbf16> to vector<128x32xbf16>
      %cst_120 = arith.constant dense<0.000000e+00> : vector<16x32xf32>
      %278 = tpu.matmul %275, %277, %cst_120 {dimension_numbers = #tpu.dot_dimension_numbers<[1], [0], [0], [1], [0, 0, 1, 1], [], []>} : vector<16x128xbf16>, vector<128x32xbf16>, vector<16x32xf32> -> vector<16x32xf32>
      %279 = arith.addf %252, %278 : vector<16x32xf32>
      %280 = vector.extract_strided_slice %74 {offsets = [16, 256], sizes = [16, 128], strides = [1, 1]} : vector<32x1536xf32> to vector<16x128xf32>
      %cst_121 = arith.constant 0.353553385 : f32
      %281 = vector.broadcast %cst_121 : f32 to vector<16x128xf32>
      %282 = arith.mulf %280, %281 : vector<16x128xf32>
      %283 = arith.truncf %282 : vector<16x128xf32> to vector<16x128xbf16>
      %284 = vector.extract_strided_slice %74 {offsets = [16, 768], sizes = [16, 128], strides = [1, 1]} : vector<32x1536xf32> to vector<16x128xf32>
      %285 = arith.truncf %284 : vector<16x128xf32> to vector<16x128xbf16>
      %286 = vector.extract_strided_slice %74 {offsets = [16, 1280], sizes = [16, 128], strides = [1, 1]} : vector<32x1536xf32> to vector<16x128xf32>
      %287 = arith.truncf %286 : vector<16x128xf32> to vector<16x128xbf16>
      %288 = tpu.transpose %285, [1, 0] : vector<16x128xbf16> -> vector<128x16xbf16>
      %cst_122 = arith.constant dense<0.000000e+00> : vector<16x16xf32>
      %289 = tpu.matmul %283, %288, %cst_122 {dimension_numbers = #tpu.dot_dimension_numbers<[1], [0], [0], [1], [0, 0, 1, 1], [], []>} : vector<16x128xbf16>, vector<128x16xbf16>, vector<16x16xf32> -> vector<16x16xf32>
      %cst_123 = arith.constant dense<0xFF800000> : vector<16xf32>
      %290 = vector.multi_reduction <maximumf>, %289, %cst_123 [1] : vector<16x16xf32> to vector<16xf32>
      %291 = vector.shape_cast %290 : vector<16xf32> to vector<16x1xf32>
      %292 = vector.broadcast %291 : vector<16x1xf32> to vector<16x16xf32>
      %293 = arith.subf %289, %292 : vector<16x16xf32>
      %294 = math.exp %293 : vector<16x16xf32>
      %cst_124 = arith.constant dense<0.000000e+00> : vector<16xf32>
      %295 = vector.multi_reduction <add>, %294, %cst_124 [1] : vector<16x16xf32> to vector<16xf32>
      %296 = vector.shape_cast %295 : vector<16xf32> to vector<16x1xf32>
      %297 = tpu.reciprocal %296 {approx = true} : vector<16x1xf32> -> vector<16x1xf32>
      %298 = vector.broadcast %297 : vector<16x1xf32> to vector<16x16xf32>
      %299 = arith.mulf %294, %298 : vector<16x16xf32>
      %300 = arith.truncf %299 : vector<16x16xf32> to vector<16x16xbf16>
      %cst_125 = arith.constant dense<0.000000e+00> : vector<16x128xf32>
      %301 = tpu.matmul %300, %287, %cst_125 {dimension_numbers = #tpu.dot_dimension_numbers<[1], [0], [0], [1], [0, 0, 1, 1], [], []>} : vector<16x16xbf16>, vector<16x128xbf16>, vector<16x128xf32> -> vector<16x128xf32>
      %302 = arith.truncf %301 : vector<16x128xf32> to vector<16x128xbf16>
      %c0_126 = arith.constant 0 : index
      %c256_127 = arith.constant 256 : index
      %c0_128 = arith.constant 0 : index
      %303 = vector.load %arg11[%c0_126, %c256_127, %c0_128] : memref<1x512x32xbf16, #tpu.memory_space<vmem>>, vector<1x128x32xbf16>
      %304 = vector.shape_cast %303 : vector<1x128x32xbf16> to vector<128x32xbf16>
      %cst_129 = arith.constant dense<0.000000e+00> : vector<16x32xf32>
      %305 = tpu.matmul %302, %304, %cst_129 {dimension_numbers = #tpu.dot_dimension_numbers<[1], [0], [0], [1], [0, 0, 1, 1], [], []>} : vector<16x128xbf16>, vector<128x32xbf16>, vector<16x32xf32> -> vector<16x32xf32>
      %306 = arith.addf %279, %305 : vector<16x32xf32>
      %307 = vector.extract_strided_slice %74 {offsets = [16, 384], sizes = [16, 128], strides = [1, 1]} : vector<32x1536xf32> to vector<16x128xf32>
      %cst_130 = arith.constant 0.353553385 : f32
      %308 = vector.broadcast %cst_130 : f32 to vector<16x128xf32>
      %309 = arith.mulf %307, %308 : vector<16x128xf32>
      %310 = arith.truncf %309 : vector<16x128xf32> to vector<16x128xbf16>
      %311 = vector.extract_strided_slice %74 {offsets = [16, 896], sizes = [16, 128], strides = [1, 1]} : vector<32x1536xf32> to vector<16x128xf32>
      %312 = arith.truncf %311 : vector<16x128xf32> to vector<16x128xbf16>
      %313 = vector.extract_strided_slice %74 {offsets = [16, 1408], sizes = [16, 128], strides = [1, 1]} : vector<32x1536xf32> to vector<16x128xf32>
      %314 = arith.truncf %313 : vector<16x128xf32> to vector<16x128xbf16>
      %315 = tpu.transpose %312, [1, 0] : vector<16x128xbf16> -> vector<128x16xbf16>
      %cst_131 = arith.constant dense<0.000000e+00> : vector<16x16xf32>
      %316 = tpu.matmul %310, %315, %cst_131 {dimension_numbers = #tpu.dot_dimension_numbers<[1], [0], [0], [1], [0, 0, 1, 1], [], []>} : vector<16x128xbf16>, vector<128x16xbf16>, vector<16x16xf32> -> vector<16x16xf32>
      %cst_132 = arith.constant dense<0xFF800000> : vector<16xf32>
      %317 = vector.multi_reduction <maximumf>, %316, %cst_132 [1] : vector<16x16xf32> to vector<16xf32>
      %318 = vector.shape_cast %317 : vector<16xf32> to vector<16x1xf32>
      %319 = vector.broadcast %318 : vector<16x1xf32> to vector<16x16xf32>
      %320 = arith.subf %316, %319 : vector<16x16xf32>
      %321 = math.exp %320 : vector<16x16xf32>
      %cst_133 = arith.constant dense<0.000000e+00> : vector<16xf32>
      %322 = vector.multi_reduction <add>, %321, %cst_133 [1] : vector<16x16xf32> to vector<16xf32>
      %323 = vector.shape_cast %322 : vector<16xf32> to vector<16x1xf32>
      %324 = tpu.reciprocal %323 {approx = true} : vector<16x1xf32> -> vector<16x1xf32>
      %325 = vector.broadcast %324 : vector<16x1xf32> to vector<16x16xf32>
      %326 = arith.mulf %321, %325 : vector<16x16xf32>
      %327 = arith.truncf %326 : vector<16x16xf32> to vector<16x16xbf16>
      %cst_134 = arith.constant dense<0.000000e+00> : vector<16x128xf32>
      %328 = tpu.matmul %327, %314, %cst_134 {dimension_numbers = #tpu.dot_dimension_numbers<[1], [0], [0], [1], [0, 0, 1, 1], [], []>} : vector<16x16xbf16>, vector<16x128xbf16>, vector<16x128xf32> -> vector<16x128xf32>
      %329 = arith.truncf %328 : vector<16x128xf32> to vector<16x128xbf16>
      %c0_135 = arith.constant 0 : index
      %c384_136 = arith.constant 384 : index
      %c0_137 = arith.constant 0 : index
      %330 = vector.load %arg11[%c0_135, %c384_136, %c0_137] : memref<1x512x32xbf16, #tpu.memory_space<vmem>>, vector<1x128x32xbf16>
      %331 = vector.shape_cast %330 : vector<1x128x32xbf16> to vector<128x32xbf16>
      %cst_138 = arith.constant dense<0.000000e+00> : vector<16x32xf32>
      %332 = tpu.matmul %329, %331, %cst_138 {dimension_numbers = #tpu.dot_dimension_numbers<[1], [0], [0], [1], [0, 0, 1, 1], [], []>} : vector<16x128xbf16>, vector<128x32xbf16>, vector<16x32xf32> -> vector<16x32xf32>
      %333 = arith.addf %306, %332 : vector<16x32xf32>
      %c0_139 = arith.constant 0 : index
      %c0_140 = arith.constant 0 : index
      %c0_141 = arith.constant 0 : index
      %334 = vector.load %arg12[%c0_139, %c0_140, %c0_141] : memref<1x1x32xf32, #tpu.memory_space<vmem>>, vector<1x1x32xf32>
      %335 = vector.shape_cast %334 : vector<1x1x32xf32> to vector<1x32xf32>
      %336 = vector.broadcast %335 : vector<1x32xf32> to vector<16x32xf32>
      %337 = arith.addf %333, %336 : vector<16x32xf32>
      %c0_142 = arith.constant 0 : index
      %c0_143 = arith.constant 0 : index
      %c0_144 = arith.constant 0 : index
      %338 = vector.load %arg13[%c0_142, %c0_143, %c0_144] : memref<1x1x32xf32, #tpu.memory_space<vmem>>, vector<1x1x32xf32>
      %339 = vector.shape_cast %338 : vector<1x1x32xf32> to vector<1x32xf32>
      %c0_145 = arith.constant 0 : index
      %c0_146 = arith.constant 0 : index
      %c0_147 = arith.constant 0 : index
      %340 = vector.load %arg14[%c0_145, %c0_146, %c0_147] : memref<1x1x32xf32, #tpu.memory_space<vmem>>, vector<1x1x32xf32>
      %341 = vector.shape_cast %340 : vector<1x1x32xf32> to vector<1x32xf32>
      %cst_148 = arith.constant dense<0.000000e+00> : vector<16xf32>
      %342 = vector.multi_reduction <add>, %337, %cst_148 [1] : vector<16x32xf32> to vector<16xf32>
      %343 = vector.shape_cast %342 : vector<16xf32> to vector<16x1xf32>
      %cst_149 = arith.constant 3.200000e+01 : f32
      %344 = vector.broadcast %cst_149 : f32 to vector<16x1xf32>
      %345 = arith.divf %343, %344 : vector<16x1xf32>
      %346 = vector.broadcast %345 : vector<16x1xf32> to vector<16x32xf32>
      %347 = arith.subf %337, %346 : vector<16x32xf32>
      %348 = arith.mulf %347, %347 : vector<16x32xf32>
      %cst_150 = arith.constant dense<0.000000e+00> : vector<16xf32>
      %349 = vector.multi_reduction <add>, %348, %cst_150 [1] : vector<16x32xf32> to vector<16xf32>
      %350 = vector.shape_cast %349 : vector<16xf32> to vector<16x1xf32>
      %cst_151 = arith.constant 3.200000e+01 : f32
      %351 = vector.broadcast %cst_151 : f32 to vector<16x1xf32>
      %352 = arith.divf %350, %351 : vector<16x1xf32>
      %353 = vector.broadcast %345 : vector<16x1xf32> to vector<16x32xf32>
      %354 = arith.subf %337, %353 : vector<16x32xf32>
      %cst_152 = arith.constant 9.99999997E-7 : f32
      %355 = vector.broadcast %cst_152 : f32 to vector<16x1xf32>
      %356 = arith.addf %352, %355 : vector<16x1xf32>
      %357 = math.rsqrt %356 : vector<16x1xf32>
      %358 = vector.broadcast %357 : vector<16x1xf32> to vector<16x32xf32>
      %359 = arith.mulf %354, %358 : vector<16x32xf32>
      %360 = vector.broadcast %339 : vector<1x32xf32> to vector<16x32xf32>
      %361 = arith.mulf %359, %360 : vector<16x32xf32>
      %362 = vector.broadcast %341 : vector<1x32xf32> to vector<16x32xf32>
      %363 = arith.addf %361, %362 : vector<16x32xf32>
      %364 = arith.truncf %363 : vector<16x32xf32> to vector<16x32xbf16>
      %c1 = arith.constant 1 : index
      %c0_153 = arith.constant 0 : index
      %c0_154 = arith.constant 0 : index
      %365 = vector.load %arg20[%c1, %c0_153, %c0_154] : memref<2x16x32xbf16, #tpu.memory_space<vmem>>, vector<1x16x32xbf16>
      %366 = vector.shape_cast %365 : vector<1x16x32xbf16> to vector<16x32xbf16>
      %367 = vector.shape_cast %364 : vector<16x32xbf16> to vector<1x16x32xbf16>
      tpu.vector_store %arg20[%c1, %c0_153, %c0_154], %367 {strides = array<i32>} : memref<2x16x32xbf16, #tpu.memory_space<vmem>>, vector<1x16x32xbf16>,
      %c0_155 = arith.constant 0 : index
      %c0_156 = arith.constant 0 : index
      %c0_157 = arith.constant 0 : index
      %368 = vector.load %arg18[%c0_155, %c0_156, %c0_157] : memref<1x1x32xf32, #tpu.memory_space<vmem>>, vector<1x1x32xf32>
      %369 = vector.shape_cast %368 : vector<1x1x32xf32> to vector<1x32xf32>
      %370 = vector.broadcast %369 : vector<1x32xf32> to vector<16x32xf32>
      %371 = arith.addf %337, %370 : vector<16x32xf32>
      %c1_158 = arith.constant 1 : index
      %c0_159 = arith.constant 0 : index
      %c0_160 = arith.constant 0 : index
      %372 = vector.load %arg19[%c1_158, %c0_159, %c0_160] : memref<2x16x32xf32, #tpu.memory_space<vmem>>, vector<1x16x32xf32>
      %373 = vector.shape_cast %372 : vector<1x16x32xf32> to vector<16x32xf32>
      %374 = vector.shape_cast %371 : vector<16x32xf32> to vector<1x16x32xf32>
      tpu.vector_store %arg19[%c1_158, %c0_159, %c0_160], %374 {strides = array<i32>} : memref<2x16x32xf32, #tpu.memory_space<vmem>>, vector<1x16x32xf32>,
    } else {
    }
    %c0 = arith.constant 0 : index
    %c0_4 = arith.constant 0 : index
    %c0_5 = arith.constant 0 : index
    %8 = vector.load %arg20[%c0, %c0_4, %c0_5] : memref<2x16x32xbf16, #tpu.memory_space<vmem>>, vector<2x16x32xbf16>
    %9 = vector.shape_cast %8 : vector<2x16x32xbf16> to vector<32x32xbf16>
    %c0_6 = arith.constant 0 : index
    %c0_7 = arith.constant 0 : index
    %c0_8 = arith.constant 0 : index
    %10 = vector.load %arg15[%c0_6, %c0_7, %c0_8] : memref<1x32x512xbf16, #tpu.memory_space<vmem>>, vector<1x32x512xbf16>
    %11 = vector.shape_cast %10 : vector<1x32x512xbf16> to vector<32x512xbf16>
    %cst = arith.constant dense<0.000000e+00> : vector<32x512xf32>
    %12 = tpu.matmul %9, %11, %cst {dimension_numbers = #tpu.dot_dimension_numbers<[1], [0], [0], [1], [0, 0, 1, 1], [], []>} : vector<32x32xbf16>, vector<32x512xbf16>, vector<32x512xf32> -> vector<32x512xf32>
    %c0_9 = arith.constant 0 : index
    %c0_10 = arith.constant 0 : index
    %c0_11 = arith.constant 0 : index
    %13 = vector.load %arg16[%c0_9, %c0_10, %c0_11] : memref<1x1x512xf32, #tpu.memory_space<vmem>>, vector<1x1x512xf32>
    %14 = vector.shape_cast %13 : vector<1x1x512xf32> to vector<1x512xf32>
    %15 = vector.broadcast %14 : vector<1x512xf32> to vector<32x512xf32>
    %16 = arith.addf %12, %15 : vector<32x512xf32>
    %cst_12 = arith.constant 0.636619746 : f32
    %17 = math.sqrt %cst_12 : f32
    %cst_13 = arith.constant 5.000000e-01 : f32
    %18 = vector.broadcast %cst_13 : f32 to vector<32x512xf32>
    %19 = arith.mulf %18, %16 : vector<32x512xf32>
    %cst_14 = arith.constant 4.471500e-02 : f32
    %20 = vector.broadcast %cst_14 : f32 to vector<32x512xf32>
    %21 = arith.mulf %20, %16 : vector<32x512xf32>
    %22 = arith.mulf %21, %16 : vector<32x512xf32>
    %23 = arith.mulf %22, %16 : vector<32x512xf32>
    %24 = arith.addf %16, %23 : vector<32x512xf32>
    %25 = vector.broadcast %17 : f32 to vector<32x512xf32>
    %26 = arith.mulf %25, %24 : vector<32x512xf32>
    %27 = math.tanh %26 : vector<32x512xf32>
    %cst_15 = arith.constant 1.000000e+00 : f32
    %28 = vector.broadcast %cst_15 : f32 to vector<32x512xf32>
    %29 = arith.addf %28, %27 : vector<32x512xf32>
    %30 = arith.mulf %19, %29 : vector<32x512xf32>
    %31 = arith.truncf %30 : vector<32x512xf32> to vector<32x512xbf16>
    %c0_16 = arith.constant 0 : index
    %c0_17 = arith.constant 0 : index
    %c0_18 = arith.constant 0 : index
    %32 = vector.load %arg17[%c0_16, %c0_17, %c0_18] : memref<1x512x32xbf16, #tpu.memory_space<vmem>>, vector<1x512x32xbf16>
    %33 = vector.shape_cast %32 : vector<1x512x32xbf16> to vector<512x32xbf16>
    %cst_19 = arith.constant dense<0.000000e+00> : vector<32x32xf32>
    %34 = tpu.matmul %31, %33, %cst_19 {dimension_numbers = #tpu.dot_dimension_numbers<[1], [0], [0], [1], [0, 0, 1, 1], [], []>} : vector<32x512xbf16>, vector<512x32xbf16>, vector<32x32xf32> -> vector<32x32xf32>
    %c0_20 = arith.constant 0 : index
    %c0_21 = arith.constant 0 : index
    %c0_22 = arith.constant 0 : index
    %35 = vector.load %arg19[%c0_20, %c0_21, %c0_22] : memref<2x16x32xf32, #tpu.memory_space<vmem>>, vector<2x16x32xf32>
    %36 = vector.shape_cast %34 : vector<32x32xf32> to vector<2x16x32xf32>
    %37 = arith.addf %35, %36 : vector<2x16x32xf32>
    %c0_23 = arith.constant 0 : index
    %c0_24 = arith.constant 0 : index
    %c0_25 = arith.constant 0 : index
    %38 = vector.load %arg19[%c0_23, %c0_24, %c0_25] : memref<2x16x32xf32, #tpu.memory_space<vmem>>, vector<2x16x32xf32>
    tpu.vector_store %arg19[%c0_23, %c0_24, %c0_25], %37 {strides = array<i32>} : memref<2x16x32xf32, #tpu.memory_space<vmem>>, vector<2x16x32xf32>,
    return
  }
  func.func @transform_0(%arg0: i32, %arg1: i32, %arg2: i32) -> (i32, i32, i32) {
    %c0_i32 = arith.constant 0 : i32
    %c0_i32_0 = arith.constant 0 : i32
    %c0_i32_1 = arith.constant 0 : i32
    return %arg0, %c0_i32, %c0_i32_0 : i32, i32, i32
  }
  func.func @transform_1(%arg0: i32, %arg1: i32, %arg2: i32) -> (i32, i32) {
    %c0_i32 = arith.constant 0 : i32
    %c0_i32_0 = arith.constant 0 : i32
    %c0_i32_1 = arith.constant 0 : i32
    return %c0_i32, %c0_i32_0 : i32, i32
  }
  func.func @transform_2(%arg0: i32, %arg1: i32, %arg2: i32) -> (i32, i32) {
    %c0_i32 = arith.constant 0 : i32
    %c0_i32_0 = arith.constant 0 : i32
    %c0_i32_1 = arith.constant 0 : i32
    return %c0_i32, %c0_i32_0 : i32, i32
  }
  func.func @transform_3(%arg0: i32, %arg1: i32, %arg2: i32) -> (i32, i32) {
    %c0_i32 = arith.constant 0 : i32
    %c0_i32_0 = arith.constant 0 : i32
    %c0_i32_1 = arith.constant 0 : i32
    return %c0_i32, %c0_i32_0 : i32, i32
  }
  func.func @transform_4(%arg0: i32, %arg1: i32, %arg2: i32) -> (i32, i32, i32) {
    %c0_i32 = arith.constant 0 : i32
    %c0_i32_0 = arith.constant 0 : i32
    %c0_i32_1 = arith.constant 0 : i32
    return %arg1, %c0_i32, %c0_i32_0 : i32, i32, i32
  }
  func.func @transform_5(%arg0: i32, %arg1: i32, %arg2: i32) -> (i32, i32, i32) {
    %c0_i32 = arith.constant 0 : i32
    %c0_i32_0 = arith.constant 0 : i32
    %c0_i32_1 = arith.constant 0 : i32
    return %arg1, %c0_i32, %c0_i32_0 : i32, i32, i32
  }
  func.func @transform_6(%arg0: i32, %arg1: i32, %arg2: i32) -> (i32, i32, i32) {
    %c0_i32 = arith.constant 0 : i32
    %c0_i32_0 = arith.constant 0 : i32
    %c0_i32_1 = arith.constant 0 : i32
    return %arg1, %c0_i32, %c0_i32_0 : i32, i32, i32
  }
  func.func @transform_7(%arg0: i32, %arg1: i32, %arg2: i32) -> (i32, i32, i32) {
    %c0_i32 = arith.constant 0 : i32
    %c0_i32_0 = arith.constant 0 : i32
    %c0_i32_1 = arith.constant 0 : i32
    return %arg1, %c0_i32, %c0_i32_0 : i32, i32, i32
  }
  func.func @transform_8(%arg0: i32, %arg1: i32, %arg2: i32) -> (i32, i32, i32) {
    %c0_i32 = arith.constant 0 : i32
    %c0_i32_0 = arith.constant 0 : i32
    %c0_i32_1 = arith.constant 0 : i32
    return %arg1, %c0_i32, %c0_i32_0 : i32, i32, i32
  }
  func.func @transform_9(%arg0: i32, %arg1: i32, %arg2: i32) -> (i32, i32, i32) {
    %c0_i32 = arith.constant 0 : i32
    %c0_i32_0 = arith.constant 0 : i32
    %c0_i32_1 = arith.constant 0 : i32
    return %arg1, %c0_i32, %c0_i32_0 : i32, i32, i32
  }
  func.func @transform_10(%arg0: i32, %arg1: i32, %arg2: i32) -> (i32, i32, i32) {
    %c0_i32 = arith.constant 0 : i32
    %c0_i32_0 = arith.constant 0 : i32
    %c0_i32_1 = arith.constant 0 : i32
    return %arg1, %c0_i32, %c0_i32_0 : i32, i32, i32
  }
  func.func @transform_11(%arg0: i32, %arg1: i32, %arg2: i32) -> (i32, i32, i32) {
    %c0_i32 = arith.constant 0 : i32
    %c0_i32_0 = arith.constant 0 : i32
    %c0_i32_1 = arith.constant 0 : i32
    return %arg1, %c0_i32, %c0_i32_0 : i32, i32, i32
  }
  func.func @transform_12(%arg0: i32, %arg1: i32, %arg2: i32) -> (i32, i32, i32) {
    %c0_i32 = arith.constant 0 : i32
    %c0_i32_0 = arith.constant 0 : i32
    return %arg1, %c0_i32, %arg2 : i32, i32, i32
  }
  func.func @transform_13(%arg0: i32, %arg1: i32, %arg2: i32) -> (i32, i32, i32) {
    %c0_i32 = arith.constant 0 : i32
    %c0_i32_0 = arith.constant 0 : i32
    return %arg1, %c0_i32, %arg2 : i32, i32, i32
  }
  func.func @transform_14(%arg0: i32, %arg1: i32, %arg2: i32) -> (i32, i32, i32) {
    %c0_i32 = arith.constant 0 : i32
    %c0_i32_0 = arith.constant 0 : i32
    return %arg1, %arg2, %c0_i32 : i32, i32, i32
  }
  func.func @transform_15(%arg0: i32, %arg1: i32, %arg2: i32) -> (i32, i32, i32) {
    %c0_i32 = arith.constant 0 : i32
    %c0_i32_0 = arith.constant 0 : i32
    %c0_i32_1 = arith.constant 0 : i32
    return %arg1, %c0_i32, %c0_i32_0 : i32, i32, i32
  }
  func.func @transform_16(%arg0: i32, %arg1: i32, %arg2: i32) -> (i32, i32, i32) {
    %c0_i32 = arith.constant 0 : i32
    %c0_i32_0 = arith.constant 0 : i32
    %c0_i32_1 = arith.constant 0 : i32
    return %arg0, %c0_i32, %c0_i32_0 : i32, i32, i32
  }
}

</mosaic_0001>

<llo_original>
// kernel: tpu_custom_call.1
$region0: #{tpu_custom_call.1}
  #allocation0 [shape = 'u32[]', space=smem, size = 0x4, offset = 0x4, fixed_abs, tag = 'smem constant byte address 0x4 - core index']
  #allocation1 [shape = 'u32[144,128]{1,0:T(1,128)}', space=vmem, size = 0x12000, scoped, tag = 'internal scratch']
  #allocation2 [shape = 'bf16[2,16,32]{2,1,0:T(16,128)(2,1)}', space=vmem, size = 0x2000, scoped, tag = 'scratch operand']
  %s0 = inlined_call_operand.hbm [shape: f32[2,16,128], index: 0, kind: input, shape index: {}]
  %s1 = inlined_call_operand.hbm [shape: bf16[128,32], index: 1, kind: input, shape index: {}]
  %s2 = inlined_call_operand.hbm [shape: f32[1,32], index: 2, kind: input, shape index: {}]
  %s3 = inlined_call_operand.hbm [shape: f32[16,32], index: 3, kind: input, shape index: {}]
  %s4 = inlined_call_operand.hbm [shape: f32[2,1,32], index: 4, kind: input, shape index: {}]
  %s5 = inlined_call_operand.hbm [shape: f32[2,1,32], index: 5, kind: input, shape index: {}]
  %s6 = inlined_call_operand.hbm [shape: bf16[2,32,1536], index: 6, kind: input, shape index: {}]
  %s7 = inlined_call_operand.hbm [shape: f32[2,1,1536], index: 7, kind: input, shape index: {}]
  %s8 = inlined_call_operand.hbm [shape: bf16[2,512,32], index: 8, kind: input, shape index: {}]
  %s9 = inlined_call_operand.hbm [shape: f32[2,1,32], index: 9, kind: input, shape index: {}]
  %s10 = inlined_call_operand.hbm [shape: f32[2,1,32], index: 10, kind: input, shape index: {}]
  %s11 = inlined_call_operand.hbm [shape: f32[2,1,32], index: 11, kind: input, shape index: {}]
  %s12 = inlined_call_operand.hbm [shape: bf16[2,32,512], index: 12, kind: input, shape index: {}]
  %s13 = inlined_call_operand.hbm [shape: f32[2,1,512], index: 13, kind: input, shape index: {}]
  %s14 = inlined_call_operand.hbm [shape: bf16[2,512,32], index: 14, kind: input, shape index: {}]
  %s15 = inlined_call_operand.hbm [shape: f32[2,1,32], index: 15, kind: input, shape index: {}]
  %s16 = inlined_call_operand.hbm [shape: f32[2,16,32], index: 16, kind: output, shape index: {}]
  %s17 = sld [smem:[#allocation0]]
  $region169: #{tpu_custom_call.1} parent=0
    _
  %s19 = ssub.s32 1, %s17
  %s20 = scalar_select 0, %s19, %s17
  $region1: #{tpu_custom_call.1} parent=0
    #allocation3 [shape = 'u8[16384]{0}', space=vmem, size = 0x4000, scoped, tag = 'input window, operand 0, single buffered']
    #allocation4 [shape = 's32[2]{0}', space=sflag, size = 0x8, scoped, tag = 'scoped memory for tpu_custom_call.1']
    #allocation5 [shape = 's32[2]{0}', space=sflag, size = 0x8, scoped, tag = 'scoped memory for tpu_custom_call.1']
    #allocation6 [shape = 'u8[32768]{0}', space=vmem, size = 0x8000, scoped, tag = 'input window, operand 1, single buffered']
    #allocation7 [shape = 's32[1]{0}', space=sflag, size = 0x4, scoped, tag = 'scoped memory for tpu_custom_call.1']
    #allocation8 [shape = 'u8[512]{0}', space=vmem, size = 0x400, scoped, tag = 'input window, operand 2, single buffered']
    #allocation9 [shape = 'u8[8192]{0}', space=vmem, size = 0x2000, scoped, tag = 'input window, operand 3, single buffered']
    #allocation10 [shape = 's32[1]{0}', space=sflag, size = 0x4, scoped, tag = 'scoped memory for tpu_custom_call.1']
    #allocation11 [shape = 'u8[1024]{0}', space=vmem, size = 0x400, scoped, tag = 'input window, operand 4']
    #allocation12 [shape = 'u8[1024]{0}', space=vmem, size = 0x400, scoped, tag = 'input window, operand 5']
    #allocation13 [shape = 'u8[196608]{0}', space=vmem, size = 0x30000, scoped, tag = 'input window, operand 6']
    #allocation14 [shape = 'u8[12288]{0}', space=vmem, size = 0x3000, scoped, tag = 'input window, operand 7']
    #allocation15 [shape = 'u8[262144]{0}', space=vmem, size = 0x40000, scoped, tag = 'input window, operand 8']
    #allocation16 [shape = 'u8[1024]{0}', space=vmem, size = 0x400, scoped, tag = 'input window, operand 9']
    #allocation17 [shape = 'u8[1024]{0}', space=vmem, size = 0x400, scoped, tag = 'input window, operand 10']
    #allocation18 [shape = 'u8[1024]{0}', space=vmem, size = 0x400, scoped, tag = 'input window, operand 11']
    #allocation19 [shape = 'u8[65536]{0}', space=vmem, size = 0x10000, scoped, tag = 'input window, operand 12']
    #allocation20 [shape = 'u8[4096]{0}', space=vmem, size = 0x1000, scoped, tag = 'input window, operand 13']
    #allocation21 [shape = 'u8[262144]{0}', space=vmem, size = 0x40000, scoped, tag = 'input window, operand 14']
    #allocation22 [shape = 'u8[1024]{0}', space=vmem, size = 0x400, scoped, tag = 'input window, operand 15']
    #allocation23 [shape = 'u8[16384]{0}', space=vmem, size = 0x4000, scoped, tag = 'output window, operand 0, single buffered']
    %21 = vsyncpa [#allocation4], 0
    %22 = vsyncpa [#allocation7], 0
    %23 = vsyncpa [#allocation10], 0
    %24 = vsyncpa [#allocation5], 0
    loop: start=0, step=1, limit=4
    $region2: #{tpu_custom_call.1} parent=1 // loop_pre_header
      _
    $region3: #{tpu_custom_call.1} parent=1 // loop_header
      %s26 = sphi 0, %s30
      %p27 = scmp.ge.s32.totalorder %s26, 4
      %s33 = sphi 0, %s52
      %s34 = sphi 0, %s48
      %s35 = sphi 0, %s44
      %s36 = sphi 0, %s33
      %s37 = sphi 0, %s34
      %s38 = sphi 0, %s35
      %s39 = sphi 0, %s36
      %s40 = sphi 0, %s37
      %s41 = sphi 0, %s38
      %s55 = sphi 0, %s57
      %s58 = sphi 0, %s55
      %s59 = sphi 0, %s58
      %s75 = sphi 0, %s59
      %s79 = sphi 0, %s79
      %s81 = sphi 0, %s79
      %s82 = sphi 0, %s81
      %s96 = sphi 0, %s82
      %s100 = sphi 0, %s100
      %s102 = sphi 0, %s100
      %s103 = sphi 0, %s102
      %s117 = sphi 0, %s103
      %s121 = sphi 0, %s121
      %s123 = sphi 0, %s121
      %s124 = sphi 0, %s123
      %s138 = sphi 0, %s124
      %s144 = sphi 0, %s146
      %s147 = sphi 0, %s144
      %s148 = sphi 0, %s147
      %s164 = sphi 0, %s148
      %s170 = sphi 0, %s172
      %s173 = sphi 0, %s170
      %s174 = sphi 0, %s173
      %s190 = sphi 0, %s174
      %s196 = sphi 0, %s198
      %s199 = sphi 0, %s196
      %s200 = sphi 0, %s199
      %s216 = sphi 0, %s200
      %s222 = sphi 0, %s224
      %s225 = sphi 0, %s222
      %s226 = sphi 0, %s225
      %s242 = sphi 0, %s226
      %s248 = sphi 0, %s250
      %s251 = sphi 0, %s248
      %s252 = sphi 0, %s251
      %s268 = sphi 0, %s252
      %s274 = sphi 0, %s276
      %s277 = sphi 0, %s274
      %s278 = sphi 0, %s277
      %s294 = sphi 0, %s278
      %s300 = sphi 0, %s302
      %s303 = sphi 0, %s300
      %s304 = sphi 0, %s303
      %s320 = sphi 0, %s304
      %s326 = sphi 0, %s328
      %s329 = sphi 0, %s326
      %s330 = sphi 0, %s329
      %s346 = sphi 0, %s330
      %s354 = sphi 0, %s356
      %s357 = sphi 0, %s354
      %s358 = sphi 0, %s357
      %s374 = sphi 0, %s358
      %s382 = sphi 0, %s384
      %s385 = sphi 0, %s382
      %s386 = sphi 0, %s385
      %s402 = sphi 0, %s386
      %s410 = sphi 0, %s412
      %s413 = sphi 0, %s410
      %s414 = sphi 0, %s413
      %s430 = sphi 0, %s414
      %s436 = sphi 0, %s438
      %s439 = sphi 0, %s436
      %s440 = sphi 0, %s439
      %s456 = sphi 0, %s440
      %s462 = sphi 0, %s464
      %s465 = sphi 0, %s462
      %s466 = sphi 0, %s465
      %s482 = sphi 0, %s466
    $region4: #{tpu_custom_call.1} parent=1 // loop_header_branch
      %29 = sbr.rel (%p27) target = $region8
    $region5: #{tpu_custom_call.1} parent=1 // loop_body
      %s31 = ssub.s32 %s26, 1
      %s32 = ssub.s32 %s26, 2
      %s42 = sadd.s32 1, %s35
      %p43 = scmp.ge.s32.totalorder %s42, 1
      %s44 = scalar_select %p43, 0, %s42
      %s45 = sadd.s32 1, %s34
      %s46 = scalar_select %p43, %s45, %s34
      %p47 = scmp.ge.s32.totalorder %s46, 2
      %s48 = scalar_select %p47, 0, %s46
      %s49 = sadd.s32 1, %s33
      %s50 = scalar_select %p47, %s49, %s33
      %p51 = scmp.ge.s32.totalorder %s50, 1
      %s52 = scalar_select %p51, 0, %s50
      %s53 = ssub.s32 %s33, %s52
      %p54 = scmp.eq.s32.totalorder %s53, 0
      %s56 = sadd.s32 %s55, 1
      %s57 = scalar_select %p54, %s55, %s56
      %p60 = pneg %p54
      %p61 = scmp.eq.s32.totalorder %s26, 1
      %p62 = por %p60, %p61
      %p63 = scmp.ne.s32.totalorder %s55, %s58
      %p64 = scmp.eq.s32.totalorder %s26, 0
      %p65 = por %p63, %p64
      %p66 = scmp.ne.s32.totalorder %s55, %s58
      %p67 = scmp.eq.s32.totalorder %s31, 1
      %p68 = por %p66, %p67
      %p69 = scmp.ne.s32.totalorder %s58, %s59
      %p70 = scmp.eq.s32.totalorder %s31, 0
      %p71 = por %p69, %p70
      %p72 = scmp.ne.s32.totalorder %s58, %s59
      %p73 = scmp.eq.s32.totalorder %s32, 1
      %p74 = por %p72, %p73
      %p76 = scmp.ne.s32.totalorder %s59, %s75
      %p77 = scmp.eq.s32.totalorder %s32, 0
      %p78 = por %p76, %p77
      %s80 = sadd.s32 %s79, 1
      %p83 = scmp.eq.s32.totalorder %s26, 1
      %p84 = scmp.ne.s32.totalorder %s79, %s81
      %p85 = scmp.eq.s32.totalorder %s26, 0
      %p86 = por %p84, %p85
      %p87 = scmp.ne.s32.totalorder %s79, %s81
      %p88 = scmp.eq.s32.totalorder %s31, 1
      %p89 = por %p87, %p88
      %p90 = scmp.ne.s32.totalorder %s81, %s82
      %p91 = scmp.eq.s32.totalorder %s31, 0
      %p92 = por %p90, %p91
      %p93 = scmp.ne.s32.totalorder %s81, %s82
      %p94 = scmp.eq.s32.totalorder %s32, 1
      %p95 = por %p93, %p94
      %p97 = scmp.ne.s32.totalorder %s82, %s96
      %p98 = scmp.eq.s32.totalorder %s32, 0
      %p99 = por %p97, %p98
      %s101 = sadd.s32 %s100, 1
      %p104 = scmp.eq.s32.totalorder %s26, 1
      %p105 = scmp.ne.s32.totalorder %s100, %s102
      %p106 = scmp.eq.s32.totalorder %s26, 0
      %p107 = por %p105, %p106
      %p108 = scmp.ne.s32.totalorder %s100, %s102
      %p109 = scmp.eq.s32.totalorder %s31, 1
      %p110 = por %p108, %p109
      %p111 = scmp.ne.s32.totalorder %s102, %s103
      %p112 = scmp.eq.s32.totalorder %s31, 0
      %p113 = por %p111, %p112
      %p114 = scmp.ne.s32.totalorder %s102, %s103
      %p115 = scmp.eq.s32.totalorder %s32, 1
      %p116 = por %p114, %p115
      %p118 = scmp.ne.s32.totalorder %s103, %s117
      %p119 = scmp.eq.s32.totalorder %s32, 0
      %p120 = por %p118, %p119
      %s122 = sadd.s32 %s121, 1
      %p125 = scmp.eq.s32.totalorder %s26, 1
      %p126 = scmp.ne.s32.totalorder %s121, %s123
      %p127 = scmp.eq.s32.totalorder %s26, 0
      %p128 = por %p126, %p127
      %p129 = scmp.ne.s32.totalorder %s121, %s123
      %p130 = scmp.eq.s32.totalorder %s31, 1
      %p131 = por %p129, %p130
      %p132 = scmp.ne.s32.totalorder %s123, %s124
      %p133 = scmp.eq.s32.totalorder %s31, 0
      %p134 = por %p132, %p133
      %p135 = scmp.ne.s32.totalorder %s123, %s124
      %p136 = scmp.eq.s32.totalorder %s32, 1
      %p137 = por %p135, %p136
      %p139 = scmp.ne.s32.totalorder %s124, %s138
      %p140 = scmp.eq.s32.totalorder %s32, 0
      %p141 = por %p139, %p140
      %s142 = ssub.s32 %s34, %s48
      %p143 = scmp.eq.s32.totalorder %s142, 0
      %s145 = sadd.s32 %s144, 1
      %s146 = scalar_select %p143, %s144, %s145
      %p149 = pneg %p143
      %p150 = scmp.eq.s32.totalorder %s26, 1
      %p151 = por %p149, %p150
      %p152 = scmp.ne.s32.totalorder %s144, %s147
      %p153 = scmp.eq.s32.totalorder %s26, 0
      %p154 = por %p152, %p153
      %p155 = scmp.ne.s32.totalorder %s144, %s147
      %p156 = scmp.eq.s32.totalorder %s31, 1
      %p157 = por %p155, %p156
      %p158 = scmp.ne.s32.totalorder %s147, %s148
      %p159 = scmp.eq.s32.totalorder %s31, 0
      %p160 = por %p158, %p159
      %p161 = scmp.ne.s32.totalorder %s147, %s148
      %p162 = scmp.eq.s32.totalorder %s32, 1
      %p163 = por %p161, %p162
      %p165 = scmp.ne.s32.totalorder %s148, %s164
      %p166 = scmp.eq.s32.totalorder %s32, 0
      %p167 = por %p165, %p166
      %s168 = ssub.s32 %s34, %s48
      %p169 = scmp.eq.s32.totalorder %s168, 0
      %s171 = sadd.s32 %s170, 1
      %s172 = scalar_select %p169, %s170, %s171
      %p175 = pneg %p169
      %p176 = scmp.eq.s32.totalorder %s26, 1
      %p177 = por %p175, %p176
      %p178 = scmp.ne.s32.totalorder %s170, %s173
      %p179 = scmp.eq.s32.totalorder %s26, 0
      %p180 = por %p178, %p179
      %p181 = scmp.ne.s32.totalorder %s170, %s173
      %p182 = scmp.eq.s32.totalorder %s31, 1
      %p183 = por %p181, %p182
      %p184 = scmp.ne.s32.totalorder %s173, %s174
      %p185 = scmp.eq.s32.totalorder %s31, 0
      %p186 = por %p184, %p185
      %p187 = scmp.ne.s32.totalorder %s173, %s174
      %p188 = scmp.eq.s32.totalorder %s32, 1
      %p189 = por %p187, %p188
      %p191 = scmp.ne.s32.totalorder %s174, %s190
      %p192 = scmp.eq.s32.totalorder %s32, 0
      %p193 = por %p191, %p192
      %s194 = ssub.s32 %s34, %s48
      %p195 = scmp.eq.s32.totalorder %s194, 0
      %s197 = sadd.s32 %s196, 1
      %s198 = scalar_select %p195, %s196, %s197
      %p201 = pneg %p195
      %p202 = scmp.eq.s32.totalorder %s26, 1
      %p203 = por %p201, %p202
      %p204 = scmp.ne.s32.totalorder %s196, %s199
      %p205 = scmp.eq.s32.totalorder %s26, 0
      %p206 = por %p204, %p205
      %p207 = scmp.ne.s32.totalorder %s196, %s199
      %p208 = scmp.eq.s32.totalorder %s31, 1
      %p209 = por %p207, %p208
      %p210 = scmp.ne.s32.totalorder %s199, %s200
      %p211 = scmp.eq.s32.totalorder %s31, 0
      %p212 = por %p210, %p211
      %p213 = scmp.ne.s32.totalorder %s199, %s200
      %p214 = scmp.eq.s32.totalorder %s32, 1
      %p215 = por %p213, %p214
      %p217 = scmp.ne.s32.totalorder %s200, %s216
      %p218 = scmp.eq.s32.totalorder %s32, 0
      %p219 = por %p217, %p218
      %s220 = ssub.s32 %s34, %s48
      %p221 = scmp.eq.s32.totalorder %s220, 0
      %s223 = sadd.s32 %s222, 1
      %s224 = scalar_select %p221, %s222, %s223
      %p227 = pneg %p221
      %p228 = scmp.eq.s32.totalorder %s26, 1
      %p229 = por %p227, %p228
      %p230 = scmp.ne.s32.totalorder %s222, %s225
      %p231 = scmp.eq.s32.totalorder %s26, 0
      %p232 = por %p230, %p231
      %p233 = scmp.ne.s32.totalorder %s222, %s225
      %p234 = scmp.eq.s32.totalorder %s31, 1
      %p235 = por %p233, %p234
      %p236 = scmp.ne.s32.totalorder %s225, %s226
      %p237 = scmp.eq.s32.totalorder %s31, 0
      %p238 = por %p236, %p237
      %p239 = scmp.ne.s32.totalorder %s225, %s226
      %p240 = scmp.eq.s32.totalorder %s32, 1
      %p241 = por %p239, %p240
      %p243 = scmp.ne.s32.totalorder %s226, %s242
      %p244 = scmp.eq.s32.totalorder %s32, 0
      %p245 = por %p243, %p244
      %s246 = ssub.s32 %s34, %s48
      %p247 = scmp.eq.s32.totalorder %s246, 0
      %s249 = sadd.s32 %s248, 1
      %s250 = scalar_select %p247, %s248, %s249
      %p253 = pneg %p247
      %p254 = scmp.eq.s32.totalorder %s26, 1
      %p255 = por %p253, %p254
      %p256 = scmp.ne.s32.totalorder %s248, %s251
      %p257 = scmp.eq.s32.totalorder %s26, 0
      %p258 = por %p256, %p257
      %p259 = scmp.ne.s32.totalorder %s248, %s251
      %p260 = scmp.eq.s32.totalorder %s31, 1
      %p261 = por %p259, %p260
      %p262 = scmp.ne.s32.totalorder %s251, %s252
      %p263 = scmp.eq.s32.totalorder %s31, 0
      %p264 = por %p262, %p263
      %p265 = scmp.ne.s32.totalorder %s251, %s252
      %p266 = scmp.eq.s32.totalorder %s32, 1
      %p267 = por %p265, %p266
      %p269 = scmp.ne.s32.totalorder %s252, %s268
      %p270 = scmp.eq.s32.totalorder %s32, 0
      %p271 = por %p269, %p270
      %s272 = ssub.s32 %s34, %s48
      %p273 = scmp.eq.s32.totalorder %s272, 0
      %s275 = sadd.s32 %s274, 1
      %s276 = scalar_select %p273, %s274, %s275
      %p279 = pneg %p273
      %p280 = scmp.eq.s32.totalorder %s26, 1
      %p281 = por %p279, %p280
      %p282 = scmp.ne.s32.totalorder %s274, %s277
      %p283 = scmp.eq.s32.totalorder %s26, 0
      %p284 = por %p282, %p283
      %p285 = scmp.ne.s32.totalorder %s274, %s277
      %p286 = scmp.eq.s32.totalorder %s31, 1
      %p287 = por %p285, %p286
      %p288 = scmp.ne.s32.totalorder %s277, %s278
      %p289 = scmp.eq.s32.totalorder %s31, 0
      %p290 = por %p288, %p289
      %p291 = scmp.ne.s32.totalorder %s277, %s278
      %p292 = scmp.eq.s32.totalorder %s32, 1
      %p293 = por %p291, %p292
      %p295 = scmp.ne.s32.totalorder %s278, %s294
      %p296 = scmp.eq.s32.totalorder %s32, 0
      %p297 = por %p295, %p296
      %s298 = ssub.s32 %s34, %s48
      %p299 = scmp.eq.s32.totalorder %s298, 0
      %s301 = sadd.s32 %s300, 1
      %s302 = scalar_select %p299, %s300, %s301
      %p305 = pneg %p299
      %p306 = scmp.eq.s32.totalorder %s26, 1
      %p307 = por %p305, %p306
      %p308 = scmp.ne.s32.totalorder %s300, %s303
      %p309 = scmp.eq.s32.totalorder %s26, 0
      %p310 = por %p308, %p309
      %p311 = scmp.ne.s32.totalorder %s300, %s303
      %p312 = scmp.eq.s32.totalorder %s31, 1
      %p313 = por %p311, %p312
      %p314 = scmp.ne.s32.totalorder %s303, %s304
      %p315 = scmp.eq.s32.totalorder %s31, 0
      %p316 = por %p314, %p315
      %p317 = scmp.ne.s32.totalorder %s303, %s304
      %p318 = scmp.eq.s32.totalorder %s32, 1
      %p319 = por %p317, %p318
      %p321 = scmp.ne.s32.totalorder %s304, %s320
      %p322 = scmp.eq.s32.totalorder %s32, 0
      %p323 = por %p321, %p322
      %s324 = ssub.s32 %s34, %s48
      %p325 = scmp.eq.s32.totalorder %s324, 0
      %s327 = sadd.s32 %s326, 1
      %s328 = scalar_select %p325, %s326, %s327
      %p331 = pneg %p325
      %p332 = scmp.eq.s32.totalorder %s26, 1
      %p333 = por %p331, %p332
      %p334 = scmp.ne.s32.totalorder %s326, %s329
      %p335 = scmp.eq.s32.totalorder %s26, 0
      %p336 = por %p334, %p335
      %p337 = scmp.ne.s32.totalorder %s326, %s329
      %p338 = scmp.eq.s32.totalorder %s31, 1
      %p339 = por %p337, %p338
      %p340 = scmp.ne.s32.totalorder %s329, %s330
      %p341 = scmp.eq.s32.totalorder %s31, 0
      %p342 = por %p340, %p341
      %p343 = scmp.ne.s32.totalorder %s329, %s330
      %p344 = scmp.eq.s32.totalorder %s32, 1
      %p345 = por %p343, %p344
      %p347 = scmp.ne.s32.totalorder %s330, %s346
      %p348 = scmp.eq.s32.totalorder %s32, 0
      %p349 = por %p347, %p348
      %s350 = ssub.s32 %s34, %s48
      %s351 = ssub.s32 %s35, %s44
      %s352 = sor.u32 %s350, %s351
      %p353 = scmp.eq.s32.totalorder %s352, 0
      %s355 = sadd.s32 %s354, 1
      %s356 = scalar_select %p353, %s354, %s355
      %p359 = pneg %p353
      %p360 = scmp.eq.s32.totalorder %s26, 1
      %p361 = por %p359, %p360
      %p362 = scmp.ne.s32.totalorder %s354, %s357
      %p363 = scmp.eq.s32.totalorder %s26, 0
      %p364 = por %p362, %p363
      %p365 = scmp.ne.s32.totalorder %s354, %s357
      %p366 = scmp.eq.s32.totalorder %s31, 1
      %p367 = por %p365, %p366
      %p368 = scmp.ne.s32.totalorder %s357, %s358
      %p369 = scmp.eq.s32.totalorder %s31, 0
      %p370 = por %p368, %p369
      %p371 = scmp.ne.s32.totalorder %s357, %s358
      %p372 = scmp.eq.s32.totalorder %s32, 1
      %p373 = por %p371, %p372
      %p375 = scmp.ne.s32.totalorder %s358, %s374
      %p376 = scmp.eq.s32.totalorder %s32, 0
      %p377 = por %p375, %p376
      %s378 = ssub.s32 %s34, %s48
      %s379 = ssub.s32 %s35, %s44
      %s380 = sor.u32 %s378, %s379
      %p381 = scmp.eq.s32.totalorder %s380, 0
      %s383 = sadd.s32 %s382, 1
      %s384 = scalar_select %p381, %s382, %s383
      %p387 = pneg %p381
      %p388 = scmp.eq.s32.totalorder %s26, 1
      %p389 = por %p387, %p388
      %p390 = scmp.ne.s32.totalorder %s382, %s385
      %p391 = scmp.eq.s32.totalorder %s26, 0
      %p392 = por %p390, %p391
      %p393 = scmp.ne.s32.totalorder %s382, %s385
      %p394 = scmp.eq.s32.totalorder %s31, 1
      %p395 = por %p393, %p394
      %p396 = scmp.ne.s32.totalorder %s385, %s386
      %p397 = scmp.eq.s32.totalorder %s31, 0
      %p398 = por %p396, %p397
      %p399 = scmp.ne.s32.totalorder %s385, %s386
      %p400 = scmp.eq.s32.totalorder %s32, 1
      %p401 = por %p399, %p400
      %p403 = scmp.ne.s32.totalorder %s386, %s402
      %p404 = scmp.eq.s32.totalorder %s32, 0
      %p405 = por %p403, %p404
      %s406 = ssub.s32 %s34, %s48
      %s407 = ssub.s32 %s35, %s44
      %s408 = sor.u32 %s406, %s407
      %p409 = scmp.eq.s32.totalorder %s408, 0
      %s411 = sadd.s32 %s410, 1
      %s412 = scalar_select %p409, %s410, %s411
      %p415 = pneg %p409
      %p416 = scmp.eq.s32.totalorder %s26, 1
      %p417 = por %p415, %p416
      %p418 = scmp.ne.s32.totalorder %s410, %s413
      %p419 = scmp.eq.s32.totalorder %s26, 0
      %p420 = por %p418, %p419
      %p421 = scmp.ne.s32.totalorder %s410, %s413
      %p422 = scmp.eq.s32.totalorder %s31, 1
      %p423 = por %p421, %p422
      %p424 = scmp.ne.s32.totalorder %s413, %s414
      %p425 = scmp.eq.s32.totalorder %s31, 0
      %p426 = por %p424, %p425
      %p427 = scmp.ne.s32.totalorder %s413, %s414
      %p428 = scmp.eq.s32.totalorder %s32, 1
      %p429 = por %p427, %p428
      %p431 = scmp.ne.s32.totalorder %s414, %s430
      %p432 = scmp.eq.s32.totalorder %s32, 0
      %p433 = por %p431, %p432
      %s434 = ssub.s32 %s34, %s48
      %p435 = scmp.eq.s32.totalorder %s434, 0
      %s437 = sadd.s32 %s436, 1
      %s438 = scalar_select %p435, %s436, %s437
      %p441 = pneg %p435
      %p442 = scmp.eq.s32.totalorder %s26, 1
      %p443 = por %p441, %p442
      %p444 = scmp.ne.s32.totalorder %s436, %s439
      %p445 = scmp.eq.s32.totalorder %s26, 0
      %p446 = por %p444, %p445
      %p447 = scmp.ne.s32.totalorder %s436, %s439
      %p448 = scmp.eq.s32.totalorder %s31, 1
      %p449 = por %p447, %p448
      %p450 = scmp.ne.s32.totalorder %s439, %s440
      %p451 = scmp.eq.s32.totalorder %s31, 0
      %p452 = por %p450, %p451
      %p453 = scmp.ne.s32.totalorder %s439, %s440
      %p454 = scmp.eq.s32.totalorder %s32, 1
      %p455 = por %p453, %p454
      %p457 = scmp.ne.s32.totalorder %s440, %s456
      %p458 = scmp.eq.s32.totalorder %s32, 0
      %p459 = por %p457, %p458
      %s460 = ssub.s32 %s33, %s52
      %p461 = scmp.eq.s32.totalorder %s460, 0
      %s463 = sadd.s32 %s462, 1
      %s464 = scalar_select %p461, %s462, %s463
      %p467 = pneg %p461
      %p468 = scmp.eq.s32.totalorder %s26, 1
      %p469 = por %p467, %p468
      %p470 = scmp.ne.s32.totalorder %s462, %s465
      %p471 = scmp.eq.s32.totalorder %s26, 0
      %p472 = por %p470, %p471
      %p473 = scmp.ne.s32.totalorder %s462, %s465
      %p474 = scmp.eq.s32.totalorder %s31, 1
      %p475 = por %p473, %p474
      %p476 = scmp.ne.s32.totalorder %s465, %s466
      %p477 = scmp.eq.s32.totalorder %s31, 0
      %p478 = por %p476, %p477
      %p479 = scmp.ne.s32.totalorder %s465, %s466
      %p480 = scmp.eq.s32.totalorder %s32, 1
      %p481 = por %p479, %p480
      %p483 = scmp.ne.s32.totalorder %s466, %s482
      %p484 = scmp.eq.s32.totalorder %s32, 0
      %p485 = por %p483, %p484
      %p486 = scmp.le.s32.totalorder 1, %s26
      %p487 = scmp.lt.s32.totalorder %s26, 3
      %p488 = pnand %p486, %p487
      %p489 = pneg %p488
      // Predicated region
      $region9: #{tpu_custom_call.1} parent=5 // pred_check
        _
      $region10: #{tpu_custom_call.1} parent=5 // pred_check_branch
        %491 = sbr.rel (%p488) target = $region12
      $region11: #{tpu_custom_call.1} parent=5 // pred_region
        %s492 = ssub.s32 %s26, 1
        // Predicated region
        $region13: #{tpu_custom_call.1} parent=11 // pred_check
          %p493 = pneg %p71
        $region14: #{tpu_custom_call.1} parent=11 // pred_check_branch
          %495 = sbr.rel (%p493) target = $region16
        $region15: #{tpu_custom_call.1} parent=11 // pred_region
          %s496 = smul.u32 2, %s36
          %s498 = ssub.s32 512, 512
          %499 = vsyncadd [#allocation4], %s498
          %s500 = smul.addr %s496, 2
          %s501 = smul.addr %s500, 128
          %s502 = scalar_lea.hbm %s0, %s501
          %s503 = sshll.u32 [#allocation3], 4
          %s504 = int_to_ptr.vmem [resolvable:$true] %s503
          %509 = dma.hbm_to_vmem [thread:$0]  %s502, 512, %s504, [#allocation4], 128, 128, 8
        $region16: #{tpu_custom_call.1} parent=11 // pred_fallthru
          _
        // Predicated region
        $region17: #{tpu_custom_call.1} parent=11 // pred_check
          %p510 = pneg %p92
        $region18: #{tpu_custom_call.1} parent=11 // pred_check_branch
          %512 = sbr.rel (%p510) target = $region20
        $region19: #{tpu_custom_call.1} parent=11 // pred_region
          %s514 = ssub.s32 1024, 1024
          %515 = vsyncadd [#allocation7], %s514
          %s516 = sshll.u32 [#allocation6], 4
          %s517 = int_to_ptr.vmem [resolvable:$true] %s516
          %522 = dma.hbm_to_vmem [thread:$0]  %s1, 1024, %s517, [#allocation7], 64, 64, 4
        $region20: #{tpu_custom_call.1} parent=11 // pred_fallthru
          _
        // Predicated region
        $region21: #{tpu_custom_call.1} parent=11 // pred_check
          %p523 = pneg %p113
        $region22: #{tpu_custom_call.1} parent=11 // pred_check_branch
          %525 = sbr.rel (%p523) target = $region24
        $region23: #{tpu_custom_call.1} parent=11 // pred_region
          %s527 = ssub.s32 16, 16
          %528 = vsyncadd [#allocation7], %s527
          %s530 = sshll.u32 [#allocation8], 4
          %s531 = int_to_ptr.vmem [resolvable:$true] %s530
          %533 = dma.hbm_to_vmem [thread:$0]  %s2, 16, %s531, [#allocation7]
        $region24: #{tpu_custom_call.1} parent=11 // pred_fallthru
          _
        // Predicated region
        $region25: #{tpu_custom_call.1} parent=11 // pred_check
          %p534 = pneg %p134
        $region26: #{tpu_custom_call.1} parent=11 // pred_check_branch
          %536 = sbr.rel (%p534) target = $region28
        $region27: #{tpu_custom_call.1} parent=11 // pred_region
          %s538 = ssub.s32 256, 256
          %539 = vsyncadd [#allocation10], %s538
          %s540 = sshll.u32 [#allocation9], 4
          %s541 = int_to_ptr.vmem [resolvable:$true] %s540
          %546 = dma.hbm_to_vmem [thread:$0]  %s3, 256, %s541, [#allocation10], 128, 128, 8
        $region28: #{tpu_custom_call.1} parent=11 // pred_fallthru
          _
      $region12: #{tpu_custom_call.1} parent=5 // pred_fallthru
        _
      %p547 = scmp.lt.s32.totalorder %s26, 2
      // Predicated region
      $region29: #{tpu_custom_call.1} parent=5 // pred_check
        %p548 = pneg %p547
      $region30: #{tpu_custom_call.1} parent=5 // pred_check_branch
        %550 = sbr.rel (%p548) target = $region32
      $region31: #{tpu_custom_call.1} parent=5 // pred_region
        // Predicated region
        $region33: #{tpu_custom_call.1} parent=31 // pred_check
          %p551 = pneg %p154
        $region34: #{tpu_custom_call.1} parent=31 // pred_check_branch
          %553 = sbr.rel (%p551) target = $region36
        $region35: #{tpu_custom_call.1} parent=31 // pred_region
          %s554 = sand.u32 %s26, 1
          %s555 = scalar_lea.sflag [#allocation4], %s554
          %s556 = sand.u32 %s144, 1
          %s557 = scalar_lea.vmem [#allocation11], %s556
          %s559 = ssub.s32 16, 16
          %560 = vsyncadd %s555, %s559
          %s561 = smul.addr %s34, 16
          %s562 = scalar_lea.hbm %s4, %s561
          %s564 = sshll.u32 %s557, 4
          %s565 = int_to_ptr.vmem [resolvable:$true] %s564
          %567 = dma.hbm_to_vmem [thread:$0]  %s562, 16, %s565, %s555
        $region36: #{tpu_custom_call.1} parent=31 // pred_fallthru
          _
        // Predicated region
        $region37: #{tpu_custom_call.1} parent=31 // pred_check
          %p568 = pneg %p180
        $region38: #{tpu_custom_call.1} parent=31 // pred_check_branch
          %570 = sbr.rel (%p568) target = $region40
        $region39: #{tpu_custom_call.1} parent=31 // pred_region
          %s571 = sand.u32 %s26, 1
          %s572 = scalar_lea.sflag [#allocation4], %s571
          %s573 = sand.u32 %s170, 1
          %s574 = scalar_lea.vmem [#allocation12], %s573
          %s576 = ssub.s32 16, 16
          %577 = vsyncadd %s572, %s576
          %s578 = smul.addr %s34, 16
          %s579 = scalar_lea.hbm %s5, %s578
          %s581 = sshll.u32 %s574, 4
          %s582 = int_to_ptr.vmem [resolvable:$true] %s581
          %584 = dma.hbm_to_vmem [thread:$0]  %s579, 16, %s582, %s572
        $region40: #{tpu_custom_call.1} parent=31 // pred_fallthru
          _
        // Predicated region
        $region41: #{tpu_custom_call.1} parent=31 // pred_check
          %p585 = pneg %p206
        $region42: #{tpu_custom_call.1} parent=31 // pred_check_branch
          %587 = sbr.rel (%p585) target = $region44
        $region43: #{tpu_custom_call.1} parent=31 // pred_region
          %s588 = sand.u32 %s26, 1
          %s589 = scalar_lea.sflag [#allocation4], %s588
          %s590 = sand.u32 %s196, 1
          %s591 = smul.addr %s590, 192
          %s592 = scalar_lea.vmem [#allocation13], %s591
          %s594 = ssub.s32 3072, 3072
          %595 = vsyncadd %s589, %s594
          %s596 = smul.addr %s34, 48
          %s597 = smul.addr %s596, 64
          %s598 = scalar_lea.hbm %s6, %s597
          %s599 = sshll.u32 %s592, 4
          %s600 = int_to_ptr.vmem [resolvable:$true] %s599
          %605 = dma.hbm_to_vmem [thread:$0]  %s598, 3072, %s600, %s589, 768, 768, 48
        $region44: #{tpu_custom_call.1} parent=31 // pred_fallthru
          _
        // Predicated region
        $region45: #{tpu_custom_call.1} parent=31 // pred_check
          %p606 = pneg %p232
        $region46: #{tpu_custom_call.1} parent=31 // pred_check_branch
          %608 = sbr.rel (%p606) target = $region48
        $region47: #{tpu_custom_call.1} parent=31 // pred_region
          %s609 = sand.u32 %s26, 1
          %s610 = scalar_lea.sflag [#allocation4], %s609
          %s611 = sand.u32 %s222, 1
          %s612 = smul.addr %s611, 12
          %s613 = scalar_lea.vmem [#allocation14], %s612
          %s615 = ssub.s32 192, 192
          %616 = vsyncadd %s610, %s615
          %s617 = smul.addr %s34, 12
          %s618 = smul.addr %s617, 16
          %s619 = scalar_lea.hbm %s7, %s618
          %s621 = sshll.u32 %s613, 4
          %s622 = int_to_ptr.vmem [resolvable:$true] %s621
          %624 = dma.hbm_to_vmem [thread:$0]  %s619, 192, %s622, %s610
        $region48: #{tpu_custom_call.1} parent=31 // pred_fallthru
          _
        // Predicated region
        $region49: #{tpu_custom_call.1} parent=31 // pred_check
          %p625 = pneg %p258
        $region50: #{tpu_custom_call.1} parent=31 // pred_check_branch
          %627 = sbr.rel (%p625) target = $region52
        $region51: #{tpu_custom_call.1} parent=31 // pred_region
          %s628 = sand.u32 %s26, 1
          %s629 = scalar_lea.sflag [#allocation4], %s628
          %s630 = sand.u32 %s248, 1
          %s631 = smul.addr %s630, 256
          %s632 = scalar_lea.vmem [#allocation15], %s631
          %s634 = ssub.s32 4096, 4096
          %635 = vsyncadd %s629, %s634
          %s636 = smul.addr %s34, 64
          %s637 = smul.addr %s636, 64
          %s638 = scalar_lea.hbm %s8, %s637
          %s639 = sshll.u32 %s632, 4
          %s640 = int_to_ptr.vmem [resolvable:$true] %s639
          %645 = dma.hbm_to_vmem [thread:$0]  %s638, 4096, %s640, %s629, 64, 64, 4
        $region52: #{tpu_custom_call.1} parent=31 // pred_fallthru
          _
        // Predicated region
        $region53: #{tpu_custom_call.1} parent=31 // pred_check
          %p646 = pneg %p284
        $region54: #{tpu_custom_call.1} parent=31 // pred_check_branch
          %648 = sbr.rel (%p646) target = $region56
        $region55: #{tpu_custom_call.1} parent=31 // pred_region
          %s649 = sand.u32 %s26, 1
          %s650 = scalar_lea.sflag [#allocation4], %s649
          %s651 = sand.u32 %s274, 1
          %s652 = scalar_lea.vmem [#allocation16], %s651
          %s654 = ssub.s32 16, 16
          %655 = vsyncadd %s650, %s654
          %s656 = smul.addr %s34, 16
          %s657 = scalar_lea.hbm %s9, %s656
          %s659 = sshll.u32 %s652, 4
          %s660 = int_to_ptr.vmem [resolvable:$true] %s659
          %662 = dma.hbm_to_vmem [thread:$0]  %s657, 16, %s660, %s650
        $region56: #{tpu_custom_call.1} parent=31 // pred_fallthru
          _
        // Predicated region
        $region57: #{tpu_custom_call.1} parent=31 // pred_check
          %p663 = pneg %p310
        $region58: #{tpu_custom_call.1} parent=31 // pred_check_branch
          %665 = sbr.rel (%p663) target = $region60
        $region59: #{tpu_custom_call.1} parent=31 // pred_region
          %s666 = sand.u32 %s26, 1
          %s667 = scalar_lea.sflag [#allocation4], %s666
          %s668 = sand.u32 %s300, 1
          %s669 = scalar_lea.vmem [#allocation17], %s668
          %s671 = ssub.s32 16, 16
          %672 = vsyncadd %s667, %s671
          %s673 = smul.addr %s34, 16
          %s674 = scalar_lea.hbm %s10, %s673
          %s676 = sshll.u32 %s669, 4
          %s677 = int_to_ptr.vmem [resolvable:$true] %s676
          %679 = dma.hbm_to_vmem [thread:$0]  %s674, 16, %s677, %s667
        $region60: #{tpu_custom_call.1} parent=31 // pred_fallthru
          _
        // Predicated region
        $region61: #{tpu_custom_call.1} parent=31 // pred_check
          %p680 = pneg %p336
        $region62: #{tpu_custom_call.1} parent=31 // pred_check_branch
          %682 = sbr.rel (%p680) target = $region64
        $region63: #{tpu_custom_call.1} parent=31 // pred_region
          %s683 = sand.u32 %s26, 1
          %s684 = scalar_lea.sflag [#allocation4], %s683
          %s685 = sand.u32 %s326, 1
          %s686 = scalar_lea.vmem [#allocation18], %s685
          %s688 = ssub.s32 16, 16
          %689 = vsyncadd %s684, %s688
          %s690 = smul.addr %s34, 16
          %s691 = scalar_lea.hbm %s11, %s690
          %s693 = sshll.u32 %s686, 4
          %s694 = int_to_ptr.vmem [resolvable:$true] %s693
          %696 = dma.hbm_to_vmem [thread:$0]  %s691, 16, %s694, %s684
        $region64: #{tpu_custom_call.1} parent=31 // pred_fallthru
          _
        // Predicated region
        $region65: #{tpu_custom_call.1} parent=31 // pred_check
          %p697 = pneg %p364
        $region66: #{tpu_custom_call.1} parent=31 // pred_check_branch
          %699 = sbr.rel (%p697) target = $region68
        $region67: #{tpu_custom_call.1} parent=31 // pred_region
          %s700 = sand.u32 %s26, 1
          %s701 = scalar_lea.sflag [#allocation4], %s700
          %s702 = sand.u32 %s354, 1
          %s703 = smul.addr %s702, 64
          %s704 = scalar_lea.vmem [#allocation19], %s703
          %s705 = smul.u32 4, %s35
          %s707 = ssub.s32 1024, 1024
          %708 = vsyncadd %s701, %s707
          %s709 = smul.addr %s34, 16
          %s710 = sadd.s32 %s705, %s709
          %s711 = smul.addr %s710, 64
          %s712 = scalar_lea.hbm %s12, %s711
          %s713 = sshll.u32 %s704, 4
          %s714 = int_to_ptr.vmem [resolvable:$true] %s713
          %719 = dma.hbm_to_vmem [thread:$0]  %s712, 1024, %s714, %s701, 256, 256, 16
        $region68: #{tpu_custom_call.1} parent=31 // pred_fallthru
          _
        // Predicated region
        $region69: #{tpu_custom_call.1} parent=31 // pred_check
          %p720 = pneg %p392
        $region70: #{tpu_custom_call.1} parent=31 // pred_check_branch
          %722 = sbr.rel (%p720) target = $region72
        $region71: #{tpu_custom_call.1} parent=31 // pred_region
          %s723 = sand.u32 %s26, 1
          %s724 = scalar_lea.sflag [#allocation4], %s723
          %s725 = sand.u32 %s382, 1
          %s726 = smul.addr %s725, 4
          %s727 = scalar_lea.vmem [#allocation20], %s726
          %s728 = smul.u32 4, %s35
          %s730 = ssub.s32 64, 64
          %731 = vsyncadd %s724, %s730
          %s732 = smul.addr %s34, 4
          %s733 = sadd.s32 %s728, %s732
          %s734 = smul.addr %s733, 16
          %s735 = scalar_lea.hbm %s13, %s734
          %s737 = sshll.u32 %s727, 4
          %s738 = int_to_ptr.vmem [resolvable:$true] %s737
          %740 = dma.hbm_to_vmem [thread:$0]  %s735, 64, %s738, %s724
        $region72: #{tpu_custom_call.1} parent=31 // pred_fallthru
          _
        // Predicated region
        $region73: #{tpu_custom_call.1} parent=31 // pred_check
          %p741 = pneg %p420
        $region74: #{tpu_custom_call.1} parent=31 // pred_check_branch
          %743 = sbr.rel (%p741) target = $region76
        $region75: #{tpu_custom_call.1} parent=31 // pred_region
          %s744 = sand.u32 %s26, 1
          %s745 = scalar_lea.sflag [#allocation4], %s744
          %s746 = sand.u32 %s410, 1
          %s747 = smul.addr %s746, 256
          %s748 = scalar_lea.vmem [#allocation21], %s747
          %s749 = smul.u32 64, %s35
          %s751 = ssub.s32 4096, 4096
          %752 = vsyncadd %s745, %s751
          %s753 = smul.addr %s34, 64
          %s754 = sadd.s32 %s749, %s753
          %s755 = smul.addr %s754, 64
          %s756 = scalar_lea.hbm %s14, %s755
          %s757 = sshll.u32 %s748, 4
          %s758 = int_to_ptr.vmem [resolvable:$true] %s757
          %763 = dma.hbm_to_vmem [thread:$0]  %s756, 4096, %s758, %s745, 64, 64, 4
        $region76: #{tpu_custom_call.1} parent=31 // pred_fallthru
          _
        // Predicated region
        $region77: #{tpu_custom_call.1} parent=31 // pred_check
          %p764 = pneg %p446
        $region78: #{tpu_custom_call.1} parent=31 // pred_check_branch
          %766 = sbr.rel (%p764) target = $region80
        $region79: #{tpu_custom_call.1} parent=31 // pred_region
          %s767 = sand.u32 %s26, 1
          %s768 = scalar_lea.sflag [#allocation4], %s767
          %s769 = sand.u32 %s436, 1
          %s770 = scalar_lea.vmem [#allocation22], %s769
          %s772 = ssub.s32 16, 16
          %773 = vsyncadd %s768, %s772
          %s774 = smul.addr %s34, 16
          %s775 = scalar_lea.hbm %s15, %s774
          %s777 = sshll.u32 %s770, 4
          %s778 = int_to_ptr.vmem [resolvable:$true] %s777
          %780 = dma.hbm_to_vmem [thread:$0]  %s775, 16, %s778, %s768
        $region80: #{tpu_custom_call.1} parent=31 // pred_fallthru
          _
      $region32: #{tpu_custom_call.1} parent=5 // pred_fallthru
        _
      %p781 = scmp.le.s32.totalorder 1, %s26
      %p782 = scmp.lt.s32.totalorder %s26, 3
      %p783 = pnand %p781, %p782
      %p784 = pneg %p783
      // Predicated region
      $region81: #{tpu_custom_call.1} parent=5 // pred_check
        _
      $region82: #{tpu_custom_call.1} parent=5 // pred_check_branch
        %786 = sbr.rel (%p783) target = $region84
      $region83: #{tpu_custom_call.1} parent=5 // pred_region
        %s787 = ssub.s32 %s26, 1
        // Predicated region
        $region85: #{tpu_custom_call.1} parent=83 // pred_check
          %p788 = pneg %p71
        $region86: #{tpu_custom_call.1} parent=83 // pred_check_branch
          %790 = sbr.rel (%p788) target = $region88
        $region87: #{tpu_custom_call.1} parent=83 // pred_region
          %791 = dma.done [#allocation4], 512
        $region88: #{tpu_custom_call.1} parent=83 // pred_fallthru
          _
        // Predicated region
        $region89: #{tpu_custom_call.1} parent=83 // pred_check
          %p792 = pneg %p92
        $region90: #{tpu_custom_call.1} parent=83 // pred_check_branch
          %794 = sbr.rel (%p792) target = $region92
        $region91: #{tpu_custom_call.1} parent=83 // pred_region
          %795 = dma.done [#allocation7], 1024
        $region92: #{tpu_custom_call.1} parent=83 // pred_fallthru
          _
        // Predicated region
        $region93: #{tpu_custom_call.1} parent=83 // pred_check
          %p796 = pneg %p113
        $region94: #{tpu_custom_call.1} parent=83 // pred_check_branch
          %798 = sbr.rel (%p796) target = $region96
        $region95: #{tpu_custom_call.1} parent=83 // pred_region
          %799 = dma.done [#allocation7], 16
        $region96: #{tpu_custom_call.1} parent=83 // pred_fallthru
          _
        // Predicated region
        $region97: #{tpu_custom_call.1} parent=83 // pred_check
          %p800 = pneg %p134
        $region98: #{tpu_custom_call.1} parent=83 // pred_check_branch
          %802 = sbr.rel (%p800) target = $region100
        $region99: #{tpu_custom_call.1} parent=83 // pred_region
          %803 = dma.done [#allocation10], 256
        $region100: #{tpu_custom_call.1} parent=83 // pred_fallthru
          _
        %s804 = sand.u32 %s31, 1
        %s805 = scalar_lea.sflag [#allocation4], %s804
        %s806 = sand.u32 %s147, 1
        %s807 = scalar_lea.vmem [#allocation11], %s806
        // Predicated region
        $region101: #{tpu_custom_call.1} parent=83 // pred_check
          %p808 = pneg %p160
        $region102: #{tpu_custom_call.1} parent=83 // pred_check_branch
          %810 = sbr.rel (%p808) target = $region104
        $region103: #{tpu_custom_call.1} parent=83 // pred_region
          %811 = dma.done %s805, 16
        $region104: #{tpu_custom_call.1} parent=83 // pred_fallthru
          _
        %s812 = sand.u32 %s31, 1
        %s813 = scalar_lea.sflag [#allocation4], %s812
        %s814 = sand.u32 %s173, 1
        %s815 = scalar_lea.vmem [#allocation12], %s814
        // Predicated region
        $region105: #{tpu_custom_call.1} parent=83 // pred_check
          %p816 = pneg %p186
        $region106: #{tpu_custom_call.1} parent=83 // pred_check_branch
          %818 = sbr.rel (%p816) target = $region108
        $region107: #{tpu_custom_call.1} parent=83 // pred_region
          %819 = dma.done %s813, 16
        $region108: #{tpu_custom_call.1} parent=83 // pred_fallthru
          _
        %s820 = sand.u32 %s31, 1
        %s821 = scalar_lea.sflag [#allocation4], %s820
        %s822 = sand.u32 %s199, 1
        %s823 = smul.addr %s822, 192
        %s824 = scalar_lea.vmem [#allocation13], %s823
        // Predicated region
        $region109: #{tpu_custom_call.1} parent=83 // pred_check
          %p825 = pneg %p212
        $region110: #{tpu_custom_call.1} parent=83 // pred_check_branch
          %827 = sbr.rel (%p825) target = $region112
        $region111: #{tpu_custom_call.1} parent=83 // pred_region
          %828 = dma.done %s821, 3072
        $region112: #{tpu_custom_call.1} parent=83 // pred_fallthru
          _
        %s829 = sand.u32 %s31, 1
        %s830 = scalar_lea.sflag [#allocation4], %s829
        %s831 = sand.u32 %s225, 1
        %s832 = smul.addr %s831, 12
        %s833 = scalar_lea.vmem [#allocation14], %s832
        // Predicated region
        $region113: #{tpu_custom_call.1} parent=83 // pred_check
          %p834 = pneg %p238
        $region114: #{tpu_custom_call.1} parent=83 // pred_check_branch
          %836 = sbr.rel (%p834) target = $region116
        $region115: #{tpu_custom_call.1} parent=83 // pred_region
          %837 = dma.done %s830, 192
        $region116: #{tpu_custom_call.1} parent=83 // pred_fallthru
          _
        %s838 = sand.u32 %s31, 1
        %s839 = scalar_lea.sflag [#allocation4], %s838
        %s840 = sand.u32 %s251, 1
        %s841 = smul.addr %s840, 256
        %s842 = scalar_lea.vmem [#allocation15], %s841
        // Predicated region
        $region117: #{tpu_custom_call.1} parent=83 // pred_check
          %p843 = pneg %p264
        $region118: #{tpu_custom_call.1} parent=83 // pred_check_branch
          %845 = sbr.rel (%p843) target = $region120
        $region119: #{tpu_custom_call.1} parent=83 // pred_region
          %846 = dma.done %s839, 4096
        $region120: #{tpu_custom_call.1} parent=83 // pred_fallthru
          _
        %s847 = sand.u32 %s31, 1
        %s848 = scalar_lea.sflag [#allocation4], %s847
        %s849 = sand.u32 %s277, 1
        %s850 = scalar_lea.vmem [#allocation16], %s849
        // Predicated region
        $region121: #{tpu_custom_call.1} parent=83 // pred_check
          %p851 = pneg %p290
        $region122: #{tpu_custom_call.1} parent=83 // pred_check_branch
          %853 = sbr.rel (%p851) target = $region124
        $region123: #{tpu_custom_call.1} parent=83 // pred_region
          %854 = dma.done %s848, 16
        $region124: #{tpu_custom_call.1} parent=83 // pred_fallthru
          _
        %s855 = sand.u32 %s31, 1
        %s856 = scalar_lea.sflag [#allocation4], %s855
        %s857 = sand.u32 %s303, 1
        %s858 = scalar_lea.vmem [#allocation17], %s857
        // Predicated region
        $region125: #{tpu_custom_call.1} parent=83 // pred_check
          %p859 = pneg %p316
        $region126: #{tpu_custom_call.1} parent=83 // pred_check_branch
          %861 = sbr.rel (%p859) target = $region128
        $region127: #{tpu_custom_call.1} parent=83 // pred_region
          %862 = dma.done %s856, 16
        $region128: #{tpu_custom_call.1} parent=83 // pred_fallthru
          _
        %s863 = sand.u32 %s31, 1
        %s864 = scalar_lea.sflag [#allocation4], %s863
        %s865 = sand.u32 %s329, 1
        %s866 = scalar_lea.vmem [#allocation18], %s865
        // Predicated region
        $region129: #{tpu_custom_call.1} parent=83 // pred_check
          %p867 = pneg %p342
        $region130: #{tpu_custom_call.1} parent=83 // pred_check_branch
          %869 = sbr.rel (%p867) target = $region132
        $region131: #{tpu_custom_call.1} parent=83 // pred_region
          %870 = dma.done %s864, 16
        $region132: #{tpu_custom_call.1} parent=83 // pred_fallthru
          _
        %s871 = sand.u32 %s31, 1
        %s872 = scalar_lea.sflag [#allocation4], %s871
        %s873 = sand.u32 %s357, 1
        %s874 = smul.addr %s873, 64
        %s875 = scalar_lea.vmem [#allocation19], %s874
        // Predicated region
        $region133: #{tpu_custom_call.1} parent=83 // pred_check
          %p876 = pneg %p370
        $region134: #{tpu_custom_call.1} parent=83 // pred_check_branch
          %878 = sbr.rel (%p876) target = $region136
        $region135: #{tpu_custom_call.1} parent=83 // pred_region
          %879 = dma.done %s872, 1024
        $region136: #{tpu_custom_call.1} parent=83 // pred_fallthru
          _
        %s880 = sand.u32 %s31, 1
        %s881 = scalar_lea.sflag [#allocation4], %s880
        %s882 = sand.u32 %s385, 1
        %s883 = smul.addr %s882, 4
        %s884 = scalar_lea.vmem [#allocation20], %s883
        // Predicated region
        $region137: #{tpu_custom_call.1} parent=83 // pred_check
          %p885 = pneg %p398
        $region138: #{tpu_custom_call.1} parent=83 // pred_check_branch
          %887 = sbr.rel (%p885) target = $region140
        $region139: #{tpu_custom_call.1} parent=83 // pred_region
          %888 = dma.done %s881, 64
        $region140: #{tpu_custom_call.1} parent=83 // pred_fallthru
          _
        %s889 = sand.u32 %s31, 1
        %s890 = scalar_lea.sflag [#allocation4], %s889
        %s891 = sand.u32 %s413, 1
        %s892 = smul.addr %s891, 256
        %s893 = scalar_lea.vmem [#allocation21], %s892
        // Predicated region
        $region141: #{tpu_custom_call.1} parent=83 // pred_check
          %p894 = pneg %p426
        $region142: #{tpu_custom_call.1} parent=83 // pred_check_branch
          %896 = sbr.rel (%p894) target = $region144
        $region143: #{tpu_custom_call.1} parent=83 // pred_region
          %897 = dma.done %s890, 4096
        $region144: #{tpu_custom_call.1} parent=83 // pred_fallthru
          _
        %s898 = sand.u32 %s31, 1
        %s899 = scalar_lea.sflag [#allocation4], %s898
        %s900 = sand.u32 %s439, 1
        %s901 = scalar_lea.vmem [#allocation22], %s900
        // Predicated region
        $region145: #{tpu_custom_call.1} parent=83 // pred_check
          %p902 = pneg %p452
        $region146: #{tpu_custom_call.1} parent=83 // pred_check_branch
          %904 = sbr.rel (%p902) target = $region148
        $region147: #{tpu_custom_call.1} parent=83 // pred_region
          %905 = dma.done %s899, 16
        $region148: #{tpu_custom_call.1} parent=83 // pred_fallthru
          _
        %p906 = pneg %p71
        %p907 = pneg %p68
        %p908 = pneg %p92
        %p909 = pneg %p89
        %p910 = pneg %p113
        %p911 = pneg %p110
        %p912 = pneg %p134
        %p913 = pneg %p131
        %s914 = sand.u32 %s31, 1
        %s915 = scalar_lea.sflag [#allocation4], %s914
        %s916 = sand.u32 %s147, 1
        %s917 = scalar_lea.vmem [#allocation11], %s916
        %p918 = pneg %p160
        %p919 = pneg %p157
        %s920 = sand.u32 %s31, 1
        %s921 = scalar_lea.sflag [#allocation4], %s920
        %s922 = sand.u32 %s173, 1
        %s923 = scalar_lea.vmem [#allocation12], %s922
        %p924 = pneg %p186
        %p925 = pneg %p183
        %s926 = sand.u32 %s31, 1
        %s927 = scalar_lea.sflag [#allocation4], %s926
        %s928 = sand.u32 %s199, 1
        %s929 = smul.addr %s928, 192
        %s930 = scalar_lea.vmem [#allocation13], %s929
        %p931 = pneg %p212
        %p932 = pneg %p209
        %s933 = sand.u32 %s31, 1
        %s934 = scalar_lea.sflag [#allocation4], %s933
        %s935 = sand.u32 %s225, 1
        %s936 = smul.addr %s935, 12
        %s937 = scalar_lea.vmem [#allocation14], %s936
        %p938 = pneg %p238
        %p939 = pneg %p235
        %s940 = sand.u32 %s31, 1
        %s941 = scalar_lea.sflag [#allocation4], %s940
        %s942 = sand.u32 %s251, 1
        %s943 = smul.addr %s942, 256
        %s944 = scalar_lea.vmem [#allocation15], %s943
        %p945 = pneg %p264
        %p946 = pneg %p261
        %s947 = sand.u32 %s31, 1
        %s948 = scalar_lea.sflag [#allocation4], %s947
        %s949 = sand.u32 %s277, 1
        %s950 = scalar_lea.vmem [#allocation16], %s949
        %p951 = pneg %p290
        %p952 = pneg %p287
        %s953 = sand.u32 %s31, 1
        %s954 = scalar_lea.sflag [#allocation4], %s953
        %s955 = sand.u32 %s303, 1
        %s956 = scalar_lea.vmem [#allocation17], %s955
        %p957 = pneg %p316
        %p958 = pneg %p313
        %s959 = sand.u32 %s31, 1
        %s960 = scalar_lea.sflag [#allocation4], %s959
        %s961 = sand.u32 %s329, 1
        %s962 = scalar_lea.vmem [#allocation18], %s961
        %p963 = pneg %p342
        %p964 = pneg %p339
        %s965 = sand.u32 %s31, 1
        %s966 = scalar_lea.sflag [#allocation4], %s965
        %s967 = sand.u32 %s357, 1
        %s968 = smul.addr %s967, 64
        %s969 = scalar_lea.vmem [#allocation19], %s968
        %p970 = pneg %p370
        %p971 = pneg %p367
        %s972 = sand.u32 %s31, 1
        %s973 = scalar_lea.sflag [#allocation4], %s972
        %s974 = sand.u32 %s385, 1
        %s975 = smul.addr %s974, 4
        %s976 = scalar_lea.vmem [#allocation20], %s975
        %p977 = pneg %p398
        %p978 = pneg %p395
        %s979 = sand.u32 %s31, 1
        %s980 = scalar_lea.sflag [#allocation4], %s979
        %s981 = sand.u32 %s413, 1
        %s982 = smul.addr %s981, 256
        %s983 = scalar_lea.vmem [#allocation21], %s982
        %p984 = pneg %p426
        %p985 = pneg %p423
        %s986 = sand.u32 %s31, 1
        %s987 = scalar_lea.sflag [#allocation4], %s986
        %s988 = sand.u32 %s439, 1
        %s989 = scalar_lea.vmem [#allocation22], %s988
        %p990 = pneg %p452
        %p991 = pneg %p449
        %p992 = pneg %p478
        %p993 = pneg %p475
        %s994 = smul.u32 2, %s36
        %s995 = smul.u32 4, %s38
        %s996 = smul.u32 4, %s38
        %s997 = smul.u32 64, %s38
        %s998 = smul.u32 2, %s36
        %p1000 = scmp.eq.s32.totalorder %s37, 0
        %p1001 = scmp.eq.s32.totalorder %s38, 0
        %p1002 = pnand %p1000, %p1001
        %p1003 = pneg %p1002
        // Predicated region
        $region149: #{tpu_custom_call.1} parent=83 // pred_check
          _
        $region150: #{tpu_custom_call.1} parent=83 // pred_check_branch
          %1005 = sbr.rel (%p1002) target = $region152
        $region151: #{tpu_custom_call.1} parent=83 // pred_region
          %v1006 = vld [vmem:[#allocation3] sm:$0xff]
          %v1007 = vld [vmem:[#allocation3 + $0x8] sm:$0xff]
          %v1008 = vld [vmem:[#allocation3 + $0x10] sm:$0xff]
          %v1009 = vld [vmem:[#allocation3 + $0x18] sm:$0xff]
          %v1010 = vpack.c.bf16 %v1007, %v1006
          %v1011 = vpack.c.bf16 %v1009, %v1008
          %v1012 = vld [vmem:[#allocation6] sm:$0xf]
          %v1013 = vld [vmem:[#allocation6 + $0x4] sm:$0xf]
          %v1014 = vld [vmem:[#allocation6 + $0x8] sm:$0xf]
          %v1015 = vld [vmem:[#allocation6 + $0xc] sm:$0xf]
          %v1016 = vld [vmem:[#allocation6 + $0x10] sm:$0xf]
          %v1017 = vld [vmem:[#allocation6 + $0x14] sm:$0xf]
          %v1018 = vld [vmem:[#allocation6 + $0x18] sm:$0xf]
          %v1019 = vld [vmem:[#allocation6 + $0x1c] sm:$0xf]
          %v1020 = vld [vmem:[#allocation6 + $0x20] sm:$0xf]
          %v1021 = vld [vmem:[#allocation6 + $0x24] sm:$0xf]
          %v1022 = vld [vmem:[#allocation6 + $0x28] sm:$0xf]
          %v1023 = vld [vmem:[#allocation6 + $0x2c] sm:$0xf]
          %v1024 = vld [vmem:[#allocation6 + $0x30] sm:$0xf]
          %v1025 = vld [vmem:[#allocation6 + $0x34] sm:$0xf]
          %v1026 = vld [vmem:[#allocation6 + $0x38] sm:$0xf]
          %v1027 = vld [vmem:[#allocation6 + $0x3c] sm:$0xf]
          %v1028 = vld [vmem:[#allocation8] sm:$0x1]
          %v1030 = vlaneseq
          %v1031 = vshrl.u32 %v1030, 7
          %v1032 = vsub.s32 0, %v1031
          %v1033 = vrot.slane %v1028, %v1032
          %v1051 = vunpack.c.l.b16 %v1012
          %v1052 = vunpack.c.l.b16 %v1013
          %v1053 = vunpack.c.l.b16 %v1014
          %v1054 = vunpack.c.l.b16 %v1015
          %v1055 = vunpack.c.l.b16 %v1016
          %v1056 = vunpack.c.l.b16 %v1017
          %v1057 = vunpack.c.l.b16 %v1018
          %v1058 = vunpack.c.l.b16 %v1019
          %v1059 = vunpack.c.l.b16 %v1020
          %v1060 = vunpack.c.l.b16 %v1021
          %v1061 = vunpack.c.l.b16 %v1022
          %v1062 = vunpack.c.l.b16 %v1023
          %v1063 = vunpack.c.l.b16 %v1024
          %v1064 = vunpack.c.l.b16 %v1025
          %v1065 = vunpack.c.l.b16 %v1026
          %v1066 = vunpack.c.l.b16 %v1027
          %v1067 = vpack.c.b16 %v1052, %v1051
          %v1068 = vpack.c.b16 %v1054, %v1053
          %v1069 = vpack.c.b16 %v1056, %v1055
          %v1070 = vpack.c.b16 %v1058, %v1057
          %v1071 = vpack.c.b16 %v1060, %v1059
          %v1072 = vpack.c.b16 %v1062, %v1061
          %v1073 = vpack.c.b16 %v1064, %v1063
          %v1074 = vpack.c.b16 %v1066, %v1065
          %1083 = vmatprep.subr.bf16.mxu0 0
          %1084 = vmatpush1.bf16.msra.mxu0 %v1067
          %1085 = vmatprep.subr.bf16.mxu0 0
          %1086 = vmatpush1.bf16.msra.mxu0 %v1068
          %1087 = vmatprep.subr.bf16.mxu0 0
          %1088 = vmatpush1.bf16.msra.mxu0 %v1069
          %1089 = vmatprep.subr.bf16.mxu0 0
          %1090 = vmatpush1.bf16.msra.mxu0 %v1070
          %1091 = vmatprep.subr.bf16.mxu0 0
          %1092 = vmatpush1.bf16.msra.mxu0 %v1071
          %1093 = vmatprep.subr.bf16.mxu0 0
          %1094 = vmatpush1.bf16.msra.mxu0 %v1072
          %1095 = vmatprep.subr.bf16.mxu0 0
          %1096 = vmatpush1.bf16.msra.mxu0 %v1073
          %1097 = vmatprep.subr.bf16.mxu0 0
          %1098 = vmatpush1.bf16.msra.mxu0 %v1074
          %1099 = vmatprep.subr.bf16.mxu0 0
          %1100 = vmatpush1.bf16.msra.mxu0 0
          %1101 = vmatprep.subr.bf16.mxu0 0
          %1102 = vmatpush1.bf16.msra.mxu0 0
          %1103 = vmatprep.subr.bf16.mxu0 0
          %1104 = vmatpush1.bf16.msra.mxu0 0
          %1105 = vmatprep.subr.bf16.mxu0 0
          %1106 = vmatpush1.bf16.msra.mxu0 0
          %1107 = vmatprep.subr.bf16.mxu0 0
          %1108 = vmatpush1.bf16.msra.mxu0 0
          %1109 = vmatprep.subr.bf16.mxu0 0
          %1110 = vmatpush1.bf16.msra.mxu0 0
          %1111 = vmatprep.subr.bf16.mxu0 0
          %1112 = vmatpush1.bf16.msra.mxu0 0
          %1113 = vmatprep.subr.bf16.mxu0 0
          %1114 = vmatpush1.bf16.msra.mxu0 0
          %1115 = vmatprep.mubr.bf16.mxu0 0
          %1116 = vmatmul.mubr.bf16.gmra.mrb[0].mxu0 %v1010
          %v1117 = vpop.f32.mrb[0].mxu0
          %v1118 = vadd.f32 %v1033, %v1117
          %v1119 = vpop.f32.mrb[0].mxu0
          %v1120 = vpop.f32.mrb[0].mxu0
          %v1121 = vadd.f32 %v1033, %v1120
          %v1122 = vpop.f32.mrb[0].mxu0
          %1123 = vmatprep.mubr.bf16.mxu0 0
          %1124 = vmatmul.mubr.bf16.gmra.mrb[0].mxu0 %v1011
          %v1125 = vpop.f32.mrb[0].mxu0
          %v1126 = vadd.f32 %v1033, %v1125
          %v1127 = vpop.f32.mrb[0].mxu0
          %v1128 = vpop.f32.mrb[0].mxu0
          %v1129 = vadd.f32 %v1033, %v1128
          %v1130 = vpop.f32.mrb[0].mxu0
          %1131 = vdwg.mxu0
          %v1132 = vld [vmem:[#allocation9] sm:$0xff]
          %v1133 = vld [vmem:[#allocation9 + $0x8] sm:$0xff]
          %v1134 = vadd.f32 %v1118, %v1132
          %v1135 = vadd.f32 %v1121, %v1133
          %v1136 = vadd.f32 %v1126, %v1132
          %v1137 = vadd.f32 %v1129, %v1133
          %vm1138 = vcmask 261120
          %1139 = vst.msk [vmem:[#allocation23] sm:$0xff] %vm1138, %v1134
          %1140 = vst.msk [vmem:[#allocation23 + $0x8] sm:$0xff] %vm1138, %v1135
          %1141 = vst.msk [vmem:[#allocation23 + $0x10] sm:$0xff] %vm1138, %v1136
          %1142 = vst.msk [vmem:[#allocation23 + $0x18] sm:$0xff] %vm1138, %v1137
        $region152: #{tpu_custom_call.1} parent=83 // pred_fallthru
          _
        // Predicated region
        $region153: #{tpu_custom_call.1} parent=83 // pred_check
          %p1143 = pneg %p1001
        $region154: #{tpu_custom_call.1} parent=83 // pred_check_branch
          %1145 = sbr.rel (%p1143) target = $region156
        $region155: #{tpu_custom_call.1} parent=83 // pred_region
          %v1146 = vld [vmem:[#allocation23] sm:$0xff]
          %v1147 = vld [vmem:[#allocation23 + $0x8] sm:$0xff]
          %v1148 = vld [vmem:[#allocation23 + $0x10] sm:$0xff]
          %v1149 = vld [vmem:[#allocation23 + $0x18] sm:$0xff]
          %v1150 = vld [vmem:[%s807] sm:$0x1]
          %v1151 = vld [vmem:[%s815] sm:$0x1]
          %vm1152 = vcmask 261120
          %v1153 = vsel %vm1152, %v1146, 0.0
          %1154 = vadd.xlane.f32.xlu0 %v1153
          %v1155 = vpop.xlane.xlu0 %1154
          %v1156 = vsel %vm1152, %v1147, 0.0
          %1157 = vadd.xlane.f32.xlu0 %v1156
          %v1158 = vpop.xlane.xlu0 %1157
          %v1159 = vsel %vm1152, %v1148, 0.0
          %1160 = vadd.xlane.f32.xlu0 %v1159
          %v1161 = vpop.xlane.xlu0 %1160
          %v1162 = vsel %vm1152, %v1149, 0.0
          %1163 = vadd.xlane.f32.xlu0 %v1162
          %v1164 = vpop.xlane.xlu0 %1163
          %v1165 = vrcp.pop 32.0
          %v1166 = vmul.f32 %v1155, %v1165
          %v1167 = vmul.f32 %v1158, %v1165
          %v1168 = vmul.f32 %v1161, %v1165
          %v1169 = vmul.f32 %v1164, %v1165
          %v1170 = vsub.f32 %v1146, %v1166
          %v1171 = vsub.f32 %v1147, %v1167
          %v1172 = vsub.f32 %v1148, %v1168
          %v1173 = vsub.f32 %v1149, %v1169
          %v1174 = vmul.f32 %v1170, %v1170
          %v1175 = vmul.f32 %v1171, %v1171
          %v1176 = vmul.f32 %v1172, %v1172
          %v1177 = vmul.f32 %v1173, %v1173
          %v1178 = vsel %vm1152, %v1174, 0.0
          %1179 = vadd.xlane.f32.xlu0 %v1178
          %v1180 = vpop.xlane.xlu0 %1179
          %v1181 = vsel %vm1152, %v1175, 0.0
          %1182 = vadd.xlane.f32.xlu0 %v1181
          %v1183 = vpop.xlane.xlu0 %1182
          %v1184 = vsel %vm1152, %v1176, 0.0
          %1185 = vadd.xlane.f32.xlu0 %v1184
          %v1186 = vpop.xlane.xlu0 %1185
          %v1187 = vsel %vm1152, %v1177, 0.0
          %1188 = vadd.xlane.f32.xlu0 %v1187
          %v1189 = vpop.xlane.xlu0 %1188
          %v1190 = vmul.f32 %v1180, %v1165
          %v1191 = vmul.f32 %v1183, %v1165
          %v1192 = vmul.f32 %v1186, %v1165
          %v1193 = vmul.f32 %v1189, %v1165
          %v1194 = vadd.f32 %v1190, 1e-06
          %v1195 = vadd.f32 %v1191, 1e-06
          %v1196 = vadd.f32 %v1192, 1e-06
          %v1197 = vadd.f32 %v1193, 1e-06
          %v1198 = vrsqrt.pop %v1194
          %v1199 = vrsqrt.pop %v1195
          %v1200 = vrsqrt.pop %v1196
          %v1201 = vrsqrt.pop %v1197
          %v1202 = vmul.f32 %v1170, %v1198
          %v1203 = vmul.f32 %v1171, %v1199
          %v1204 = vmul.f32 %v1172, %v1200
          %v1205 = vmul.f32 %v1173, %v1201
          %v1207 = vlaneseq
          %v1208 = vshrl.u32 %v1207, 7
          %v1209 = vsub.s32 0, %v1208
          %v1210 = vrot.slane %v1150, %v1209
          %v1212 = vmul.f32 %v1202, %v1210
          %v1213 = vmul.f32 %v1203, %v1210
          %v1214 = vmul.f32 %v1204, %v1210
          %v1215 = vmul.f32 %v1205, %v1210
          %v1217 = vlaneseq
          %v1218 = vshrl.u32 %v1217, 7
          %v1219 = vsub.s32 0, %v1218
          %v1220 = vrot.slane %v1151, %v1219
          %v1222 = vadd.f32 %v1212, %v1220
          %v1223 = vadd.f32 %v1213, %v1220
          %v1224 = vadd.f32 %v1214, %v1220
          %v1225 = vadd.f32 %v1215, %v1220
          %v1226 = vpack.c.bf16 %v1223, %v1222
          %v1227 = vpack.c.bf16 %v1225, %v1224
          %v1228 = vld [vmem:[%s824] sm:$0xff]
          %v1229 = vld [vmem:[%s824 + $0x8] sm:$0xff]
          %v1230 = vld [vmem:[%s824 + $0x10] sm:$0xff]
          %v1231 = vld [vmem:[%s824 + $0x18] sm:$0xff]
          %v1232 = vld [vmem:[%s824 + $0x20] sm:$0xff]
          %v1233 = vld [vmem:[%s824 + $0x28] sm:$0xff]
          %v1234 = vld [vmem:[%s824 + $0x30] sm:$0xff]
          %v1235 = vld [vmem:[%s824 + $0x38] sm:$0xff]
          %v1236 = vld [vmem:[%s824 + $0x40] sm:$0xff]
          %v1237 = vld [vmem:[%s824 + $0x48] sm:$0xff]
          %v1238 = vld [vmem:[%s824 + $0x50] sm:$0xff]
          %v1239 = vld [vmem:[%s824 + $0x58] sm:$0xff]
          %v1240 = vld [vmem:[%s824 + $0x60] sm:$0xff]
          %v1241 = vld [vmem:[%s824 + $0x68] sm:$0xff]
          %v1242 = vld [vmem:[%s824 + $0x70] sm:$0xff]
          %v1243 = vld [vmem:[%s824 + $0x78] sm:$0xff]
          %v1244 = vld [vmem:[%s824 + $0x80] sm:$0xff]
          %v1245 = vld [vmem:[%s824 + $0x88] sm:$0xff]
          %v1246 = vld [vmem:[%s824 + $0x90] sm:$0xff]
          %v1247 = vld [vmem:[%s824 + $0x98] sm:$0xff]
          %v1248 = vld [vmem:[%s824 + $0xa0] sm:$0xff]
          %v1249 = vld [vmem:[%s824 + $0xa8] sm:$0xff]
          %v1250 = vld [vmem:[%s824 + $0xb0] sm:$0xff]
          %v1251 = vld [vmem:[%s824 + $0xb8] sm:$0xff]
          %v1252 = vld [vmem:[%s833] sm:$0xff]
          %v1253 = vld [vmem:[%s833 + $0x8] sm:$0xf]
          %v1256 = vlaneseq
          %v1257 = vshrl.u32 %v1256, 7
          %v1258 = vsub.s32 0, %v1257
          %v1259 = vrot.slane %v1252, %v1258
          %v1260 = vlaneseq
          %v1261 = vshrl.u32 %v1260, 7
          %v1262 = vsub.s32 1, %v1261
          %v1263 = vrot.slane %v1252, %v1262
          %v1264 = vlaneseq
          %v1265 = vshrl.u32 %v1264, 7
          %v1266 = vsub.s32 2, %v1265
          %v1267 = vrot.slane %v1252, %v1266
          %v1268 = vlaneseq
          %v1269 = vshrl.u32 %v1268, 7
          %v1270 = vsub.s32 3, %v1269
          %v1271 = vrot.slane %v1252, %v1270
          %v1272 = vlaneseq
          %v1273 = vshrl.u32 %v1272, 7
          %v1274 = vsub.s32 4, %v1273
          %v1275 = vrot.slane %v1252, %v1274
          %v1276 = vlaneseq
          %v1277 = vshrl.u32 %v1276, 7
          %v1278 = vsub.s32 5, %v1277
          %v1279 = vrot.slane %v1252, %v1278
          %v1280 = vlaneseq
          %v1281 = vshrl.u32 %v1280, 7
          %v1282 = vsub.s32 6, %v1281
          %v1283 = vrot.slane %v1252, %v1282
          %v1284 = vlaneseq
          %v1285 = vshrl.u32 %v1284, 7
          %v1286 = vsub.s32 7, %v1285
          %v1287 = vrot.slane %v1252, %v1286
          %v1288 = vlaneseq
          %v1289 = vshrl.u32 %v1288, 7
          %v1290 = vsub.s32 0, %v1289
          %v1291 = vrot.slane %v1253, %v1290
          %v1292 = vlaneseq
          %v1293 = vshrl.u32 %v1292, 7
          %v1294 = vsub.s32 1, %v1293
          %v1295 = vrot.slane %v1253, %v1294
          %v1296 = vlaneseq
          %v1297 = vshrl.u32 %v1296, 7
          %v1298 = vsub.s32 2, %v1297
          %v1299 = vrot.slane %v1253, %v1298
          %v1300 = vlaneseq
          %v1301 = vshrl.u32 %v1300, 7
          %v1302 = vsub.s32 3, %v1301
          %v1303 = vrot.slane %v1253, %v1302
          %v1340 = vunpack.c.l.b16 %v1228
          %v1341 = vunpack.c.h.b16 %v1228
          %v1342 = vunpack.c.l.b16 %v1229
          %v1343 = vunpack.c.h.b16 %v1229
          %v1344 = vunpack.c.l.b16 %v1230
          %v1345 = vunpack.c.h.b16 %v1230
          %v1346 = vunpack.c.l.b16 %v1231
          %v1347 = vunpack.c.h.b16 %v1231
          %v1348 = vunpack.c.l.b16 %v1232
          %v1349 = vunpack.c.h.b16 %v1232
          %v1350 = vunpack.c.l.b16 %v1233
          %v1351 = vunpack.c.h.b16 %v1233
          %v1352 = vunpack.c.l.b16 %v1234
          %v1353 = vunpack.c.h.b16 %v1234
          %v1354 = vunpack.c.l.b16 %v1235
          %v1355 = vunpack.c.h.b16 %v1235
          %v1356 = vunpack.c.l.b16 %v1236
          %v1357 = vunpack.c.h.b16 %v1236
          %v1358 = vunpack.c.l.b16 %v1237
          %v1359 = vunpack.c.h.b16 %v1237
          %v1360 = vunpack.c.l.b16 %v1238
          %v1361 = vunpack.c.h.b16 %v1238
          %v1362 = vunpack.c.l.b16 %v1239
          %v1363 = vunpack.c.h.b16 %v1239
          %v1364 = vunpack.c.l.b16 %v1240
          %v1365 = vunpack.c.h.b16 %v1240
          %v1366 = vunpack.c.l.b16 %v1241
          %v1367 = vunpack.c.h.b16 %v1241
          %v1368 = vunpack.c.l.b16 %v1242
          %v1369 = vunpack.c.h.b16 %v1242
          %v1370 = vunpack.c.l.b16 %v1243
          %v1371 = vunpack.c.h.b16 %v1243
          %v1372 = vunpack.c.l.b16 %v1244
          %v1373 = vunpack.c.h.b16 %v1244
          %v1374 = vunpack.c.l.b16 %v1245
          %v1375 = vunpack.c.h.b16 %v1245
          %v1376 = vunpack.c.l.b16 %v1246
          %v1377 = vunpack.c.h.b16 %v1246
          %v1378 = vunpack.c.l.b16 %v1247
          %v1379 = vunpack.c.h.b16 %v1247
          %v1380 = vunpack.c.l.b16 %v1248
          %v1381 = vunpack.c.h.b16 %v1248
          %v1382 = vunpack.c.l.b16 %v1249
          %v1383 = vunpack.c.h.b16 %v1249
          %v1384 = vunpack.c.l.b16 %v1250
          %v1385 = vunpack.c.h.b16 %v1250
          %v1386 = vunpack.c.l.b16 %v1251
          %v1387 = vunpack.c.h.b16 %v1251
          %v1388 = vpack.c.b16 %v1352, %v1340
          %v1389 = vpack.c.b16 %v1353, %v1341
          %v1390 = vpack.c.b16 %v1354, %v1342
          %v1391 = vpack.c.b16 %v1355, %v1343
          %v1392 = vpack.c.b16 %v1356, %v1344
          %v1393 = vpack.c.b16 %v1357, %v1345
          %v1394 = vpack.c.b16 %v1358, %v1346
          %v1395 = vpack.c.b16 %v1359, %v1347
          %v1396 = vpack.c.b16 %v1360, %v1348
          %v1397 = vpack.c.b16 %v1361, %v1349
          %v1398 = vpack.c.b16 %v1362, %v1350
          %v1399 = vpack.c.b16 %v1363, %v1351
          %v1400 = vpack.c.b16 %v1376, %v1364
          %v1401 = vpack.c.b16 %v1377, %v1365
          %v1402 = vpack.c.b16 %v1378, %v1366
          %v1403 = vpack.c.b16 %v1379, %v1367
          %v1404 = vpack.c.b16 %v1380, %v1368
          %v1405 = vpack.c.b16 %v1381, %v1369
          %v1406 = vpack.c.b16 %v1382, %v1370
          %v1407 = vpack.c.b16 %v1383, %v1371
          %v1408 = vpack.c.b16 %v1384, %v1372
          %v1409 = vpack.c.b16 %v1385, %v1373
          %v1410 = vpack.c.b16 %v1386, %v1374
          %v1411 = vpack.c.b16 %v1387, %v1375
          %v1437 = vsel %vm1152, %v1226, 0
          %v1440 = vsel %vm1152, %v1227, 0
          %1442 = vmatprep.subr.bf16.mxu0 %v1389
          %1443 = vmatpush1.bf16.msra.mxu0 %v1388
          %1444 = vmatprep.subr.bf16.mxu0 %v1401
          %1445 = vmatpush1.bf16.msra.mxu0 %v1400
          %1446 = vmatprep.subr.bf16.mxu0 0
          %1447 = vmatpush1.bf16.msra.mxu0 0
          %1448 = vmatprep.subr.bf16.mxu0 0
          %1449 = vmatpush1.bf16.msra.mxu0 0
          %1450 = vmatprep.subr.bf16.mxu0 0
          %1451 = vmatpush1.bf16.msra.mxu0 0
          %1452 = vmatprep.subr.bf16.mxu0 0
          %1453 = vmatpush1.bf16.msra.mxu0 0
          %1454 = vmatprep.subr.bf16.mxu0 0
          %1455 = vmatpush1.bf16.msra.mxu0 0
          %1456 = vmatprep.subr.bf16.mxu0 0
          %1457 = vmatpush1.bf16.msra.mxu0 0
          %1458 = vmatprep.subr.bf16.mxu0 0
          %1459 = vmatpush1.bf16.msra.mxu0 0
          %1460 = vmatprep.subr.bf16.mxu0 0
          %1461 = vmatpush1.bf16.msra.mxu0 0
          %1462 = vmatprep.subr.bf16.mxu0 0
          %1463 = vmatpush1.bf16.msra.mxu0 0
          %1464 = vmatprep.subr.bf16.mxu0 0
          %1465 = vmatpush1.bf16.msra.mxu0 0
          %1466 = vmatprep.subr.bf16.mxu0 0
          %1467 = vmatpush1.bf16.msra.mxu0 0
          %1468 = vmatprep.subr.bf16.mxu0 0
          %1469 = vmatpush1.bf16.msra.mxu0 0
          %1470 = vmatprep.subr.bf16.mxu0 0
          %1471 = vmatpush1.bf16.msra.mxu0 0
          %1472 = vmatprep.subr.bf16.mxu0 0
          %1473 = vmatpush1.bf16.msra.mxu0 0
          %1474 = vmatprep.mubr.bf16.mxu0 0
          %1475 = vmatmul.mubr.bf16.gmra.mrb[0].mxu0 %v1437
          %v1476 = vpop.f32.mrb[0].mxu0
          %v1477 = vadd.f32 %v1259, %v1476
          %v1478 = vpop.f32.mrb[0].mxu0
          %v1479 = vadd.f32 %v1263, %v1478
          %v1480 = vpop.f32.mrb[0].mxu0
          %v1481 = vadd.f32 %v1259, %v1480
          %v1482 = vpop.f32.mrb[0].mxu0
          %v1483 = vadd.f32 %v1263, %v1482
          %1484 = vmatprep.mubr.bf16.mxu0 0
          %1485 = vmatmul.mubr.bf16.gmra.mrb[0].mxu0 %v1440
          %v1486 = vpop.f32.mrb[0].mxu0
          %v1487 = vadd.f32 %v1259, %v1486
          %v1488 = vpop.f32.mrb[0].mxu0
          %v1489 = vadd.f32 %v1263, %v1488
          %v1490 = vpop.f32.mrb[0].mxu0
          %v1491 = vadd.f32 %v1259, %v1490
          %v1492 = vpop.f32.mrb[0].mxu0
          %v1493 = vadd.f32 %v1263, %v1492
          %1494 = vdwg.mxu0
          %1495 = vmatprep.subr.bf16.mxu0 %v1391
          %1496 = vmatpush1.bf16.msra.mxu0 %v1390
          %1497 = vmatprep.subr.bf16.mxu0 %v1403
          %1498 = vmatpush1.bf16.msra.mxu0 %v1402
          %1499 = vmatprep.subr.bf16.mxu0 0
          %1500 = vmatpush1.bf16.msra.mxu0 0
          %1501 = vmatprep.subr.bf16.mxu0 0
          %1502 = vmatpush1.bf16.msra.mxu0 0
          %1503 = vmatprep.subr.bf16.mxu0 0
          %1504 = vmatpush1.bf16.msra.mxu0 0
          %1505 = vmatprep.subr.bf16.mxu0 0
          %1506 = vmatpush1.bf16.msra.mxu0 0
          %1507 = vmatprep.subr.bf16.mxu0 0
          %1508 = vmatpush1.bf16.msra.mxu0 0
          %1509 = vmatprep.subr.bf16.mxu0 0
          %1510 = vmatpush1.bf16.msra.mxu0 0
          %1511 = vmatprep.subr.bf16.mxu0 0
          %1512 = vmatpush1.bf16.msra.mxu0 0
          %1513 = vmatprep.subr.bf16.mxu0 0
          %1514 = vmatpush1.bf16.msra.mxu0 0
          %1515 = vmatprep.subr.bf16.mxu0 0
          %1516 = vmatpush1.bf16.msra.mxu0 0
          %1517 = vmatprep.subr.bf16.mxu0 0
          %1518 = vmatpush1.bf16.msra.mxu0 0
          %1519 = vmatprep.subr.bf16.mxu0 0
          %1520 = vmatpush1.bf16.msra.mxu0 0
          %1521 = vmatprep.subr.bf16.mxu0 0
          %1522 = vmatpush1.bf16.msra.mxu0 0
          %1523 = vmatprep.subr.bf16.mxu0 0
          %1524 = vmatpush1.bf16.msra.mxu0 0
          %1525 = vmatprep.subr.bf16.mxu0 0
          %1526 = vmatpush1.bf16.msra.mxu0 0
          %1527 = vmatprep.mubr.bf16.mxu0 0
          %1528 = vmatmul.mubr.bf16.gmra.mrb[0].mxu0 %v1437
          %v1529 = vpop.f32.mrb[0].mxu0
          %v1530 = vadd.f32 %v1267, %v1529
          %v1531 = vpop.f32.mrb[0].mxu0
          %v1532 = vadd.f32 %v1271, %v1531
          %v1533 = vpop.f32.mrb[0].mxu0
          %v1534 = vadd.f32 %v1267, %v1533
          %v1535 = vpop.f32.mrb[0].mxu0
          %v1536 = vadd.f32 %v1271, %v1535
          %1537 = vmatprep.mubr.bf16.mxu0 0
          %1538 = vmatmul.mubr.bf16.gmra.mrb[0].mxu0 %v1440
          %v1539 = vpop.f32.mrb[0].mxu0
          %v1540 = vadd.f32 %v1267, %v1539
          %v1541 = vpop.f32.mrb[0].mxu0
          %v1542 = vadd.f32 %v1271, %v1541
          %v1543 = vpop.f32.mrb[0].mxu0
          %v1544 = vadd.f32 %v1267, %v1543
          %v1545 = vpop.f32.mrb[0].mxu0
          %v1546 = vadd.f32 %v1271, %v1545
          %1547 = vdwg.mxu0
          %1548 = vmatprep.subr.bf16.mxu0 %v1393
          %1549 = vmatpush1.bf16.msra.mxu0 %v1392
          %1550 = vmatprep.subr.bf16.mxu0 %v1405
          %1551 = vmatpush1.bf16.msra.mxu0 %v1404
          %1552 = vmatprep.subr.bf16.mxu0 0
          %1553 = vmatpush1.bf16.msra.mxu0 0
          %1554 = vmatprep.subr.bf16.mxu0 0
          %1555 = vmatpush1.bf16.msra.mxu0 0
          %1556 = vmatprep.subr.bf16.mxu0 0
          %1557 = vmatpush1.bf16.msra.mxu0 0
          %1558 = vmatprep.subr.bf16.mxu0 0
          %1559 = vmatpush1.bf16.msra.mxu0 0
          %1560 = vmatprep.subr.bf16.mxu0 0
          %1561 = vmatpush1.bf16.msra.mxu0 0
          %1562 = vmatprep.subr.bf16.mxu0 0
          %1563 = vmatpush1.bf16.msra.mxu0 0
          %1564 = vmatprep.subr.bf16.mxu0 0
          %1565 = vmatpush1.bf16.msra.mxu0 0
          %1566 = vmatprep.subr.bf16.mxu0 0
          %1567 = vmatpush1.bf16.msra.mxu0 0
          %1568 = vmatprep.subr.bf16.mxu0 0
          %1569 = vmatpush1.bf16.msra.mxu0 0
          %1570 = vmatprep.subr.bf16.mxu0 0
          %1571 = vmatpush1.bf16.msra.mxu0 0
          %1572 = vmatprep.subr.bf16.mxu0 0
          %1573 = vmatpush1.bf16.msra.mxu0 0
          %1574 = vmatprep.subr.bf16.mxu0 0
          %1575 = vmatpush1.bf16.msra.mxu0 0
          %1576 = vmatprep.subr.bf16.mxu0 0
          %1577 = vmatpush1.bf16.msra.mxu0 0
          %1578 = vmatprep.subr.bf16.mxu0 0
          %1579 = vmatpush1.bf16.msra.mxu0 0
          %1580 = vmatprep.mubr.bf16.mxu0 0
          %1581 = vmatmul.mubr.bf16.gmra.mrb[0].mxu0 %v1437
          %v1582 = vpop.f32.mrb[0].mxu0
          %v1583 = vadd.f32 %v1275, %v1582
          %v1584 = vpop.f32.mrb[0].mxu0
          %v1585 = vadd.f32 %v1279, %v1584
          %v1586 = vpop.f32.mrb[0].mxu0
          %v1587 = vadd.f32 %v1275, %v1586
          %v1588 = vpop.f32.mrb[0].mxu0
          %v1589 = vadd.f32 %v1279, %v1588
          %1590 = vmatprep.mubr.bf16.mxu0 0
          %1591 = vmatmul.mubr.bf16.gmra.mrb[0].mxu0 %v1440
          %v1592 = vpop.f32.mrb[0].mxu0
          %v1593 = vadd.f32 %v1275, %v1592
          %v1594 = vpop.f32.mrb[0].mxu0
          %v1595 = vadd.f32 %v1279, %v1594
          %v1596 = vpop.f32.mrb[0].mxu0
          %v1597 = vadd.f32 %v1275, %v1596
          %v1598 = vpop.f32.mrb[0].mxu0
          %v1599 = vadd.f32 %v1279, %v1598
          %1600 = vdwg.mxu0
          %1601 = vmatprep.subr.bf16.mxu0 %v1395
          %1602 = vmatpush1.bf16.msra.mxu0 %v1394
          %1603 = vmatprep.subr.bf16.mxu0 %v1407
          %1604 = vmatpush1.bf16.msra.mxu0 %v1406
          %1605 = vmatprep.subr.bf16.mxu0 0
          %1606 = vmatpush1.bf16.msra.mxu0 0
          %1607 = vmatprep.subr.bf16.mxu0 0
          %1608 = vmatpush1.bf16.msra.mxu0 0
          %1609 = vmatprep.subr.bf16.mxu0 0
          %1610 = vmatpush1.bf16.msra.mxu0 0
          %1611 = vmatprep.subr.bf16.mxu0 0
          %1612 = vmatpush1.bf16.msra.mxu0 0
          %1613 = vmatprep.subr.bf16.mxu0 0
          %1614 = vmatpush1.bf16.msra.mxu0 0
          %1615 = vmatprep.subr.bf16.mxu0 0
          %1616 = vmatpush1.bf16.msra.mxu0 0
          %1617 = vmatprep.subr.bf16.mxu0 0
          %1618 = vmatpush1.bf16.msra.mxu0 0
          %1619 = vmatprep.subr.bf16.mxu0 0
          %1620 = vmatpush1.bf16.msra.mxu0 0
          %1621 = vmatprep.subr.bf16.mxu0 0
          %1622 = vmatpush1.bf16.msra.mxu0 0
          %1623 = vmatprep.subr.bf16.mxu0 0
          %1624 = vmatpush1.bf16.msra.mxu0 0
          %1625 = vmatprep.subr.bf16.mxu0 0
          %1626 = vmatpush1.bf16.msra.mxu0 0
          %1627 = vmatprep.subr.bf16.mxu0 0
          %1628 = vmatpush1.bf16.msra.mxu0 0
          %1629 = vmatprep.subr.bf16.mxu0 0
          %1630 = vmatpush1.bf16.msra.mxu0 0
          %1631 = vmatprep.subr.bf16.mxu0 0
          %1632 = vmatpush1.bf16.msra.mxu0 0
          %1633 = vmatprep.mubr.bf16.mxu0 0
          %1634 = vmatmul.mubr.bf16.gmra.mrb[0].mxu0 %v1437
          %v1635 = vpop.f32.mrb[0].mxu0
          %v1636 = vadd.f32 %v1283, %v1635
          %v1637 = vpop.f32.mrb[0].mxu0
          %v1638 = vadd.f32 %v1287, %v1637
          %v1639 = vpop.f32.mrb[0].mxu0
          %v1640 = vadd.f32 %v1283, %v1639
          %v1641 = vpop.f32.mrb[0].mxu0
          %v1642 = vadd.f32 %v1287, %v1641
          %1643 = vmatprep.mubr.bf16.mxu0 0
          %1644 = vmatmul.mubr.bf16.gmra.mrb[0].mxu0 %v1440
          %v1645 = vpop.f32.mrb[0].mxu0
          %v1646 = vadd.f32 %v1283, %v1645
          %v1647 = vpop.f32.mrb[0].mxu0
          %v1648 = vadd.f32 %v1287, %v1647
          %v1649 = vpop.f32.mrb[0].mxu0
          %v1650 = vadd.f32 %v1283, %v1649
          %v1651 = vpop.f32.mrb[0].mxu0
          %v1652 = vadd.f32 %v1287, %v1651
          %1653 = vdwg.mxu0
          %1654 = vmatprep.subr.bf16.mxu0 %v1397
          %1655 = vmatpush1.bf16.msra.mxu0 %v1396
          %1656 = vmatprep.subr.bf16.mxu0 %v1409
          %1657 = vmatpush1.bf16.msra.mxu0 %v1408
          %1658 = vmatprep.subr.bf16.mxu0 0
          %1659 = vmatpush1.bf16.msra.mxu0 0
          %1660 = vmatprep.subr.bf16.mxu0 0
          %1661 = vmatpush1.bf16.msra.mxu0 0
          %1662 = vmatprep.subr.bf16.mxu0 0
          %1663 = vmatpush1.bf16.msra.mxu0 0
          %1664 = vmatprep.subr.bf16.mxu0 0
          %1665 = vmatpush1.bf16.msra.mxu0 0
          %1666 = vmatprep.subr.bf16.mxu0 0
          %1667 = vmatpush1.bf16.msra.mxu0 0
          %1668 = vmatprep.subr.bf16.mxu0 0
          %1669 = vmatpush1.bf16.msra.mxu0 0
          %1670 = vmatprep.subr.bf16.mxu0 0
          %1671 = vmatpush1.bf16.msra.mxu0 0
          %1672 = vmatprep.subr.bf16.mxu0 0
          %1673 = vmatpush1.bf16.msra.mxu0 0
          %1674 = vmatprep.subr.bf16.mxu0 0
          %1675 = vmatpush1.bf16.msra.mxu0 0
          %1676 = vmatprep.subr.bf16.mxu0 0
          %1677 = vmatpush1.bf16.msra.mxu0 0
          %1678 = vmatprep.subr.bf16.mxu0 0
          %1679 = vmatpush1.bf16.msra.mxu0 0
          %1680 = vmatprep.subr.bf16.mxu0 0
          %1681 = vmatpush1.bf16.msra.mxu0 0
          %1682 = vmatprep.subr.bf16.mxu0 0
          %1683 = vmatpush1.bf16.msra.mxu0 0
          %1684 = vmatprep.subr.bf16.mxu0 0
          %1685 = vmatpush1.bf16.msra.mxu0 0
          %1686 = vmatprep.mubr.bf16.mxu0 0
          %1687 = vmatmul.mubr.bf16.gmra.mrb[0].mxu0 %v1437
          %v1688 = vpop.f32.mrb[0].mxu0
          %v1689 = vadd.f32 %v1291, %v1688
          %v1690 = vpop.f32.mrb[0].mxu0
          %v1691 = vadd.f32 %v1295, %v1690
          %v1692 = vpop.f32.mrb[0].mxu0
          %v1693 = vadd.f32 %v1291, %v1692
          %v1694 = vpop.f32.mrb[0].mxu0
          %v1695 = vadd.f32 %v1295, %v1694
          %1696 = vmatprep.mubr.bf16.mxu0 0
          %1697 = vmatmul.mubr.bf16.gmra.mrb[0].mxu0 %v1440
          %v1698 = vpop.f32.mrb[0].mxu0
          %v1699 = vadd.f32 %v1291, %v1698
          %v1700 = vpop.f32.mrb[0].mxu0
          %v1701 = vadd.f32 %v1295, %v1700
          %v1702 = vpop.f32.mrb[0].mxu0
          %v1703 = vadd.f32 %v1291, %v1702
          %v1704 = vpop.f32.mrb[0].mxu0
          %v1705 = vadd.f32 %v1295, %v1704
          %1706 = vdwg.mxu0
          %1707 = vmatprep.subr.bf16.mxu0 %v1399
          %1708 = vmatpush1.bf16.msra.mxu0 %v1398
          %1709 = vmatprep.subr.bf16.mxu0 %v1411
          %1710 = vmatpush1.bf16.msra.mxu0 %v1410
          %1711 = vmatprep.subr.bf16.mxu0 0
          %1712 = vmatpush1.bf16.msra.mxu0 0
          %1713 = vmatprep.subr.bf16.mxu0 0
          %1714 = vmatpush1.bf16.msra.mxu0 0
          %1715 = vmatprep.subr.bf16.mxu0 0
          %1716 = vmatpush1.bf16.msra.mxu0 0
          %1717 = vmatprep.subr.bf16.mxu0 0
          %1718 = vmatpush1.bf16.msra.mxu0 0
          %1719 = vmatprep.subr.bf16.mxu0 0
          %1720 = vmatpush1.bf16.msra.mxu0 0
          %1721 = vmatprep.subr.bf16.mxu0 0
          %1722 = vmatpush1.bf16.msra.mxu0 0
          %1723 = vmatprep.subr.bf16.mxu0 0
          %1724 = vmatpush1.bf16.msra.mxu0 0
          %1725 = vmatprep.subr.bf16.mxu0 0
          %1726 = vmatpush1.bf16.msra.mxu0 0
          %1727 = vmatprep.subr.bf16.mxu0 0
          %1728 = vmatpush1.bf16.msra.mxu0 0
          %1729 = vmatprep.subr.bf16.mxu0 0
          %1730 = vmatpush1.bf16.msra.mxu0 0
          %1731 = vmatprep.subr.bf16.mxu0 0
          %1732 = vmatpush1.bf16.msra.mxu0 0
          %1733 = vmatprep.subr.bf16.mxu0 0
          %1734 = vmatpush1.bf16.msra.mxu0 0
          %1735 = vmatprep.subr.bf16.mxu0 0
          %1736 = vmatpush1.bf16.msra.mxu0 0
          %1737 = vmatprep.subr.bf16.mxu0 0
          %1738 = vmatpush1.bf16.msra.mxu0 0
          %1739 = vmatprep.mubr.bf16.mxu0 0
          %1740 = vmatmul.mubr.bf16.gmra.mrb[0].mxu0 %v1437
          %v1741 = vpop.f32.mrb[0].mxu0
          %v1742 = vadd.f32 %v1299, %v1741
          %v1743 = vpop.f32.mrb[0].mxu0
          %v1744 = vadd.f32 %v1303, %v1743
          %v1745 = vpop.f32.mrb[0].mxu0
          %v1746 = vadd.f32 %v1299, %v1745
          %v1747 = vpop.f32.mrb[0].mxu0
          %v1748 = vadd.f32 %v1303, %v1747
          %1749 = vmatprep.mubr.bf16.mxu0 0
          %1750 = vmatmul.mubr.bf16.gmra.mrb[0].mxu0 %v1440
          %v1751 = vpop.f32.mrb[0].mxu0
          %v1752 = vadd.f32 %v1299, %v1751
          %v1753 = vpop.f32.mrb[0].mxu0
          %v1754 = vadd.f32 %v1303, %v1753
          %v1755 = vpop.f32.mrb[0].mxu0
          %v1756 = vadd.f32 %v1299, %v1755
          %v1757 = vpop.f32.mrb[0].mxu0
          %v1758 = vadd.f32 %v1303, %v1757
          %1759 = vdwg.mxu0
          %v1760 = vmul.f32 %v1477, 0.35355338
          %v1761 = vmul.f32 %v1481, 0.35355338
          %v1762 = vpack.c.bf16 %v1761, %v1760
          %v1763 = vpack.c.bf16 %v1587, %v1583
          %v1764 = vpack.c.bf16 %v1693, %v1689
          %1765 = vmatprep.subr.bf16.mxu0 0
          %1766 = vmatpush1.bf16.xpose.msra.mxu0 %v1763
          %1767 = vmatprep.subr.bf16.mxu0 0
          %1768 = vmatpush1.bf16.xpose.msra.mxu0 0
          %1769 = vmatprep.subr.bf16.mxu0 0
          %1770 = vmatpush1.bf16.xpose.msra.mxu0 0
          %1771 = vmatprep.subr.bf16.mxu0 0
          %1772 = vmatpush1.bf16.xpose.msra.mxu0 0
          %1773 = vmatprep.subr.bf16.mxu0 0
          %1774 = vmatpush1.bf16.xpose.msra.mxu0 0
          %1775 = vmatprep.subr.bf16.mxu0 0
          %1776 = vmatpush1.bf16.xpose.msra.mxu0 0
          %1777 = vmatprep.subr.bf16.mxu0 0
          %1778 = vmatpush1.bf16.xpose.msra.mxu0 0
          %1779 = vmatprep.subr.bf16.mxu0 0
          %1780 = vmatpush1.bf16.xpose.msra.mxu0 0
          %1781 = vmatprep.subr.bf16.mxu0 0
          %1782 = vmatpush1.bf16.xpose.msra.mxu0 0
          %1783 = vmatprep.subr.bf16.mxu0 0
          %1784 = vmatpush1.bf16.xpose.msra.mxu0 0
          %1785 = vmatprep.subr.bf16.mxu0 0
          %1786 = vmatpush1.bf16.xpose.msra.mxu0 0
          %1787 = vmatprep.subr.bf16.mxu0 0
          %1788 = vmatpush1.bf16.xpose.msra.mxu0 0
          %1789 = vmatprep.subr.bf16.mxu0 0
          %1790 = vmatpush1.bf16.xpose.msra.mxu0 0
          %1791 = vmatprep.subr.bf16.mxu0 0
          %1792 = vmatpush1.bf16.xpose.msra.mxu0 0
          %1793 = vmatprep.subr.bf16.mxu0 0
          %1794 = vmatpush1.bf16.xpose.msra.mxu0 0
          %1795 = vmatprep.subr.bf16.mxu0 0
          %1796 = vmatpush1.bf16.xpose.msra.mxu0 0
          %1797 = vmatprep.mubr.bf16.mxu0 0
          %1798 = vmatmul.mubr.bf16.gmra.mrb[0].mxu0 %v1762
          %v1799 = vpop.f32.mrb[0].mxu0
          %v1800 = vadd.f32 0.0, %v1799
          %v1801 = vpop.f32.mrb[0].mxu0
          %v1802 = vpop.f32.mrb[0].mxu0
          %v1803 = vadd.f32 0.0, %v1802
          %v1804 = vpop.f32.mrb[0].mxu0
          %1805 = vdwg.mxu0
          %vm1806 = vcmask 130048
          %v1807 = vsel %vm1806, %v1800, -inf
          %1808 = vmax.xlane.f32.xlu0 %v1807
          %v1809 = vpop.xlane.xlu0 %1808
          %v1810 = vsel %vm1806, %v1803, -inf
          %1811 = vmax.xlane.f32.xlu0 %v1810
          %v1812 = vpop.xlane.xlu0 %1811
          %v1813 = vsub.f32 %v1800, %v1809
          %v1814 = vsub.f32 %v1803, %v1812
          %v1815 = vmul.f32 %v1813, 1.442695
          %v1816 = vpow.pop %v1815
          %v1817 = vmul.f32 %v1814, 1.442695
          %v1818 = vpow.pop %v1817
          %v1819 = vsel %vm1806, %v1816, 0.0
          %1820 = vadd.xlane.f32.xlu0 %v1819
          %v1821 = vpop.xlane.xlu0 %1820
          %v1822 = vsel %vm1806, %v1818, 0.0
          %1823 = vadd.xlane.f32.xlu0 %v1822
          %v1824 = vpop.xlane.xlu0 %1823
          %v1825 = vrcp.pop %v1821
          %v1826 = vrcp.pop %v1824
          %v1827 = vmul.f32 %v1816, %v1825
          %v1828 = vmul.f32 %v1818, %v1826
          %v1829 = vpack.c.bf16 %v1828, %v1827
          %v1831 = vsel %vm1806, %v1829, 0
          %1833 = vmatprep.subr.bf16.mxu0 0
          %1834 = vmatpush1.bf16.msra.mxu0 %v1764
          %1835 = vmatprep.subr.bf16.mxu0 0
          %1836 = vmatpush1.bf16.msra.mxu0 0
          %1837 = vmatprep.subr.bf16.mxu0 0
          %1838 = vmatpush1.bf16.msra.mxu0 0
          %1839 = vmatprep.subr.bf16.mxu0 0
          %1840 = vmatpush1.bf16.msra.mxu0 0
          %1841 = vmatprep.subr.bf16.mxu0 0
          %1842 = vmatpush1.bf16.msra.mxu0 0
          %1843 = vmatprep.subr.bf16.mxu0 0
          %1844 = vmatpush1.bf16.msra.mxu0 0
          %1845 = vmatprep.subr.bf16.mxu0 0
          %1846 = vmatpush1.bf16.msra.mxu0 0
          %1847 = vmatprep.subr.bf16.mxu0 0
          %1848 = vmatpush1.bf16.msra.mxu0 0
          %1849 = vmatprep.subr.bf16.mxu0 0
          %1850 = vmatpush1.bf16.msra.mxu0 0
          %1851 = vmatprep.subr.bf16.mxu0 0
          %1852 = vmatpush1.bf16.msra.mxu0 0
          %1853 = vmatprep.subr.bf16.mxu0 0
          %1854 = vmatpush1.bf16.msra.mxu0 0
          %1855 = vmatprep.subr.bf16.mxu0 0
          %1856 = vmatpush1.bf16.msra.mxu0 0
          %1857 = vmatprep.subr.bf16.mxu0 0
          %1858 = vmatpush1.bf16.msra.mxu0 0
          %1859 = vmatprep.subr.bf16.mxu0 0
          %1860 = vmatpush1.bf16.msra.mxu0 0
          %1861 = vmatprep.subr.bf16.mxu0 0
          %1862 = vmatpush1.bf16.msra.mxu0 0
          %1863 = vmatprep.subr.bf16.mxu0 0
          %1864 = vmatpush1.bf16.msra.mxu0 0
          %1865 = vmatprep.mubr.bf16.mxu0 0
          %1866 = vmatmul.mubr.bf16.gmra.mrb[0].mxu0 %v1831
          %v1867 = vpop.f32.mrb[0].mxu0
          %v1868 = vadd.f32 0.0, %v1867
          %v1869 = vpop.f32.mrb[0].mxu0
          %v1870 = vpop.f32.mrb[0].mxu0
          %v1871 = vadd.f32 0.0, %v1870
          %v1872 = vpop.f32.mrb[0].mxu0
          %1873 = vdwg.mxu0
          %v1874 = vpack.c.bf16 %v1871, %v1868
          %v1875 = vld [vmem:[%s842] sm:$0xf]
          %v1876 = vld [vmem:[%s842 + $0x4] sm:$0xf]
          %v1877 = vld [vmem:[%s842 + $0x8] sm:$0xf]
          %v1878 = vld [vmem:[%s842 + $0xc] sm:$0xf]
          %v1879 = vld [vmem:[%s842 + $0x10] sm:$0xf]
          %v1880 = vld [vmem:[%s842 + $0x14] sm:$0xf]
          %v1881 = vld [vmem:[%s842 + $0x18] sm:$0xf]
          %v1882 = vld [vmem:[%s842 + $0x1c] sm:$0xf]
          %v1883 = vld [vmem:[%s842 + $0x20] sm:$0xf]
          %v1884 = vld [vmem:[%s842 + $0x24] sm:$0xf]
          %v1885 = vld [vmem:[%s842 + $0x28] sm:$0xf]
          %v1886 = vld [vmem:[%s842 + $0x2c] sm:$0xf]
          %v1887 = vld [vmem:[%s842 + $0x30] sm:$0xf]
          %v1888 = vld [vmem:[%s842 + $0x34] sm:$0xf]
          %v1889 = vld [vmem:[%s842 + $0x38] sm:$0xf]
          %v1890 = vld [vmem:[%s842 + $0x3c] sm:$0xf]
          %v1907 = vunpack.c.l.b16 %v1875
          %v1908 = vunpack.c.l.b16 %v1876
          %v1909 = vunpack.c.l.b16 %v1877
          %v1910 = vunpack.c.l.b16 %v1878
          %v1911 = vunpack.c.l.b16 %v1879
          %v1912 = vunpack.c.l.b16 %v1880
          %v1913 = vunpack.c.l.b16 %v1881
          %v1914 = vunpack.c.l.b16 %v1882
          %v1915 = vunpack.c.l.b16 %v1883
          %v1916 = vunpack.c.l.b16 %v1884
          %v1917 = vunpack.c.l.b16 %v1885
          %v1918 = vunpack.c.l.b16 %v1886
          %v1919 = vunpack.c.l.b16 %v1887
          %v1920 = vunpack.c.l.b16 %v1888
          %v1921 = vunpack.c.l.b16 %v1889
          %v1922 = vunpack.c.l.b16 %v1890
          %v1923 = vpack.c.b16 %v1908, %v1907
          %v1924 = vpack.c.b16 %v1910, %v1909
          %v1925 = vpack.c.b16 %v1912, %v1911
          %v1926 = vpack.c.b16 %v1914, %v1913
          %v1927 = vpack.c.b16 %v1916, %v1915
          %v1928 = vpack.c.b16 %v1918, %v1917
          %v1929 = vpack.c.b16 %v1920, %v1919
          %v1930 = vpack.c.b16 %v1922, %v1921
          %1939 = vmatprep.subr.bf16.mxu0 0
          %1940 = vmatpush1.bf16.msra.mxu0 %v1923
          %1941 = vmatprep.subr.bf16.mxu0 0
          %1942 = vmatpush1.bf16.msra.mxu0 %v1924
          %1943 = vmatprep.subr.bf16.mxu0 0
          %1944 = vmatpush1.bf16.msra.mxu0 %v1925
          %1945 = vmatprep.subr.bf16.mxu0 0
          %1946 = vmatpush1.bf16.msra.mxu0 %v1926
          %1947 = vmatprep.subr.bf16.mxu0 0
          %1948 = vmatpush1.bf16.msra.mxu0 %v1927
          %1949 = vmatprep.subr.bf16.mxu0 0
          %1950 = vmatpush1.bf16.msra.mxu0 %v1928
          %1951 = vmatprep.subr.bf16.mxu0 0
          %1952 = vmatpush1.bf16.msra.mxu0 %v1929
          %1953 = vmatprep.subr.bf16.mxu0 0
          %1954 = vmatpush1.bf16.msra.mxu0 %v1930
          %1955 = vmatprep.subr.bf16.mxu0 0
          %1956 = vmatpush1.bf16.msra.mxu0 0
          %1957 = vmatprep.subr.bf16.mxu0 0
          %1958 = vmatpush1.bf16.msra.mxu0 0
          %1959 = vmatprep.subr.bf16.mxu0 0
          %1960 = vmatpush1.bf16.msra.mxu0 0
          %1961 = vmatprep.subr.bf16.mxu0 0
          %1962 = vmatpush1.bf16.msra.mxu0 0
          %1963 = vmatprep.subr.bf16.mxu0 0
          %1964 = vmatpush1.bf16.msra.mxu0 0
          %1965 = vmatprep.subr.bf16.mxu0 0
          %1966 = vmatpush1.bf16.msra.mxu0 0
          %1967 = vmatprep.subr.bf16.mxu0 0
          %1968 = vmatpush1.bf16.msra.mxu0 0
          %1969 = vmatprep.subr.bf16.mxu0 0
          %1970 = vmatpush1.bf16.msra.mxu0 0
          %1971 = vmatprep.mubr.bf16.mxu0 0
          %1972 = vmatmul.mubr.bf16.gmra.mrb[0].mxu0 %v1874
          %v1973 = vpop.f32.mrb[0].mxu0
          %v1974 = vadd.f32 0.0, %v1973
          %v1975 = vpop.f32.mrb[0].mxu0
          %v1976 = vpop.f32.mrb[0].mxu0
          %v1977 = vadd.f32 0.0, %v1976
          %v1978 = vpop.f32.mrb[0].mxu0
          %1979 = vdwg.mxu0
          %v1980 = vadd.f32 %v1146, %v1974
          %v1981 = vadd.f32 %v1147, %v1977
          %v1982 = vmul.f32 %v1479, 0.35355338
          %v1983 = vmul.f32 %v1483, 0.35355338
          %v1984 = vpack.c.bf16 %v1983, %v1982
          %v1985 = vpack.c.bf16 %v1589, %v1585
          %v1986 = vpack.c.bf16 %v1695, %v1691
          %1987 = vmatprep.subr.bf16.mxu0 0
          %1988 = vmatpush1.bf16.xpose.msra.mxu0 %v1985
          %1989 = vmatprep.subr.bf16.mxu0 0
          %1990 = vmatpush1.bf16.xpose.msra.mxu0 0
          %1991 = vmatprep.subr.bf16.mxu0 0
          %1992 = vmatpush1.bf16.xpose.msra.mxu0 0
          %1993 = vmatprep.subr.bf16.mxu0 0
          %1994 = vmatpush1.bf16.xpose.msra.mxu0 0
          %1995 = vmatprep.subr.bf16.mxu0 0
          %1996 = vmatpush1.bf16.xpose.msra.mxu0 0
          %1997 = vmatprep.subr.bf16.mxu0 0
          %1998 = vmatpush1.bf16.xpose.msra.mxu0 0
          %1999 = vmatprep.subr.bf16.mxu0 0
          %2000 = vmatpush1.bf16.xpose.msra.mxu0 0
          %2001 = vmatprep.subr.bf16.mxu0 0
          %2002 = vmatpush1.bf16.xpose.msra.mxu0 0
          %2003 = vmatprep.subr.bf16.mxu0 0
          %2004 = vmatpush1.bf16.xpose.msra.mxu0 0
          %2005 = vmatprep.subr.bf16.mxu0 0
          %2006 = vmatpush1.bf16.xpose.msra.mxu0 0
          %2007 = vmatprep.subr.bf16.mxu0 0
          %2008 = vmatpush1.bf16.xpose.msra.mxu0 0
          %2009 = vmatprep.subr.bf16.mxu0 0
          %2010 = vmatpush1.bf16.xpose.msra.mxu0 0
          %2011 = vmatprep.subr.bf16.mxu0 0
          %2012 = vmatpush1.bf16.xpose.msra.mxu0 0
          %2013 = vmatprep.subr.bf16.mxu0 0
          %2014 = vmatpush1.bf16.xpose.msra.mxu0 0
          %2015 = vmatprep.subr.bf16.mxu0 0
          %2016 = vmatpush1.bf16.xpose.msra.mxu0 0
          %2017 = vmatprep.subr.bf16.mxu0 0
          %2018 = vmatpush1.bf16.xpose.msra.mxu0 0
          %2019 = vmatprep.mubr.bf16.mxu0 0
          %2020 = vmatmul.mubr.bf16.gmra.mrb[0].mxu0 %v1984
          %v2021 = vpop.f32.mrb[0].mxu0
          %v2022 = vadd.f32 0.0, %v2021
          %v2023 = vpop.f32.mrb[0].mxu0
          %v2024 = vpop.f32.mrb[0].mxu0
          %v2025 = vadd.f32 0.0, %v2024
          %v2026 = vpop.f32.mrb[0].mxu0
          %2027 = vdwg.mxu0
          %v2028 = vsel %vm1806, %v2022, -inf
          %2029 = vmax.xlane.f32.xlu0 %v2028
          %v2030 = vpop.xlane.xlu0 %2029
          %v2031 = vsel %vm1806, %v2025, -inf
          %2032 = vmax.xlane.f32.xlu0 %v2031
          %v2033 = vpop.xlane.xlu0 %2032
          %v2034 = vsub.f32 %v2022, %v2030
          %v2035 = vsub.f32 %v2025, %v2033
          %v2036 = vmul.f32 %v2034, 1.442695
          %v2037 = vpow.pop %v2036
          %v2038 = vmul.f32 %v2035, 1.442695
          %v2039 = vpow.pop %v2038
          %v2040 = vsel %vm1806, %v2037, 0.0
          %2041 = vadd.xlane.f32.xlu0 %v2040
          %v2042 = vpop.xlane.xlu0 %2041
          %v2043 = vsel %vm1806, %v2039, 0.0
          %2044 = vadd.xlane.f32.xlu0 %v2043
          %v2045 = vpop.xlane.xlu0 %2044
          %v2046 = vrcp.pop %v2042
          %v2047 = vrcp.pop %v2045
          %v2048 = vmul.f32 %v2037, %v2046
          %v2049 = vmul.f32 %v2039, %v2047
          %v2050 = vpack.c.bf16 %v2049, %v2048
          %v2052 = vsel %vm1806, %v2050, 0
          %2054 = vmatprep.subr.bf16.mxu0 0
          %2055 = vmatpush1.bf16.msra.mxu0 %v1986
          %2056 = vmatprep.subr.bf16.mxu0 0
          %2057 = vmatpush1.bf16.msra.mxu0 0
          %2058 = vmatprep.subr.bf16.mxu0 0
          %2059 = vmatpush1.bf16.msra.mxu0 0
          %2060 = vmatprep.subr.bf16.mxu0 0
          %2061 = vmatpush1.bf16.msra.mxu0 0
          %2062 = vmatprep.subr.bf16.mxu0 0
          %2063 = vmatpush1.bf16.msra.mxu0 0
          %2064 = vmatprep.subr.bf16.mxu0 0
          %2065 = vmatpush1.bf16.msra.mxu0 0
          %2066 = vmatprep.subr.bf16.mxu0 0
          %2067 = vmatpush1.bf16.msra.mxu0 0
          %2068 = vmatprep.subr.bf16.mxu0 0
          %2069 = vmatpush1.bf16.msra.mxu0 0
          %2070 = vmatprep.subr.bf16.mxu0 0
          %2071 = vmatpush1.bf16.msra.mxu0 0
          %2072 = vmatprep.subr.bf16.mxu0 0
          %2073 = vmatpush1.bf16.msra.mxu0 0
          %2074 = vmatprep.subr.bf16.mxu0 0
          %2075 = vmatpush1.bf16.msra.mxu0 0
          %2076 = vmatprep.subr.bf16.mxu0 0
          %2077 = vmatpush1.bf16.msra.mxu0 0
          %2078 = vmatprep.subr.bf16.mxu0 0
          %2079 = vmatpush1.bf16.msra.mxu0 0
          %2080 = vmatprep.subr.bf16.mxu0 0
          %2081 = vmatpush1.bf16.msra.mxu0 0
          %2082 = vmatprep.subr.bf16.mxu0 0
          %2083 = vmatpush1.bf16.msra.mxu0 0
          %2084 = vmatprep.subr.bf16.mxu0 0
          %2085 = vmatpush1.bf16.msra.mxu0 0
          %2086 = vmatprep.mubr.bf16.mxu0 0
          %2087 = vmatmul.mubr.bf16.gmra.mrb[0].mxu0 %v2052
          %v2088 = vpop.f32.mrb[0].mxu0
          %v2089 = vadd.f32 0.0, %v2088
          %v2090 = vpop.f32.mrb[0].mxu0
          %v2091 = vpop.f32.mrb[0].mxu0
          %v2092 = vadd.f32 0.0, %v2091
          %v2093 = vpop.f32.mrb[0].mxu0
          %2094 = vdwg.mxu0
          %v2095 = vpack.c.bf16 %v2092, %v2089
          %v2096 = vld [vmem:[%s842 + $0x40] sm:$0xf]
          %v2097 = vld [vmem:[%s842 + $0x44] sm:$0xf]
          %v2098 = vld [vmem:[%s842 + $0x48] sm:$0xf]
          %v2099 = vld [vmem:[%s842 + $0x4c] sm:$0xf]
          %v2100 = vld [vmem:[%s842 + $0x50] sm:$0xf]
          %v2101 = vld [vmem:[%s842 + $0x54] sm:$0xf]
          %v2102 = vld [vmem:[%s842 + $0x58] sm:$0xf]
          %v2103 = vld [vmem:[%s842 + $0x5c] sm:$0xf]
          %v2104 = vld [vmem:[%s842 + $0x60] sm:$0xf]
          %v2105 = vld [vmem:[%s842 + $0x64] sm:$0xf]
          %v2106 = vld [vmem:[%s842 + $0x68] sm:$0xf]
          %v2107 = vld [vmem:[%s842 + $0x6c] sm:$0xf]
          %v2108 = vld [vmem:[%s842 + $0x70] sm:$0xf]
          %v2109 = vld [vmem:[%s842 + $0x74] sm:$0xf]
          %v2110 = vld [vmem:[%s842 + $0x78] sm:$0xf]
          %v2111 = vld [vmem:[%s842 + $0x7c] sm:$0xf]
          %v2128 = vunpack.c.l.b16 %v2096
          %v2129 = vunpack.c.l.b16 %v2097
          %v2130 = vunpack.c.l.b16 %v2098
          %v2131 = vunpack.c.l.b16 %v2099
          %v2132 = vunpack.c.l.b16 %v2100
          %v2133 = vunpack.c.l.b16 %v2101
          %v2134 = vunpack.c.l.b16 %v2102
          %v2135 = vunpack.c.l.b16 %v2103
          %v2136 = vunpack.c.l.b16 %v2104
          %v2137 = vunpack.c.l.b16 %v2105
          %v2138 = vunpack.c.l.b16 %v2106
          %v2139 = vunpack.c.l.b16 %v2107
          %v2140 = vunpack.c.l.b16 %v2108
          %v2141 = vunpack.c.l.b16 %v2109
          %v2142 = vunpack.c.l.b16 %v2110
          %v2143 = vunpack.c.l.b16 %v2111
          %v2144 = vpack.c.b16 %v2129, %v2128
          %v2145 = vpack.c.b16 %v2131, %v2130
          %v2146 = vpack.c.b16 %v2133, %v2132
          %v2147 = vpack.c.b16 %v2135, %v2134
          %v2148 = vpack.c.b16 %v2137, %v2136
          %v2149 = vpack.c.b16 %v2139, %v2138
          %v2150 = vpack.c.b16 %v2141, %v2140
          %v2151 = vpack.c.b16 %v2143, %v2142
          %2160 = vmatprep.subr.bf16.mxu0 0
          %2161 = vmatpush1.bf16.msra.mxu0 %v2144
          %2162 = vmatprep.subr.bf16.mxu0 0
          %2163 = vmatpush1.bf16.msra.mxu0 %v2145
          %2164 = vmatprep.subr.bf16.mxu0 0
          %2165 = vmatpush1.bf16.msra.mxu0 %v2146
          %2166 = vmatprep.subr.bf16.mxu0 0
          %2167 = vmatpush1.bf16.msra.mxu0 %v2147
          %2168 = vmatprep.subr.bf16.mxu0 0
          %2169 = vmatpush1.bf16.msra.mxu0 %v2148
          %2170 = vmatprep.subr.bf16.mxu0 0
          %2171 = vmatpush1.bf16.msra.mxu0 %v2149
          %2172 = vmatprep.subr.bf16.mxu0 0
          %2173 = vmatpush1.bf16.msra.mxu0 %v2150
          %2174 = vmatprep.subr.bf16.mxu0 0
          %2175 = vmatpush1.bf16.msra.mxu0 %v2151
          %2176 = vmatprep.subr.bf16.mxu0 0
          %2177 = vmatpush1.bf16.msra.mxu0 0
          %2178 = vmatprep.subr.bf16.mxu0 0
          %2179 = vmatpush1.bf16.msra.mxu0 0
          %2180 = vmatprep.subr.bf16.mxu0 0
          %2181 = vmatpush1.bf16.msra.mxu0 0
          %2182 = vmatprep.subr.bf16.mxu0 0
          %2183 = vmatpush1.bf16.msra.mxu0 0
          %2184 = vmatprep.subr.bf16.mxu0 0
          %2185 = vmatpush1.bf16.msra.mxu0 0
          %2186 = vmatprep.subr.bf16.mxu0 0
          %2187 = vmatpush1.bf16.msra.mxu0 0
          %2188 = vmatprep.subr.bf16.mxu0 0
          %2189 = vmatpush1.bf16.msra.mxu0 0
          %2190 = vmatprep.subr.bf16.mxu0 0
          %2191 = vmatpush1.bf16.msra.mxu0 0
          %2192 = vmatprep.mubr.bf16.mxu0 0
          %2193 = vmatmul.mubr.bf16.gmra.mrb[0].mxu0 %v2095
          %v2194 = vpop.f32.mrb[0].mxu0
          %v2195 = vadd.f32 0.0, %v2194
          %v2196 = vpop.f32.mrb[0].mxu0
          %v2197 = vpop.f32.mrb[0].mxu0
          %v2198 = vadd.f32 0.0, %v2197
          %v2199 = vpop.f32.mrb[0].mxu0
          %2200 = vdwg.mxu0
          %v2201 = vadd.f32 %v1980, %v2195
          %v2202 = vadd.f32 %v1981, %v2198
          %v2203 = vmul.f32 %v1530, 0.35355338
          %v2204 = vmul.f32 %v1534, 0.35355338
          %v2205 = vpack.c.bf16 %v2204, %v2203
          %v2206 = vpack.c.bf16 %v1640, %v1636
          %v2207 = vpack.c.bf16 %v1746, %v1742
          %2208 = vmatprep.subr.bf16.mxu0 0
          %2209 = vmatpush1.bf16.xpose.msra.mxu0 %v2206
          %2210 = vmatprep.subr.bf16.mxu0 0
          %2211 = vmatpush1.bf16.xpose.msra.mxu0 0
          %2212 = vmatprep.subr.bf16.mxu0 0
          %2213 = vmatpush1.bf16.xpose.msra.mxu0 0
          %2214 = vmatprep.subr.bf16.mxu0 0
          %2215 = vmatpush1.bf16.xpose.msra.mxu0 0
          %2216 = vmatprep.subr.bf16.mxu0 0
          %2217 = vmatpush1.bf16.xpose.msra.mxu0 0
          %2218 = vmatprep.subr.bf16.mxu0 0
          %2219 = vmatpush1.bf16.xpose.msra.mxu0 0
          %2220 = vmatprep.subr.bf16.mxu0 0
          %2221 = vmatpush1.bf16.xpose.msra.mxu0 0
          %2222 = vmatprep.subr.bf16.mxu0 0
          %2223 = vmatpush1.bf16.xpose.msra.mxu0 0
          %2224 = vmatprep.subr.bf16.mxu0 0
          %2225 = vmatpush1.bf16.xpose.msra.mxu0 0
          %2226 = vmatprep.subr.bf16.mxu0 0
          %2227 = vmatpush1.bf16.xpose.msra.mxu0 0
          %2228 = vmatprep.subr.bf16.mxu0 0
          %2229 = vmatpush1.bf16.xpose.msra.mxu0 0
          %2230 = vmatprep.subr.bf16.mxu0 0
          %2231 = vmatpush1.bf16.xpose.msra.mxu0 0
          %2232 = vmatprep.subr.bf16.mxu0 0
          %2233 = vmatpush1.bf16.xpose.msra.mxu0 0
          %2234 = vmatprep.subr.bf16.mxu0 0
          %2235 = vmatpush1.bf16.xpose.msra.mxu0 0
          %2236 = vmatprep.subr.bf16.mxu0 0
          %2237 = vmatpush1.bf16.xpose.msra.mxu0 0
          %2238 = vmatprep.subr.bf16.mxu0 0
          %2239 = vmatpush1.bf16.xpose.msra.mxu0 0
          %2240 = vmatprep.mubr.bf16.mxu0 0
          %2241 = vmatmul.mubr.bf16.gmra.mrb[0].mxu0 %v2205
          %v2242 = vpop.f32.mrb[0].mxu0
          %v2243 = vadd.f32 0.0, %v2242
          %v2244 = vpop.f32.mrb[0].mxu0
          %v2245 = vpop.f32.mrb[0].mxu0
          %v2246 = vadd.f32 0.0, %v2245
          %v2247 = vpop.f32.mrb[0].mxu0
          %2248 = vdwg.mxu0
          %v2249 = vsel %vm1806, %v2243, -inf
          %2250 = vmax.xlane.f32.xlu0 %v2249
          %v2251 = vpop.xlane.xlu0 %2250
          %v2252 = vsel %vm1806, %v2246, -inf
          %2253 = vmax.xlane.f32.xlu0 %v2252
          %v2254 = vpop.xlane.xlu0 %2253
          %v2255 = vsub.f32 %v2243, %v2251
          %v2256 = vsub.f32 %v2246, %v2254
          %v2257 = vmul.f32 %v2255, 1.442695
          %v2258 = vpow.pop %v2257
          %v2259 = vmul.f32 %v2256, 1.442695
          %v2260 = vpow.pop %v2259
          %v2261 = vsel %vm1806, %v2258, 0.0
          %2262 = vadd.xlane.f32.xlu0 %v2261
          %v2263 = vpop.xlane.xlu0 %2262
          %v2264 = vsel %vm1806, %v2260, 0.0
          %2265 = vadd.xlane.f32.xlu0 %v2264
          %v2266 = vpop.xlane.xlu0 %2265
          %v2267 = vrcp.pop %v2263
          %v2268 = vrcp.pop %v2266
          %v2269 = vmul.f32 %v2258, %v2267
          %v2270 = vmul.f32 %v2260, %v2268
          %v2271 = vpack.c.bf16 %v2270, %v2269
          %v2273 = vsel %vm1806, %v2271, 0
          %2275 = vmatprep.subr.bf16.mxu0 0
          %2276 = vmatpush1.bf16.msra.mxu0 %v2207
          %2277 = vmatprep.subr.bf16.mxu0 0
          %2278 = vmatpush1.bf16.msra.mxu0 0
          %2279 = vmatprep.subr.bf16.mxu0 0
          %2280 = vmatpush1.bf16.msra.mxu0 0
          %2281 = vmatprep.subr.bf16.mxu0 0
          %2282 = vmatpush1.bf16.msra.mxu0 0
          %2283 = vmatprep.subr.bf16.mxu0 0
          %2284 = vmatpush1.bf16.msra.mxu0 0
          %2285 = vmatprep.subr.bf16.mxu0 0
          %2286 = vmatpush1.bf16.msra.mxu0 0
          %2287 = vmatprep.subr.bf16.mxu0 0
          %2288 = vmatpush1.bf16.msra.mxu0 0
          %2289 = vmatprep.subr.bf16.mxu0 0
          %2290 = vmatpush1.bf16.msra.mxu0 0
          %2291 = vmatprep.subr.bf16.mxu0 0
          %2292 = vmatpush1.bf16.msra.mxu0 0
          %2293 = vmatprep.subr.bf16.mxu0 0
          %2294 = vmatpush1.bf16.msra.mxu0 0
          %2295 = vmatprep.subr.bf16.mxu0 0
          %2296 = vmatpush1.bf16.msra.mxu0 0
          %2297 = vmatprep.subr.bf16.mxu0 0
          %2298 = vmatpush1.bf16.msra.mxu0 0
          %2299 = vmatprep.subr.bf16.mxu0 0
          %2300 = vmatpush1.bf16.msra.mxu0 0
          %2301 = vmatprep.subr.bf16.mxu0 0
          %2302 = vmatpush1.bf16.msra.mxu0 0
          %2303 = vmatprep.subr.bf16.mxu0 0
          %2304 = vmatpush1.bf16.msra.mxu0 0
          %2305 = vmatprep.subr.bf16.mxu0 0
          %2306 = vmatpush1.bf16.msra.mxu0 0
          %2307 = vmatprep.mubr.bf16.mxu0 0
          %2308 = vmatmul.mubr.bf16.gmra.mrb[0].mxu0 %v2273
          %v2309 = vpop.f32.mrb[0].mxu0
          %v2310 = vadd.f32 0.0, %v2309
          %v2311 = vpop.f32.mrb[0].mxu0
          %v2312 = vpop.f32.mrb[0].mxu0
          %v2313 = vadd.f32 0.0, %v2312
          %v2314 = vpop.f32.mrb[0].mxu0
          %2315 = vdwg.mxu0
          %v2316 = vpack.c.bf16 %v2313, %v2310
          %v2317 = vld [vmem:[%s842 + $0x80] sm:$0xf]
          %v2318 = vld [vmem:[%s842 + $0x84] sm:$0xf]
          %v2319 = vld [vmem:[%s842 + $0x88] sm:$0xf]
          %v2320 = vld [vmem:[%s842 + $0x8c] sm:$0xf]
          %v2321 = vld [vmem:[%s842 + $0x90] sm:$0xf]
          %v2322 = vld [vmem:[%s842 + $0x94] sm:$0xf]
          %v2323 = vld [vmem:[%s842 + $0x98] sm:$0xf]
          %v2324 = vld [vmem:[%s842 + $0x9c] sm:$0xf]
          %v2325 = vld [vmem:[%s842 + $0xa0] sm:$0xf]
          %v2326 = vld [vmem:[%s842 + $0xa4] sm:$0xf]
          %v2327 = vld [vmem:[%s842 + $0xa8] sm:$0xf]
          %v2328 = vld [vmem:[%s842 + $0xac] sm:$0xf]
          %v2329 = vld [vmem:[%s842 + $0xb0] sm:$0xf]
          %v2330 = vld [vmem:[%s842 + $0xb4] sm:$0xf]
          %v2331 = vld [vmem:[%s842 + $0xb8] sm:$0xf]
          %v2332 = vld [vmem:[%s842 + $0xbc] sm:$0xf]
          %v2349 = vunpack.c.l.b16 %v2317
          %v2350 = vunpack.c.l.b16 %v2318
          %v2351 = vunpack.c.l.b16 %v2319
          %v2352 = vunpack.c.l.b16 %v2320
          %v2353 = vunpack.c.l.b16 %v2321
          %v2354 = vunpack.c.l.b16 %v2322
          %v2355 = vunpack.c.l.b16 %v2323
          %v2356 = vunpack.c.l.b16 %v2324
          %v2357 = vunpack.c.l.b16 %v2325
          %v2358 = vunpack.c.l.b16 %v2326
          %v2359 = vunpack.c.l.b16 %v2327
          %v2360 = vunpack.c.l.b16 %v2328
          %v2361 = vunpack.c.l.b16 %v2329
          %v2362 = vunpack.c.l.b16 %v2330
          %v2363 = vunpack.c.l.b16 %v2331
          %v2364 = vunpack.c.l.b16 %v2332
          %v2365 = vpack.c.b16 %v2350, %v2349
          %v2366 = vpack.c.b16 %v2352, %v2351
          %v2367 = vpack.c.b16 %v2354, %v2353
          %v2368 = vpack.c.b16 %v2356, %v2355
          %v2369 = vpack.c.b16 %v2358, %v2357
          %v2370 = vpack.c.b16 %v2360, %v2359
          %v2371 = vpack.c.b16 %v2362, %v2361
          %v2372 = vpack.c.b16 %v2364, %v2363
          %2381 = vmatprep.subr.bf16.mxu0 0
          %2382 = vmatpush1.bf16.msra.mxu0 %v2365
          %2383 = vmatprep.subr.bf16.mxu0 0
          %2384 = vmatpush1.bf16.msra.mxu0 %v2366
          %2385 = vmatprep.subr.bf16.mxu0 0
          %2386 = vmatpush1.bf16.msra.mxu0 %v2367
          %2387 = vmatprep.subr.bf16.mxu0 0
          %2388 = vmatpush1.bf16.msra.mxu0 %v2368
          %2389 = vmatprep.subr.bf16.mxu0 0
          %2390 = vmatpush1.bf16.msra.mxu0 %v2369
          %2391 = vmatprep.subr.bf16.mxu0 0
          %2392 = vmatpush1.bf16.msra.mxu0 %v2370
          %2393 = vmatprep.subr.bf16.mxu0 0
          %2394 = vmatpush1.bf16.msra.mxu0 %v2371
          %2395 = vmatprep.subr.bf16.mxu0 0
          %2396 = vmatpush1.bf16.msra.mxu0 %v2372
          %2397 = vmatprep.subr.bf16.mxu0 0
          %2398 = vmatpush1.bf16.msra.mxu0 0
          %2399 = vmatprep.subr.bf16.mxu0 0
          %2400 = vmatpush1.bf16.msra.mxu0 0
          %2401 = vmatprep.subr.bf16.mxu0 0
          %2402 = vmatpush1.bf16.msra.mxu0 0
          %2403 = vmatprep.subr.bf16.mxu0 0
          %2404 = vmatpush1.bf16.msra.mxu0 0
          %2405 = vmatprep.subr.bf16.mxu0 0
          %2406 = vmatpush1.bf16.msra.mxu0 0
          %2407 = vmatprep.subr.bf16.mxu0 0
          %2408 = vmatpush1.bf16.msra.mxu0 0
          %2409 = vmatprep.subr.bf16.mxu0 0
          %2410 = vmatpush1.bf16.msra.mxu0 0
          %2411 = vmatprep.subr.bf16.mxu0 0
          %2412 = vmatpush1.bf16.msra.mxu0 0
          %2413 = vmatprep.mubr.bf16.mxu0 0
          %2414 = vmatmul.mubr.bf16.gmra.mrb[0].mxu0 %v2316
          %v2415 = vpop.f32.mrb[0].mxu0
          %v2416 = vadd.f32 0.0, %v2415
          %v2417 = vpop.f32.mrb[0].mxu0
          %v2418 = vpop.f32.mrb[0].mxu0
          %v2419 = vadd.f32 0.0, %v2418
          %v2420 = vpop.f32.mrb[0].mxu0
          %2421 = vdwg.mxu0
          %v2422 = vadd.f32 %v2201, %v2416
          %v2423 = vadd.f32 %v2202, %v2419
          %v2424 = vmul.f32 %v1532, 0.35355338
          %v2425 = vmul.f32 %v1536, 0.35355338
          %v2426 = vpack.c.bf16 %v2425, %v2424
          %v2427 = vpack.c.bf16 %v1642, %v1638
          %v2428 = vpack.c.bf16 %v1748, %v1744
          %2429 = vmatprep.subr.bf16.mxu0 0
          %2430 = vmatpush1.bf16.xpose.msra.mxu0 %v2427
          %2431 = vmatprep.subr.bf16.mxu0 0
          %2432 = vmatpush1.bf16.xpose.msra.mxu0 0
          %2433 = vmatprep.subr.bf16.mxu0 0
          %2434 = vmatpush1.bf16.xpose.msra.mxu0 0
          %2435 = vmatprep.subr.bf16.mxu0 0
          %2436 = vmatpush1.bf16.xpose.msra.mxu0 0
          %2437 = vmatprep.subr.bf16.mxu0 0
          %2438 = vmatpush1.bf16.xpose.msra.mxu0 0
          %2439 = vmatprep.subr.bf16.mxu0 0
          %2440 = vmatpush1.bf16.xpose.msra.mxu0 0
          %2441 = vmatprep.subr.bf16.mxu0 0
          %2442 = vmatpush1.bf16.xpose.msra.mxu0 0
          %2443 = vmatprep.subr.bf16.mxu0 0
          %2444 = vmatpush1.bf16.xpose.msra.mxu0 0
          %2445 = vmatprep.subr.bf16.mxu0 0
          %2446 = vmatpush1.bf16.xpose.msra.mxu0 0
          %2447 = vmatprep.subr.bf16.mxu0 0
          %2448 = vmatpush1.bf16.xpose.msra.mxu0 0
          %2449 = vmatprep.subr.bf16.mxu0 0
          %2450 = vmatpush1.bf16.xpose.msra.mxu0 0
          %2451 = vmatprep.subr.bf16.mxu0 0
          %2452 = vmatpush1.bf16.xpose.msra.mxu0 0
          %2453 = vmatprep.subr.bf16.mxu0 0
          %2454 = vmatpush1.bf16.xpose.msra.mxu0 0
          %2455 = vmatprep.subr.bf16.mxu0 0
          %2456 = vmatpush1.bf16.xpose.msra.mxu0 0
          %2457 = vmatprep.subr.bf16.mxu0 0
          %2458 = vmatpush1.bf16.xpose.msra.mxu0 0
          %2459 = vmatprep.subr.bf16.mxu0 0
          %2460 = vmatpush1.bf16.xpose.msra.mxu0 0
          %2461 = vmatprep.mubr.bf16.mxu0 0
          %2462 = vmatmul.mubr.bf16.gmra.mrb[0].mxu0 %v2426
          %v2463 = vpop.f32.mrb[0].mxu0
          %v2464 = vadd.f32 0.0, %v2463
          %v2465 = vpop.f32.mrb[0].mxu0
          %v2466 = vpop.f32.mrb[0].mxu0
          %v2467 = vadd.f32 0.0, %v2466
          %v2468 = vpop.f32.mrb[0].mxu0
          %2469 = vdwg.mxu0
          %v2470 = vsel %vm1806, %v2464, -inf
          %2471 = vmax.xlane.f32.xlu0 %v2470
          %v2472 = vpop.xlane.xlu0 %2471
          %v2473 = vsel %vm1806, %v2467, -inf
          %2474 = vmax.xlane.f32.xlu0 %v2473
          %v2475 = vpop.xlane.xlu0 %2474
          %v2476 = vsub.f32 %v2464, %v2472
          %v2477 = vsub.f32 %v2467, %v2475
          %v2478 = vmul.f32 %v2476, 1.442695
          %v2479 = vpow.pop %v2478
          %v2480 = vmul.f32 %v2477, 1.442695
          %v2481 = vpow.pop %v2480
          %v2482 = vsel %vm1806, %v2479, 0.0
          %2483 = vadd.xlane.f32.xlu0 %v2482
          %v2484 = vpop.xlane.xlu0 %2483
          %v2485 = vsel %vm1806, %v2481, 0.0
          %2486 = vadd.xlane.f32.xlu0 %v2485
          %v2487 = vpop.xlane.xlu0 %2486
          %v2488 = vrcp.pop %v2484
          %v2489 = vrcp.pop %v2487
          %v2490 = vmul.f32 %v2479, %v2488
          %v2491 = vmul.f32 %v2481, %v2489
          %v2492 = vpack.c.bf16 %v2491, %v2490
          %v2494 = vsel %vm1806, %v2492, 0
          %2496 = vmatprep.subr.bf16.mxu0 0
          %2497 = vmatpush1.bf16.msra.mxu0 %v2428
          %2498 = vmatprep.subr.bf16.mxu0 0
          %2499 = vmatpush1.bf16.msra.mxu0 0
          %2500 = vmatprep.subr.bf16.mxu0 0
          %2501 = vmatpush1.bf16.msra.mxu0 0
          %2502 = vmatprep.subr.bf16.mxu0 0
          %2503 = vmatpush1.bf16.msra.mxu0 0
          %2504 = vmatprep.subr.bf16.mxu0 0
          %2505 = vmatpush1.bf16.msra.mxu0 0
          %2506 = vmatprep.subr.bf16.mxu0 0
          %2507 = vmatpush1.bf16.msra.mxu0 0
          %2508 = vmatprep.subr.bf16.mxu0 0
          %2509 = vmatpush1.bf16.msra.mxu0 0
          %2510 = vmatprep.subr.bf16.mxu0 0
          %2511 = vmatpush1.bf16.msra.mxu0 0
          %2512 = vmatprep.subr.bf16.mxu0 0
          %2513 = vmatpush1.bf16.msra.mxu0 0
          %2514 = vmatprep.subr.bf16.mxu0 0
          %2515 = vmatpush1.bf16.msra.mxu0 0
          %2516 = vmatprep.subr.bf16.mxu0 0
          %2517 = vmatpush1.bf16.msra.mxu0 0
          %2518 = vmatprep.subr.bf16.mxu0 0
          %2519 = vmatpush1.bf16.msra.mxu0 0
          %2520 = vmatprep.subr.bf16.mxu0 0
          %2521 = vmatpush1.bf16.msra.mxu0 0
          %2522 = vmatprep.subr.bf16.mxu0 0
          %2523 = vmatpush1.bf16.msra.mxu0 0
          %2524 = vmatprep.subr.bf16.mxu0 0
          %2525 = vmatpush1.bf16.msra.mxu0 0
          %2526 = vmatprep.subr.bf16.mxu0 0
          %2527 = vmatpush1.bf16.msra.mxu0 0
          %2528 = vmatprep.mubr.bf16.mxu0 0
          %2529 = vmatmul.mubr.bf16.gmra.mrb[0].mxu0 %v2494
          %v2530 = vpop.f32.mrb[0].mxu0
          %v2531 = vadd.f32 0.0, %v2530
          %v2532 = vpop.f32.mrb[0].mxu0
          %v2533 = vpop.f32.mrb[0].mxu0
          %v2534 = vadd.f32 0.0, %v2533
          %v2535 = vpop.f32.mrb[0].mxu0
          %2536 = vdwg.mxu0
          %v2537 = vpack.c.bf16 %v2534, %v2531
          %v2538 = vld [vmem:[%s842 + $0xc0] sm:$0xf]
          %v2539 = vld [vmem:[%s842 + $0xc4] sm:$0xf]
          %v2540 = vld [vmem:[%s842 + $0xc8] sm:$0xf]
          %v2541 = vld [vmem:[%s842 + $0xcc] sm:$0xf]
          %v2542 = vld [vmem:[%s842 + $0xd0] sm:$0xf]
          %v2543 = vld [vmem:[%s842 + $0xd4] sm:$0xf]
          %v2544 = vld [vmem:[%s842 + $0xd8] sm:$0xf]
          %v2545 = vld [vmem:[%s842 + $0xdc] sm:$0xf]
          %v2546 = vld [vmem:[%s842 + $0xe0] sm:$0xf]
          %v2547 = vld [vmem:[%s842 + $0xe4] sm:$0xf]
          %v2548 = vld [vmem:[%s842 + $0xe8] sm:$0xf]
          %v2549 = vld [vmem:[%s842 + $0xec] sm:$0xf]
          %v2550 = vld [vmem:[%s842 + $0xf0] sm:$0xf]
          %v2551 = vld [vmem:[%s842 + $0xf4] sm:$0xf]
          %v2552 = vld [vmem:[%s842 + $0xf8] sm:$0xf]
          %v2553 = vld [vmem:[%s842 + $0xfc] sm:$0xf]
          %v2570 = vunpack.c.l.b16 %v2538
          %v2571 = vunpack.c.l.b16 %v2539
          %v2572 = vunpack.c.l.b16 %v2540
          %v2573 = vunpack.c.l.b16 %v2541
          %v2574 = vunpack.c.l.b16 %v2542
          %v2575 = vunpack.c.l.b16 %v2543
          %v2576 = vunpack.c.l.b16 %v2544
          %v2577 = vunpack.c.l.b16 %v2545
          %v2578 = vunpack.c.l.b16 %v2546
          %v2579 = vunpack.c.l.b16 %v2547
          %v2580 = vunpack.c.l.b16 %v2548
          %v2581 = vunpack.c.l.b16 %v2549
          %v2582 = vunpack.c.l.b16 %v2550
          %v2583 = vunpack.c.l.b16 %v2551
          %v2584 = vunpack.c.l.b16 %v2552
          %v2585 = vunpack.c.l.b16 %v2553
          %v2586 = vpack.c.b16 %v2571, %v2570
          %v2587 = vpack.c.b16 %v2573, %v2572
          %v2588 = vpack.c.b16 %v2575, %v2574
          %v2589 = vpack.c.b16 %v2577, %v2576
          %v2590 = vpack.c.b16 %v2579, %v2578
          %v2591 = vpack.c.b16 %v2581, %v2580
          %v2592 = vpack.c.b16 %v2583, %v2582
          %v2593 = vpack.c.b16 %v2585, %v2584
          %2602 = vmatprep.subr.bf16.mxu0 0
          %2603 = vmatpush1.bf16.msra.mxu0 %v2586
          %2604 = vmatprep.subr.bf16.mxu0 0
          %2605 = vmatpush1.bf16.msra.mxu0 %v2587
          %2606 = vmatprep.subr.bf16.mxu0 0
          %2607 = vmatpush1.bf16.msra.mxu0 %v2588
          %2608 = vmatprep.subr.bf16.mxu0 0
          %2609 = vmatpush1.bf16.msra.mxu0 %v2589
          %2610 = vmatprep.subr.bf16.mxu0 0
          %2611 = vmatpush1.bf16.msra.mxu0 %v2590
          %2612 = vmatprep.subr.bf16.mxu0 0
          %2613 = vmatpush1.bf16.msra.mxu0 %v2591
          %2614 = vmatprep.subr.bf16.mxu0 0
          %2615 = vmatpush1.bf16.msra.mxu0 %v2592
          %2616 = vmatprep.subr.bf16.mxu0 0
          %2617 = vmatpush1.bf16.msra.mxu0 %v2593
          %2618 = vmatprep.subr.bf16.mxu0 0
          %2619 = vmatpush1.bf16.msra.mxu0 0
          %2620 = vmatprep.subr.bf16.mxu0 0
          %2621 = vmatpush1.bf16.msra.mxu0 0
          %2622 = vmatprep.subr.bf16.mxu0 0
          %2623 = vmatpush1.bf16.msra.mxu0 0
          %2624 = vmatprep.subr.bf16.mxu0 0
          %2625 = vmatpush1.bf16.msra.mxu0 0
          %2626 = vmatprep.subr.bf16.mxu0 0
          %2627 = vmatpush1.bf16.msra.mxu0 0
          %2628 = vmatprep.subr.bf16.mxu0 0
          %2629 = vmatpush1.bf16.msra.mxu0 0
          %2630 = vmatprep.subr.bf16.mxu0 0
          %2631 = vmatpush1.bf16.msra.mxu0 0
          %2632 = vmatprep.subr.bf16.mxu0 0
          %2633 = vmatpush1.bf16.msra.mxu0 0
          %2634 = vmatprep.mubr.bf16.mxu0 0
          %2635 = vmatmul.mubr.bf16.gmra.mrb[0].mxu0 %v2537
          %v2636 = vpop.f32.mrb[0].mxu0
          %v2637 = vadd.f32 0.0, %v2636
          %v2638 = vpop.f32.mrb[0].mxu0
          %v2639 = vpop.f32.mrb[0].mxu0
          %v2640 = vadd.f32 0.0, %v2639
          %v2641 = vpop.f32.mrb[0].mxu0
          %2642 = vdwg.mxu0
          %v2643 = vadd.f32 %v2422, %v2637
          %v2644 = vadd.f32 %v2423, %v2640
          %v2645 = vld [vmem:[%s850] sm:$0x1]
          %v2647 = vlaneseq
          %v2648 = vshrl.u32 %v2647, 7
          %v2649 = vsub.s32 0, %v2648
          %v2650 = vrot.slane %v2645, %v2649
          %v2652 = vadd.f32 %v2643, %v2650
          %v2653 = vadd.f32 %v2644, %v2650
          %v2654 = vld [vmem:[%s858] sm:$0x1]
          %v2655 = vld [vmem:[%s866] sm:$0x1]
          %v2656 = vsel %vm1152, %v2652, 0.0
          %2657 = vadd.xlane.f32.xlu0 %v2656
          %v2658 = vpop.xlane.xlu0 %2657
          %v2659 = vsel %vm1152, %v2653, 0.0
          %2660 = vadd.xlane.f32.xlu0 %v2659
          %v2661 = vpop.xlane.xlu0 %2660
          %v2662 = vmul.f32 %v2658, %v1165
          %v2663 = vmul.f32 %v2661, %v1165
          %v2664 = vsub.f32 %v2652, %v2662
          %v2665 = vsub.f32 %v2653, %v2663
          %v2666 = vmul.f32 %v2664, %v2664
          %v2667 = vmul.f32 %v2665, %v2665
          %v2668 = vsel %vm1152, %v2666, 0.0
          %2669 = vadd.xlane.f32.xlu0 %v2668
          %v2670 = vpop.xlane.xlu0 %2669
          %v2671 = vsel %vm1152, %v2667, 0.0
          %2672 = vadd.xlane.f32.xlu0 %v2671
          %v2673 = vpop.xlane.xlu0 %2672
          %v2674 = vmul.f32 %v2670, %v1165
          %v2675 = vmul.f32 %v2673, %v1165
          %v2676 = vadd.f32 %v2674, 1e-06
          %v2677 = vadd.f32 %v2675, 1e-06
          %v2678 = vrsqrt.pop %v2676
          %v2679 = vrsqrt.pop %v2677
          %v2680 = vmul.f32 %v2664, %v2678
          %v2681 = vmul.f32 %v2665, %v2679
          %v2683 = vlaneseq
          %v2684 = vshrl.u32 %v2683, 7
          %v2685 = vsub.s32 0, %v2684
          %v2686 = vrot.slane %v2654, %v2685
          %v2688 = vmul.f32 %v2680, %v2686
          %v2689 = vmul.f32 %v2681, %v2686
          %v2691 = vlaneseq
          %v2692 = vshrl.u32 %v2691, 7
          %v2693 = vsub.s32 0, %v2692
          %v2694 = vrot.slane %v2655, %v2693
          %v2696 = vadd.f32 %v2688, %v2694
          %v2697 = vadd.f32 %v2689, %v2694
          %v2698 = vpack.c.bf16 %v2697, %v2696
          %2699 = vst.msk [vmem:[#allocation2] sm:$0xff] %vm1152, %v2698
          %v2700 = vld [vmem:[%s901] sm:$0x1]
          %v2702 = vlaneseq
          %v2703 = vshrl.u32 %v2702, 7
          %v2704 = vsub.s32 0, %v2703
          %v2705 = vrot.slane %v2700, %v2704
          %v2707 = vadd.f32 %v2652, %v2705
          %v2708 = vadd.f32 %v2653, %v2705
          %2709 = vst.msk [vmem:[#allocation23] sm:$0xff] %vm1152, %v2707
          %2710 = vst.msk [vmem:[#allocation23 + $0x8] sm:$0xff] %vm1152, %v2708
          %v2711 = vmul.f32 %v1487, 0.35355338
          %v2712 = vmul.f32 %v1491, 0.35355338
          %v2713 = vpack.c.bf16 %v2712, %v2711
          %v2714 = vpack.c.bf16 %v1597, %v1593
          %v2715 = vpack.c.bf16 %v1703, %v1699
          %2716 = vmatprep.subr.bf16.mxu0 0
          %2717 = vmatpush1.bf16.xpose.msra.mxu0 %v2714
          %2718 = vmatprep.subr.bf16.mxu0 0
          %2719 = vmatpush1.bf16.xpose.msra.mxu0 0
          %2720 = vmatprep.subr.bf16.mxu0 0
          %2721 = vmatpush1.bf16.xpose.msra.mxu0 0
          %2722 = vmatprep.subr.bf16.mxu0 0
          %2723 = vmatpush1.bf16.xpose.msra.mxu0 0
          %2724 = vmatprep.subr.bf16.mxu0 0
          %2725 = vmatpush1.bf16.xpose.msra.mxu0 0
          %2726 = vmatprep.subr.bf16.mxu0 0
          %2727 = vmatpush1.bf16.xpose.msra.mxu0 0
          %2728 = vmatprep.subr.bf16.mxu0 0
          %2729 = vmatpush1.bf16.xpose.msra.mxu0 0
          %2730 = vmatprep.subr.bf16.mxu0 0
          %2731 = vmatpush1.bf16.xpose.msra.mxu0 0
          %2732 = vmatprep.subr.bf16.mxu0 0
          %2733 = vmatpush1.bf16.xpose.msra.mxu0 0
          %2734 = vmatprep.subr.bf16.mxu0 0
          %2735 = vmatpush1.bf16.xpose.msra.mxu0 0
          %2736 = vmatprep.subr.bf16.mxu0 0
          %2737 = vmatpush1.bf16.xpose.msra.mxu0 0
          %2738 = vmatprep.subr.bf16.mxu0 0
          %2739 = vmatpush1.bf16.xpose.msra.mxu0 0
          %2740 = vmatprep.subr.bf16.mxu0 0
          %2741 = vmatpush1.bf16.xpose.msra.mxu0 0
          %2742 = vmatprep.subr.bf16.mxu0 0
          %2743 = vmatpush1.bf16.xpose.msra.mxu0 0
          %2744 = vmatprep.subr.bf16.mxu0 0
          %2745 = vmatpush1.bf16.xpose.msra.mxu0 0
          %2746 = vmatprep.subr.bf16.mxu0 0
          %2747 = vmatpush1.bf16.xpose.msra.mxu0 0
          %2748 = vmatprep.mubr.bf16.mxu0 0
          %2749 = vmatmul.mubr.bf16.gmra.mrb[0].mxu0 %v2713
          %v2750 = vpop.f32.mrb[0].mxu0
          %v2751 = vadd.f32 0.0, %v2750
          %v2752 = vpop.f32.mrb[0].mxu0
          %v2753 = vpop.f32.mrb[0].mxu0
          %v2754 = vadd.f32 0.0, %v2753
          %v2755 = vpop.f32.mrb[0].mxu0
          %2756 = vdwg.mxu0
          %v2757 = vsel %vm1806, %v2751, -inf
          %2758 = vmax.xlane.f32.xlu0 %v2757
          %v2759 = vpop.xlane.xlu0 %2758
          %v2760 = vsel %vm1806, %v2754, -inf
          %2761 = vmax.xlane.f32.xlu0 %v2760
          %v2762 = vpop.xlane.xlu0 %2761
          %v2763 = vsub.f32 %v2751, %v2759
          %v2764 = vsub.f32 %v2754, %v2762
          %v2765 = vmul.f32 %v2763, 1.442695
          %v2766 = vpow.pop %v2765
          %v2767 = vmul.f32 %v2764, 1.442695
          %v2768 = vpow.pop %v2767
          %v2769 = vsel %vm1806, %v2766, 0.0
          %2770 = vadd.xlane.f32.xlu0 %v2769
          %v2771 = vpop.xlane.xlu0 %2770
          %v2772 = vsel %vm1806, %v2768, 0.0
          %2773 = vadd.xlane.f32.xlu0 %v2772
          %v2774 = vpop.xlane.xlu0 %2773
          %v2775 = vrcp.pop %v2771
          %v2776 = vrcp.pop %v2774
          %v2777 = vmul.f32 %v2766, %v2775
          %v2778 = vmul.f32 %v2768, %v2776
          %v2779 = vpack.c.bf16 %v2778, %v2777
          %v2781 = vsel %vm1806, %v2779, 0
          %2783 = vmatprep.subr.bf16.mxu0 0
          %2784 = vmatpush1.bf16.msra.mxu0 %v2715
          %2785 = vmatprep.subr.bf16.mxu0 0
          %2786 = vmatpush1.bf16.msra.mxu0 0
          %2787 = vmatprep.subr.bf16.mxu0 0
          %2788 = vmatpush1.bf16.msra.mxu0 0
          %2789 = vmatprep.subr.bf16.mxu0 0
          %2790 = vmatpush1.bf16.msra.mxu0 0
          %2791 = vmatprep.subr.bf16.mxu0 0
          %2792 = vmatpush1.bf16.msra.mxu0 0
          %2793 = vmatprep.subr.bf16.mxu0 0
          %2794 = vmatpush1.bf16.msra.mxu0 0
          %2795 = vmatprep.subr.bf16.mxu0 0
          %2796 = vmatpush1.bf16.msra.mxu0 0
          %2797 = vmatprep.subr.bf16.mxu0 0
          %2798 = vmatpush1.bf16.msra.mxu0 0
          %2799 = vmatprep.subr.bf16.mxu0 0
          %2800 = vmatpush1.bf16.msra.mxu0 0
          %2801 = vmatprep.subr.bf16.mxu0 0
          %2802 = vmatpush1.bf16.msra.mxu0 0
          %2803 = vmatprep.subr.bf16.mxu0 0
          %2804 = vmatpush1.bf16.msra.mxu0 0
          %2805 = vmatprep.subr.bf16.mxu0 0
          %2806 = vmatpush1.bf16.msra.mxu0 0
          %2807 = vmatprep.subr.bf16.mxu0 0
          %2808 = vmatpush1.bf16.msra.mxu0 0
          %2809 = vmatprep.subr.bf16.mxu0 0
          %2810 = vmatpush1.bf16.msra.mxu0 0
          %2811 = vmatprep.subr.bf16.mxu0 0
          %2812 = vmatpush1.bf16.msra.mxu0 0
          %2813 = vmatprep.subr.bf16.mxu0 0
          %2814 = vmatpush1.bf16.msra.mxu0 0
          %2815 = vmatprep.mubr.bf16.mxu0 0
          %2816 = vmatmul.mubr.bf16.gmra.mrb[0].mxu0 %v2781
          %v2817 = vpop.f32.mrb[0].mxu0
          %v2818 = vadd.f32 0.0, %v2817
          %v2819 = vpop.f32.mrb[0].mxu0
          %v2820 = vpop.f32.mrb[0].mxu0
          %v2821 = vadd.f32 0.0, %v2820
          %v2822 = vpop.f32.mrb[0].mxu0
          %2823 = vdwg.mxu0
          %v2824 = vpack.c.bf16 %v2821, %v2818
          %v2825 = vld [vmem:[%s842] sm:$0xf]
          %v2826 = vld [vmem:[%s842 + $0x4] sm:$0xf]
          %v2827 = vld [vmem:[%s842 + $0x8] sm:$0xf]
          %v2828 = vld [vmem:[%s842 + $0xc] sm:$0xf]
          %v2829 = vld [vmem:[%s842 + $0x10] sm:$0xf]
          %v2830 = vld [vmem:[%s842 + $0x14] sm:$0xf]
          %v2831 = vld [vmem:[%s842 + $0x18] sm:$0xf]
          %v2832 = vld [vmem:[%s842 + $0x1c] sm:$0xf]
          %v2833 = vld [vmem:[%s842 + $0x20] sm:$0xf]
          %v2834 = vld [vmem:[%s842 + $0x24] sm:$0xf]
          %v2835 = vld [vmem:[%s842 + $0x28] sm:$0xf]
          %v2836 = vld [vmem:[%s842 + $0x2c] sm:$0xf]
          %v2837 = vld [vmem:[%s842 + $0x30] sm:$0xf]
          %v2838 = vld [vmem:[%s842 + $0x34] sm:$0xf]
          %v2839 = vld [vmem:[%s842 + $0x38] sm:$0xf]
          %v2840 = vld [vmem:[%s842 + $0x3c] sm:$0xf]
          %v2857 = vunpack.c.l.b16 %v2825
          %v2858 = vunpack.c.l.b16 %v2826
          %v2859 = vunpack.c.l.b16 %v2827
          %v2860 = vunpack.c.l.b16 %v2828
          %v2861 = vunpack.c.l.b16 %v2829
          %v2862 = vunpack.c.l.b16 %v2830
          %v2863 = vunpack.c.l.b16 %v2831
          %v2864 = vunpack.c.l.b16 %v2832
          %v2865 = vunpack.c.l.b16 %v2833
          %v2866 = vunpack.c.l.b16 %v2834
          %v2867 = vunpack.c.l.b16 %v2835
          %v2868 = vunpack.c.l.b16 %v2836
          %v2869 = vunpack.c.l.b16 %v2837
          %v2870 = vunpack.c.l.b16 %v2838
          %v2871 = vunpack.c.l.b16 %v2839
          %v2872 = vunpack.c.l.b16 %v2840
          %v2873 = vpack.c.b16 %v2858, %v2857
          %v2874 = vpack.c.b16 %v2860, %v2859
          %v2875 = vpack.c.b16 %v2862, %v2861
          %v2876 = vpack.c.b16 %v2864, %v2863
          %v2877 = vpack.c.b16 %v2866, %v2865
          %v2878 = vpack.c.b16 %v2868, %v2867
          %v2879 = vpack.c.b16 %v2870, %v2869
          %v2880 = vpack.c.b16 %v2872, %v2871
          %2889 = vmatprep.subr.bf16.mxu0 0
          %2890 = vmatpush1.bf16.msra.mxu0 %v2873
          %2891 = vmatprep.subr.bf16.mxu0 0
          %2892 = vmatpush1.bf16.msra.mxu0 %v2874
          %2893 = vmatprep.subr.bf16.mxu0 0
          %2894 = vmatpush1.bf16.msra.mxu0 %v2875
          %2895 = vmatprep.subr.bf16.mxu0 0
          %2896 = vmatpush1.bf16.msra.mxu0 %v2876
          %2897 = vmatprep.subr.bf16.mxu0 0
          %2898 = vmatpush1.bf16.msra.mxu0 %v2877
          %2899 = vmatprep.subr.bf16.mxu0 0
          %2900 = vmatpush1.bf16.msra.mxu0 %v2878
          %2901 = vmatprep.subr.bf16.mxu0 0
          %2902 = vmatpush1.bf16.msra.mxu0 %v2879
          %2903 = vmatprep.subr.bf16.mxu0 0
          %2904 = vmatpush1.bf16.msra.mxu0 %v2880
          %2905 = vmatprep.subr.bf16.mxu0 0
          %2906 = vmatpush1.bf16.msra.mxu0 0
          %2907 = vmatprep.subr.bf16.mxu0 0
          %2908 = vmatpush1.bf16.msra.mxu0 0
          %2909 = vmatprep.subr.bf16.mxu0 0
          %2910 = vmatpush1.bf16.msra.mxu0 0
          %2911 = vmatprep.subr.bf16.mxu0 0
          %2912 = vmatpush1.bf16.msra.mxu0 0
          %2913 = vmatprep.subr.bf16.mxu0 0
          %2914 = vmatpush1.bf16.msra.mxu0 0
          %2915 = vmatprep.subr.bf16.mxu0 0
          %2916 = vmatpush1.bf16.msra.mxu0 0
          %2917 = vmatprep.subr.bf16.mxu0 0
          %2918 = vmatpush1.bf16.msra.mxu0 0
          %2919 = vmatprep.subr.bf16.mxu0 0
          %2920 = vmatpush1.bf16.msra.mxu0 0
          %2921 = vmatprep.mubr.bf16.mxu0 0
          %2922 = vmatmul.mubr.bf16.gmra.mrb[0].mxu0 %v2824
          %v2923 = vpop.f32.mrb[0].mxu0
          %v2924 = vadd.f32 0.0, %v2923
          %v2925 = vpop.f32.mrb[0].mxu0
          %v2926 = vpop.f32.mrb[0].mxu0
          %v2927 = vadd.f32 0.0, %v2926
          %v2928 = vpop.f32.mrb[0].mxu0
          %2929 = vdwg.mxu0
          %v2930 = vadd.f32 %v1148, %v2924
          %v2931 = vadd.f32 %v1149, %v2927
          %v2932 = vmul.f32 %v1489, 0.35355338
          %v2933 = vmul.f32 %v1493, 0.35355338
          %v2934 = vpack.c.bf16 %v2933, %v2932
          %v2935 = vpack.c.bf16 %v1599, %v1595
          %v2936 = vpack.c.bf16 %v1705, %v1701
          %2937 = vmatprep.subr.bf16.mxu0 0
          %2938 = vmatpush1.bf16.xpose.msra.mxu0 %v2935
          %2939 = vmatprep.subr.bf16.mxu0 0
          %2940 = vmatpush1.bf16.xpose.msra.mxu0 0
          %2941 = vmatprep.subr.bf16.mxu0 0
          %2942 = vmatpush1.bf16.xpose.msra.mxu0 0
          %2943 = vmatprep.subr.bf16.mxu0 0
          %2944 = vmatpush1.bf16.xpose.msra.mxu0 0
          %2945 = vmatprep.subr.bf16.mxu0 0
          %2946 = vmatpush1.bf16.xpose.msra.mxu0 0
          %2947 = vmatprep.subr.bf16.mxu0 0
          %2948 = vmatpush1.bf16.xpose.msra.mxu0 0
          %2949 = vmatprep.subr.bf16.mxu0 0
          %2950 = vmatpush1.bf16.xpose.msra.mxu0 0
          %2951 = vmatprep.subr.bf16.mxu0 0
          %2952 = vmatpush1.bf16.xpose.msra.mxu0 0
          %2953 = vmatprep.subr.bf16.mxu0 0
          %2954 = vmatpush1.bf16.xpose.msra.mxu0 0
          %2955 = vmatprep.subr.bf16.mxu0 0
          %2956 = vmatpush1.bf16.xpose.msra.mxu0 0
          %2957 = vmatprep.subr.bf16.mxu0 0
          %2958 = vmatpush1.bf16.xpose.msra.mxu0 0
          %2959 = vmatprep.subr.bf16.mxu0 0
          %2960 = vmatpush1.bf16.xpose.msra.mxu0 0
          %2961 = vmatprep.subr.bf16.mxu0 0
          %2962 = vmatpush1.bf16.xpose.msra.mxu0 0
          %2963 = vmatprep.subr.bf16.mxu0 0
          %2964 = vmatpush1.bf16.xpose.msra.mxu0 0
          %2965 = vmatprep.subr.bf16.mxu0 0
          %2966 = vmatpush1.bf16.xpose.msra.mxu0 0
          %2967 = vmatprep.subr.bf16.mxu0 0
          %2968 = vmatpush1.bf16.xpose.msra.mxu0 0
          %2969 = vmatprep.mubr.bf16.mxu0 0
          %2970 = vmatmul.mubr.bf16.gmra.mrb[0].mxu0 %v2934
          %v2971 = vpop.f32.mrb[0].mxu0
          %v2972 = vadd.f32 0.0, %v2971
          %v2973 = vpop.f32.mrb[0].mxu0
          %v2974 = vpop.f32.mrb[0].mxu0
          %v2975 = vadd.f32 0.0, %v2974
          %v2976 = vpop.f32.mrb[0].mxu0
          %2977 = vdwg.mxu0
          %v2978 = vsel %vm1806, %v2972, -inf
          %2979 = vmax.xlane.f32.xlu0 %v2978
          %v2980 = vpop.xlane.xlu0 %2979
          %v2981 = vsel %vm1806, %v2975, -inf
          %2982 = vmax.xlane.f32.xlu0 %v2981
          %v2983 = vpop.xlane.xlu0 %2982
          %v2984 = vsub.f32 %v2972, %v2980
          %v2985 = vsub.f32 %v2975, %v2983
          %v2986 = vmul.f32 %v2984, 1.442695
          %v2987 = vpow.pop %v2986
          %v2988 = vmul.f32 %v2985, 1.442695
          %v2989 = vpow.pop %v2988
          %v2990 = vsel %vm1806, %v2987, 0.0
          %2991 = vadd.xlane.f32.xlu0 %v2990
          %v2992 = vpop.xlane.xlu0 %2991
          %v2993 = vsel %vm1806, %v2989, 0.0
          %2994 = vadd.xlane.f32.xlu0 %v2993
          %v2995 = vpop.xlane.xlu0 %2994
          %v2996 = vrcp.pop %v2992
          %v2997 = vrcp.pop %v2995
          %v2998 = vmul.f32 %v2987, %v2996
          %v2999 = vmul.f32 %v2989, %v2997
          %v3000 = vpack.c.bf16 %v2999, %v2998
          %v3002 = vsel %vm1806, %v3000, 0
          %3004 = vmatprep.subr.bf16.mxu0 0
          %3005 = vmatpush1.bf16.msra.mxu0 %v2936
          %3006 = vmatprep.subr.bf16.mxu0 0
          %3007 = vmatpush1.bf16.msra.mxu0 0
          %3008 = vmatprep.subr.bf16.mxu0 0
          %3009 = vmatpush1.bf16.msra.mxu0 0
          %3010 = vmatprep.subr.bf16.mxu0 0
          %3011 = vmatpush1.bf16.msra.mxu0 0
          %3012 = vmatprep.subr.bf16.mxu0 0
          %3013 = vmatpush1.bf16.msra.mxu0 0
          %3014 = vmatprep.subr.bf16.mxu0 0
          %3015 = vmatpush1.bf16.msra.mxu0 0
          %3016 = vmatprep.subr.bf16.mxu0 0
          %3017 = vmatpush1.bf16.msra.mxu0 0
          %3018 = vmatprep.subr.bf16.mxu0 0
          %3019 = vmatpush1.bf16.msra.mxu0 0
          %3020 = vmatprep.subr.bf16.mxu0 0
          %3021 = vmatpush1.bf16.msra.mxu0 0
          %3022 = vmatprep.subr.bf16.mxu0 0
          %3023 = vmatpush1.bf16.msra.mxu0 0
          %3024 = vmatprep.subr.bf16.mxu0 0
          %3025 = vmatpush1.bf16.msra.mxu0 0
          %3026 = vmatprep.subr.bf16.mxu0 0
          %3027 = vmatpush1.bf16.msra.mxu0 0
          %3028 = vmatprep.subr.bf16.mxu0 0
          %3029 = vmatpush1.bf16.msra.mxu0 0
          %3030 = vmatprep.subr.bf16.mxu0 0
          %3031 = vmatpush1.bf16.msra.mxu0 0
          %3032 = vmatprep.subr.bf16.mxu0 0
          %3033 = vmatpush1.bf16.msra.mxu0 0
          %3034 = vmatprep.subr.bf16.mxu0 0
          %3035 = vmatpush1.bf16.msra.mxu0 0
          %3036 = vmatprep.mubr.bf16.mxu0 0
          %3037 = vmatmul.mubr.bf16.gmra.mrb[0].mxu0 %v3002
          %v3038 = vpop.f32.mrb[0].mxu0
          %v3039 = vadd.f32 0.0, %v3038
          %v3040 = vpop.f32.mrb[0].mxu0
          %v3041 = vpop.f32.mrb[0].mxu0
          %v3042 = vadd.f32 0.0, %v3041
          %v3043 = vpop.f32.mrb[0].mxu0
          %3044 = vdwg.mxu0
          %v3045 = vpack.c.bf16 %v3042, %v3039
          %v3046 = vld [vmem:[%s842 + $0x40] sm:$0xf]
          %v3047 = vld [vmem:[%s842 + $0x44] sm:$0xf]
          %v3048 = vld [vmem:[%s842 + $0x48] sm:$0xf]
          %v3049 = vld [vmem:[%s842 + $0x4c] sm:$0xf]
          %v3050 = vld [vmem:[%s842 + $0x50] sm:$0xf]
          %v3051 = vld [vmem:[%s842 + $0x54] sm:$0xf]
          %v3052 = vld [vmem:[%s842 + $0x58] sm:$0xf]
          %v3053 = vld [vmem:[%s842 + $0x5c] sm:$0xf]
          %v3054 = vld [vmem:[%s842 + $0x60] sm:$0xf]
          %v3055 = vld [vmem:[%s842 + $0x64] sm:$0xf]
          %v3056 = vld [vmem:[%s842 + $0x68] sm:$0xf]
          %v3057 = vld [vmem:[%s842 + $0x6c] sm:$0xf]
          %v3058 = vld [vmem:[%s842 + $0x70] sm:$0xf]
          %v3059 = vld [vmem:[%s842 + $0x74] sm:$0xf]
          %v3060 = vld [vmem:[%s842 + $0x78] sm:$0xf]
          %v3061 = vld [vmem:[%s842 + $0x7c] sm:$0xf]
          %v3078 = vunpack.c.l.b16 %v3046
          %v3079 = vunpack.c.l.b16 %v3047
          %v3080 = vunpack.c.l.b16 %v3048
          %v3081 = vunpack.c.l.b16 %v3049
          %v3082 = vunpack.c.l.b16 %v3050
          %v3083 = vunpack.c.l.b16 %v3051
          %v3084 = vunpack.c.l.b16 %v3052
          %v3085 = vunpack.c.l.b16 %v3053
          %v3086 = vunpack.c.l.b16 %v3054
          %v3087 = vunpack.c.l.b16 %v3055
          %v3088 = vunpack.c.l.b16 %v3056
          %v3089 = vunpack.c.l.b16 %v3057
          %v3090 = vunpack.c.l.b16 %v3058
          %v3091 = vunpack.c.l.b16 %v3059
          %v3092 = vunpack.c.l.b16 %v3060
          %v3093 = vunpack.c.l.b16 %v3061
          %v3094 = vpack.c.b16 %v3079, %v3078
          %v3095 = vpack.c.b16 %v3081, %v3080
          %v3096 = vpack.c.b16 %v3083, %v3082
          %v3097 = vpack.c.b16 %v3085, %v3084
          %v3098 = vpack.c.b16 %v3087, %v3086
          %v3099 = vpack.c.b16 %v3089, %v3088
          %v3100 = vpack.c.b16 %v3091, %v3090
          %v3101 = vpack.c.b16 %v3093, %v3092
          %3110 = vmatprep.subr.bf16.mxu0 0
          %3111 = vmatpush1.bf16.msra.mxu0 %v3094
          %3112 = vmatprep.subr.bf16.mxu0 0
          %3113 = vmatpush1.bf16.msra.mxu0 %v3095
          %3114 = vmatprep.subr.bf16.mxu0 0
          %3115 = vmatpush1.bf16.msra.mxu0 %v3096
          %3116 = vmatprep.subr.bf16.mxu0 0
          %3117 = vmatpush1.bf16.msra.mxu0 %v3097
          %3118 = vmatprep.subr.bf16.mxu0 0
          %3119 = vmatpush1.bf16.msra.mxu0 %v3098
          %3120 = vmatprep.subr.bf16.mxu0 0
          %3121 = vmatpush1.bf16.msra.mxu0 %v3099
          %3122 = vmatprep.subr.bf16.mxu0 0
          %3123 = vmatpush1.bf16.msra.mxu0 %v3100
          %3124 = vmatprep.subr.bf16.mxu0 0
          %3125 = vmatpush1.bf16.msra.mxu0 %v3101
          %3126 = vmatprep.subr.bf16.mxu0 0
          %3127 = vmatpush1.bf16.msra.mxu0 0
          %3128 = vmatprep.subr.bf16.mxu0 0
          %3129 = vmatpush1.bf16.msra.mxu0 0
          %3130 = vmatprep.subr.bf16.mxu0 0
          %3131 = vmatpush1.bf16.msra.mxu0 0
          %3132 = vmatprep.subr.bf16.mxu0 0
          %3133 = vmatpush1.bf16.msra.mxu0 0
          %3134 = vmatprep.subr.bf16.mxu0 0
          %3135 = vmatpush1.bf16.msra.mxu0 0
          %3136 = vmatprep.subr.bf16.mxu0 0
          %3137 = vmatpush1.bf16.msra.mxu0 0
          %3138 = vmatprep.subr.bf16.mxu0 0
          %3139 = vmatpush1.bf16.msra.mxu0 0
          %3140 = vmatprep.subr.bf16.mxu0 0
          %3141 = vmatpush1.bf16.msra.mxu0 0
          %3142 = vmatprep.mubr.bf16.mxu0 0
          %3143 = vmatmul.mubr.bf16.gmra.mrb[0].mxu0 %v3045
          %v3144 = vpop.f32.mrb[0].mxu0
          %v3145 = vadd.f32 0.0, %v3144
          %v3146 = vpop.f32.mrb[0].mxu0
          %v3147 = vpop.f32.mrb[0].mxu0
          %v3148 = vadd.f32 0.0, %v3147
          %v3149 = vpop.f32.mrb[0].mxu0
          %3150 = vdwg.mxu0
          %v3151 = vadd.f32 %v2930, %v3145
          %v3152 = vadd.f32 %v2931, %v3148
          %v3153 = vmul.f32 %v1540, 0.35355338
          %v3154 = vmul.f32 %v1544, 0.35355338
          %v3155 = vpack.c.bf16 %v3154, %v3153
          %v3156 = vpack.c.bf16 %v1650, %v1646
          %v3157 = vpack.c.bf16 %v1756, %v1752
          %3158 = vmatprep.subr.bf16.mxu0 0
          %3159 = vmatpush1.bf16.xpose.msra.mxu0 %v3156
          %3160 = vmatprep.subr.bf16.mxu0 0
          %3161 = vmatpush1.bf16.xpose.msra.mxu0 0
          %3162 = vmatprep.subr.bf16.mxu0 0
          %3163 = vmatpush1.bf16.xpose.msra.mxu0 0
          %3164 = vmatprep.subr.bf16.mxu0 0
          %3165 = vmatpush1.bf16.xpose.msra.mxu0 0
          %3166 = vmatprep.subr.bf16.mxu0 0
          %3167 = vmatpush1.bf16.xpose.msra.mxu0 0
          %3168 = vmatprep.subr.bf16.mxu0 0
          %3169 = vmatpush1.bf16.xpose.msra.mxu0 0
          %3170 = vmatprep.subr.bf16.mxu0 0
          %3171 = vmatpush1.bf16.xpose.msra.mxu0 0
          %3172 = vmatprep.subr.bf16.mxu0 0
          %3173 = vmatpush1.bf16.xpose.msra.mxu0 0
          %3174 = vmatprep.subr.bf16.mxu0 0
          %3175 = vmatpush1.bf16.xpose.msra.mxu0 0
          %3176 = vmatprep.subr.bf16.mxu0 0
          %3177 = vmatpush1.bf16.xpose.msra.mxu0 0
          %3178 = vmatprep.subr.bf16.mxu0 0
          %3179 = vmatpush1.bf16.xpose.msra.mxu0 0
          %3180 = vmatprep.subr.bf16.mxu0 0
          %3181 = vmatpush1.bf16.xpose.msra.mxu0 0
          %3182 = vmatprep.subr.bf16.mxu0 0
          %3183 = vmatpush1.bf16.xpose.msra.mxu0 0
          %3184 = vmatprep.subr.bf16.mxu0 0
          %3185 = vmatpush1.bf16.xpose.msra.mxu0 0
          %3186 = vmatprep.subr.bf16.mxu0 0
          %3187 = vmatpush1.bf16.xpose.msra.mxu0 0
          %3188 = vmatprep.subr.bf16.mxu0 0
          %3189 = vmatpush1.bf16.xpose.msra.mxu0 0
          %3190 = vmatprep.mubr.bf16.mxu0 0
          %3191 = vmatmul.mubr.bf16.gmra.mrb[0].mxu0 %v3155
          %v3192 = vpop.f32.mrb[0].mxu0
          %v3193 = vadd.f32 0.0, %v3192
          %v3194 = vpop.f32.mrb[0].mxu0
          %v3195 = vpop.f32.mrb[0].mxu0
          %v3196 = vadd.f32 0.0, %v3195
          %v3197 = vpop.f32.mrb[0].mxu0
          %3198 = vdwg.mxu0
          %v3199 = vsel %vm1806, %v3193, -inf
          %3200 = vmax.xlane.f32.xlu0 %v3199
          %v3201 = vpop.xlane.xlu0 %3200
          %v3202 = vsel %vm1806, %v3196, -inf
          %3203 = vmax.xlane.f32.xlu0 %v3202
          %v3204 = vpop.xlane.xlu0 %3203
          %v3205 = vsub.f32 %v3193, %v3201
          %v3206 = vsub.f32 %v3196, %v3204
          %v3207 = vmul.f32 %v3205, 1.442695
          %v3208 = vpow.pop %v3207
          %v3209 = vmul.f32 %v3206, 1.442695
          %v3210 = vpow.pop %v3209
          %v3211 = vsel %vm1806, %v3208, 0.0
          %3212 = vadd.xlane.f32.xlu0 %v3211
          %v3213 = vpop.xlane.xlu0 %3212
          %v3214 = vsel %vm1806, %v3210, 0.0
          %3215 = vadd.xlane.f32.xlu0 %v3214
          %v3216 = vpop.xlane.xlu0 %3215
          %v3217 = vrcp.pop %v3213
          %v3218 = vrcp.pop %v3216
          %v3219 = vmul.f32 %v3208, %v3217
          %v3220 = vmul.f32 %v3210, %v3218
          %v3221 = vpack.c.bf16 %v3220, %v3219
          %v3223 = vsel %vm1806, %v3221, 0
          %3225 = vmatprep.subr.bf16.mxu0 0
          %3226 = vmatpush1.bf16.msra.mxu0 %v3157
          %3227 = vmatprep.subr.bf16.mxu0 0
          %3228 = vmatpush1.bf16.msra.mxu0 0
          %3229 = vmatprep.subr.bf16.mxu0 0
          %3230 = vmatpush1.bf16.msra.mxu0 0
          %3231 = vmatprep.subr.bf16.mxu0 0
          %3232 = vmatpush1.bf16.msra.mxu0 0
          %3233 = vmatprep.subr.bf16.mxu0 0
          %3234 = vmatpush1.bf16.msra.mxu0 0
          %3235 = vmatprep.subr.bf16.mxu0 0
          %3236 = vmatpush1.bf16.msra.mxu0 0
          %3237 = vmatprep.subr.bf16.mxu0 0
          %3238 = vmatpush1.bf16.msra.mxu0 0
          %3239 = vmatprep.subr.bf16.mxu0 0
          %3240 = vmatpush1.bf16.msra.mxu0 0
          %3241 = vmatprep.subr.bf16.mxu0 0
          %3242 = vmatpush1.bf16.msra.mxu0 0
          %3243 = vmatprep.subr.bf16.mxu0 0
          %3244 = vmatpush1.bf16.msra.mxu0 0
          %3245 = vmatprep.subr.bf16.mxu0 0
          %3246 = vmatpush1.bf16.msra.mxu0 0
          %3247 = vmatprep.subr.bf16.mxu0 0
          %3248 = vmatpush1.bf16.msra.mxu0 0
          %3249 = vmatprep.subr.bf16.mxu0 0
          %3250 = vmatpush1.bf16.msra.mxu0 0
          %3251 = vmatprep.subr.bf16.mxu0 0
          %3252 = vmatpush1.bf16.msra.mxu0 0
          %3253 = vmatprep.subr.bf16.mxu0 0
          %3254 = vmatpush1.bf16.msra.mxu0 0
          %3255 = vmatprep.subr.bf16.mxu0 0
          %3256 = vmatpush1.bf16.msra.mxu0 0
          %3257 = vmatprep.mubr.bf16.mxu0 0
          %3258 = vmatmul.mubr.bf16.gmra.mrb[0].mxu0 %v3223
          %v3259 = vpop.f32.mrb[0].mxu0
          %v3260 = vadd.f32 0.0, %v3259
          %v3261 = vpop.f32.mrb[0].mxu0
          %v3262 = vpop.f32.mrb[0].mxu0
          %v3263 = vadd.f32 0.0, %v3262
          %v3264 = vpop.f32.mrb[0].mxu0
          %3265 = vdwg.mxu0
          %v3266 = vpack.c.bf16 %v3263, %v3260
          %v3267 = vld [vmem:[%s842 + $0x80] sm:$0xf]
          %v3268 = vld [vmem:[%s842 + $0x84] sm:$0xf]
          %v3269 = vld [vmem:[%s842 + $0x88] sm:$0xf]
          %v3270 = vld [vmem:[%s842 + $0x8c] sm:$0xf]
          %v3271 = vld [vmem:[%s842 + $0x90] sm:$0xf]
          %v3272 = vld [vmem:[%s842 + $0x94] sm:$0xf]
          %v3273 = vld [vmem:[%s842 + $0x98] sm:$0xf]
          %v3274 = vld [vmem:[%s842 + $0x9c] sm:$0xf]
          %v3275 = vld [vmem:[%s842 + $0xa0] sm:$0xf]
          %v3276 = vld [vmem:[%s842 + $0xa4] sm:$0xf]
          %v3277 = vld [vmem:[%s842 + $0xa8] sm:$0xf]
          %v3278 = vld [vmem:[%s842 + $0xac] sm:$0xf]
          %v3279 = vld [vmem:[%s842 + $0xb0] sm:$0xf]
          %v3280 = vld [vmem:[%s842 + $0xb4] sm:$0xf]
          %v3281 = vld [vmem:[%s842 + $0xb8] sm:$0xf]
          %v3282 = vld [vmem:[%s842 + $0xbc] sm:$0xf]
          %v3299 = vunpack.c.l.b16 %v3267
          %v3300 = vunpack.c.l.b16 %v3268
          %v3301 = vunpack.c.l.b16 %v3269
          %v3302 = vunpack.c.l.b16 %v3270
          %v3303 = vunpack.c.l.b16 %v3271
          %v3304 = vunpack.c.l.b16 %v3272
          %v3305 = vunpack.c.l.b16 %v3273
          %v3306 = vunpack.c.l.b16 %v3274
          %v3307 = vunpack.c.l.b16 %v3275
          %v3308 = vunpack.c.l.b16 %v3276
          %v3309 = vunpack.c.l.b16 %v3277
          %v3310 = vunpack.c.l.b16 %v3278
          %v3311 = vunpack.c.l.b16 %v3279
          %v3312 = vunpack.c.l.b16 %v3280
          %v3313 = vunpack.c.l.b16 %v3281
          %v3314 = vunpack.c.l.b16 %v3282
          %v3315 = vpack.c.b16 %v3300, %v3299
          %v3316 = vpack.c.b16 %v3302, %v3301
          %v3317 = vpack.c.b16 %v3304, %v3303
          %v3318 = vpack.c.b16 %v3306, %v3305
          %v3319 = vpack.c.b16 %v3308, %v3307
          %v3320 = vpack.c.b16 %v3310, %v3309
          %v3321 = vpack.c.b16 %v3312, %v3311
          %v3322 = vpack.c.b16 %v3314, %v3313
          %3331 = vmatprep.subr.bf16.mxu0 0
          %3332 = vmatpush1.bf16.msra.mxu0 %v3315
          %3333 = vmatprep.subr.bf16.mxu0 0
          %3334 = vmatpush1.bf16.msra.mxu0 %v3316
          %3335 = vmatprep.subr.bf16.mxu0 0
          %3336 = vmatpush1.bf16.msra.mxu0 %v3317
          %3337 = vmatprep.subr.bf16.mxu0 0
          %3338 = vmatpush1.bf16.msra.mxu0 %v3318
          %3339 = vmatprep.subr.bf16.mxu0 0
          %3340 = vmatpush1.bf16.msra.mxu0 %v3319
          %3341 = vmatprep.subr.bf16.mxu0 0
          %3342 = vmatpush1.bf16.msra.mxu0 %v3320
          %3343 = vmatprep.subr.bf16.mxu0 0
          %3344 = vmatpush1.bf16.msra.mxu0 %v3321
          %3345 = vmatprep.subr.bf16.mxu0 0
          %3346 = vmatpush1.bf16.msra.mxu0 %v3322
          %3347 = vmatprep.subr.bf16.mxu0 0
          %3348 = vmatpush1.bf16.msra.mxu0 0
          %3349 = vmatprep.subr.bf16.mxu0 0
          %3350 = vmatpush1.bf16.msra.mxu0 0
          %3351 = vmatprep.subr.bf16.mxu0 0
          %3352 = vmatpush1.bf16.msra.mxu0 0
          %3353 = vmatprep.subr.bf16.mxu0 0
          %3354 = vmatpush1.bf16.msra.mxu0 0
          %3355 = vmatprep.subr.bf16.mxu0 0
          %3356 = vmatpush1.bf16.msra.mxu0 0
          %3357 = vmatprep.subr.bf16.mxu0 0
          %3358 = vmatpush1.bf16.msra.mxu0 0
          %3359 = vmatprep.subr.bf16.mxu0 0
          %3360 = vmatpush1.bf16.msra.mxu0 0
          %3361 = vmatprep.subr.bf16.mxu0 0
          %3362 = vmatpush1.bf16.msra.mxu0 0
          %3363 = vmatprep.mubr.bf16.mxu0 0
          %3364 = vmatmul.mubr.bf16.gmra.mrb[0].mxu0 %v3266
          %v3365 = vpop.f32.mrb[0].mxu0
          %v3366 = vadd.f32 0.0, %v3365
          %v3367 = vpop.f32.mrb[0].mxu0
          %v3368 = vpop.f32.mrb[0].mxu0
          %v3369 = vadd.f32 0.0, %v3368
          %v3370 = vpop.f32.mrb[0].mxu0
          %3371 = vdwg.mxu0
          %v3372 = vadd.f32 %v3151, %v3366
          %v3373 = vadd.f32 %v3152, %v3369
          %v3374 = vmul.f32 %v1542, 0.35355338
          %v3375 = vmul.f32 %v1546, 0.35355338
          %v3376 = vpack.c.bf16 %v3375, %v3374
          %v3377 = vpack.c.bf16 %v1652, %v1648
          %v3378 = vpack.c.bf16 %v1758, %v1754
          %3379 = vmatprep.subr.bf16.mxu0 0
          %3380 = vmatpush1.bf16.xpose.msra.mxu0 %v3377
          %3381 = vmatprep.subr.bf16.mxu0 0
          %3382 = vmatpush1.bf16.xpose.msra.mxu0 0
          %3383 = vmatprep.subr.bf16.mxu0 0
          %3384 = vmatpush1.bf16.xpose.msra.mxu0 0
          %3385 = vmatprep.subr.bf16.mxu0 0
          %3386 = vmatpush1.bf16.xpose.msra.mxu0 0
          %3387 = vmatprep.subr.bf16.mxu0 0
          %3388 = vmatpush1.bf16.xpose.msra.mxu0 0
          %3389 = vmatprep.subr.bf16.mxu0 0
          %3390 = vmatpush1.bf16.xpose.msra.mxu0 0
          %3391 = vmatprep.subr.bf16.mxu0 0
          %3392 = vmatpush1.bf16.xpose.msra.mxu0 0
          %3393 = vmatprep.subr.bf16.mxu0 0
          %3394 = vmatpush1.bf16.xpose.msra.mxu0 0
          %3395 = vmatprep.subr.bf16.mxu0 0
          %3396 = vmatpush1.bf16.xpose.msra.mxu0 0
          %3397 = vmatprep.subr.bf16.mxu0 0
          %3398 = vmatpush1.bf16.xpose.msra.mxu0 0
          %3399 = vmatprep.subr.bf16.mxu0 0
          %3400 = vmatpush1.bf16.xpose.msra.mxu0 0
          %3401 = vmatprep.subr.bf16.mxu0 0
          %3402 = vmatpush1.bf16.xpose.msra.mxu0 0
          %3403 = vmatprep.subr.bf16.mxu0 0
          %3404 = vmatpush1.bf16.xpose.msra.mxu0 0
          %3405 = vmatprep.subr.bf16.mxu0 0
          %3406 = vmatpush1.bf16.xpose.msra.mxu0 0
          %3407 = vmatprep.subr.bf16.mxu0 0
          %3408 = vmatpush1.bf16.xpose.msra.mxu0 0
          %3409 = vmatprep.subr.bf16.mxu0 0
          %3410 = vmatpush1.bf16.xpose.msra.mxu0 0
          %3411 = vmatprep.mubr.bf16.mxu0 0
          %3412 = vmatmul.mubr.bf16.gmra.mrb[0].mxu0 %v3376
          %v3413 = vpop.f32.mrb[0].mxu0
          %v3414 = vadd.f32 0.0, %v3413
          %v3415 = vpop.f32.mrb[0].mxu0
          %v3416 = vpop.f32.mrb[0].mxu0
          %v3417 = vadd.f32 0.0, %v3416
          %v3418 = vpop.f32.mrb[0].mxu0
          %3419 = vdwg.mxu0
          %v3420 = vsel %vm1806, %v3414, -inf
          %3421 = vmax.xlane.f32.xlu0 %v3420
          %v3422 = vpop.xlane.xlu0 %3421
          %v3423 = vsel %vm1806, %v3417, -inf
          %3424 = vmax.xlane.f32.xlu0 %v3423
          %v3425 = vpop.xlane.xlu0 %3424
          %v3426 = vsub.f32 %v3414, %v3422
          %v3427 = vsub.f32 %v3417, %v3425
          %v3428 = vmul.f32 %v3426, 1.442695
          %v3429 = vpow.pop %v3428
          %v3430 = vmul.f32 %v3427, 1.442695
          %v3431 = vpow.pop %v3430
          %v3432 = vsel %vm1806, %v3429, 0.0
          %3433 = vadd.xlane.f32.xlu0 %v3432
          %v3434 = vpop.xlane.xlu0 %3433
          %v3435 = vsel %vm1806, %v3431, 0.0
          %3436 = vadd.xlane.f32.xlu0 %v3435
          %v3437 = vpop.xlane.xlu0 %3436
          %v3438 = vrcp.pop %v3434
          %v3439 = vrcp.pop %v3437
          %v3440 = vmul.f32 %v3429, %v3438
          %v3441 = vmul.f32 %v3431, %v3439
          %v3442 = vpack.c.bf16 %v3441, %v3440
          %v3444 = vsel %vm1806, %v3442, 0
          %3446 = vmatprep.subr.bf16.mxu0 0
          %3447 = vmatpush1.bf16.msra.mxu0 %v3378
          %3448 = vmatprep.subr.bf16.mxu0 0
          %3449 = vmatpush1.bf16.msra.mxu0 0
          %3450 = vmatprep.subr.bf16.mxu0 0
          %3451 = vmatpush1.bf16.msra.mxu0 0
          %3452 = vmatprep.subr.bf16.mxu0 0
          %3453 = vmatpush1.bf16.msra.mxu0 0
          %3454 = vmatprep.subr.bf16.mxu0 0
          %3455 = vmatpush1.bf16.msra.mxu0 0
          %3456 = vmatprep.subr.bf16.mxu0 0
          %3457 = vmatpush1.bf16.msra.mxu0 0
          %3458 = vmatprep.subr.bf16.mxu0 0
          %3459 = vmatpush1.bf16.msra.mxu0 0
          %3460 = vmatprep.subr.bf16.mxu0 0
          %3461 = vmatpush1.bf16.msra.mxu0 0
          %3462 = vmatprep.subr.bf16.mxu0 0
          %3463 = vmatpush1.bf16.msra.mxu0 0
          %3464 = vmatprep.subr.bf16.mxu0 0
          %3465 = vmatpush1.bf16.msra.mxu0 0
          %3466 = vmatprep.subr.bf16.mxu0 0
          %3467 = vmatpush1.bf16.msra.mxu0 0
          %3468 = vmatprep.subr.bf16.mxu0 0
          %3469 = vmatpush1.bf16.msra.mxu0 0
          %3470 = vmatprep.subr.bf16.mxu0 0
          %3471 = vmatpush1.bf16.msra.mxu0 0
          %3472 = vmatprep.subr.bf16.mxu0 0
          %3473 = vmatpush1.bf16.msra.mxu0 0
          %3474 = vmatprep.subr.bf16.mxu0 0
          %3475 = vmatpush1.bf16.msra.mxu0 0
          %3476 = vmatprep.subr.bf16.mxu0 0
          %3477 = vmatpush1.bf16.msra.mxu0 0
          %3478 = vmatprep.mubr.bf16.mxu0 0
          %3479 = vmatmul.mubr.bf16.gmra.mrb[0].mxu0 %v3444
          %v3480 = vpop.f32.mrb[0].mxu0
          %v3481 = vadd.f32 0.0, %v3480
          %v3482 = vpop.f32.mrb[0].mxu0
          %v3483 = vpop.f32.mrb[0].mxu0
          %v3484 = vadd.f32 0.0, %v3483
          %v3485 = vpop.f32.mrb[0].mxu0
          %3486 = vdwg.mxu0
          %v3487 = vpack.c.bf16 %v3484, %v3481
          %v3488 = vld [vmem:[%s842 + $0xc0] sm:$0xf]
          %v3489 = vld [vmem:[%s842 + $0xc4] sm:$0xf]
          %v3490 = vld [vmem:[%s842 + $0xc8] sm:$0xf]
          %v3491 = vld [vmem:[%s842 + $0xcc] sm:$0xf]
          %v3492 = vld [vmem:[%s842 + $0xd0] sm:$0xf]
          %v3493 = vld [vmem:[%s842 + $0xd4] sm:$0xf]
          %v3494 = vld [vmem:[%s842 + $0xd8] sm:$0xf]
          %v3495 = vld [vmem:[%s842 + $0xdc] sm:$0xf]
          %v3496 = vld [vmem:[%s842 + $0xe0] sm:$0xf]
          %v3497 = vld [vmem:[%s842 + $0xe4] sm:$0xf]
          %v3498 = vld [vmem:[%s842 + $0xe8] sm:$0xf]
          %v3499 = vld [vmem:[%s842 + $0xec] sm:$0xf]
          %v3500 = vld [vmem:[%s842 + $0xf0] sm:$0xf]
          %v3501 = vld [vmem:[%s842 + $0xf4] sm:$0xf]
          %v3502 = vld [vmem:[%s842 + $0xf8] sm:$0xf]
          %v3503 = vld [vmem:[%s842 + $0xfc] sm:$0xf]
          %v3520 = vunpack.c.l.b16 %v3488
          %v3521 = vunpack.c.l.b16 %v3489
          %v3522 = vunpack.c.l.b16 %v3490
          %v3523 = vunpack.c.l.b16 %v3491
          %v3524 = vunpack.c.l.b16 %v3492
          %v3525 = vunpack.c.l.b16 %v3493
          %v3526 = vunpack.c.l.b16 %v3494
          %v3527 = vunpack.c.l.b16 %v3495
          %v3528 = vunpack.c.l.b16 %v3496
          %v3529 = vunpack.c.l.b16 %v3497
          %v3530 = vunpack.c.l.b16 %v3498
          %v3531 = vunpack.c.l.b16 %v3499
          %v3532 = vunpack.c.l.b16 %v3500
          %v3533 = vunpack.c.l.b16 %v3501
          %v3534 = vunpack.c.l.b16 %v3502
          %v3535 = vunpack.c.l.b16 %v3503
          %v3536 = vpack.c.b16 %v3521, %v3520
          %v3537 = vpack.c.b16 %v3523, %v3522
          %v3538 = vpack.c.b16 %v3525, %v3524
          %v3539 = vpack.c.b16 %v3527, %v3526
          %v3540 = vpack.c.b16 %v3529, %v3528
          %v3541 = vpack.c.b16 %v3531, %v3530
          %v3542 = vpack.c.b16 %v3533, %v3532
          %v3543 = vpack.c.b16 %v3535, %v3534
          %3552 = vmatprep.subr.bf16.mxu0 0
          %3553 = vmatpush1.bf16.msra.mxu0 %v3536
          %3554 = vmatprep.subr.bf16.mxu0 0
          %3555 = vmatpush1.bf16.msra.mxu0 %v3537
          %3556 = vmatprep.subr.bf16.mxu0 0
          %3557 = vmatpush1.bf16.msra.mxu0 %v3538
          %3558 = vmatprep.subr.bf16.mxu0 0
          %3559 = vmatpush1.bf16.msra.mxu0 %v3539
          %3560 = vmatprep.subr.bf16.mxu0 0
          %3561 = vmatpush1.bf16.msra.mxu0 %v3540
          %3562 = vmatprep.subr.bf16.mxu0 0
          %3563 = vmatpush1.bf16.msra.mxu0 %v3541
          %3564 = vmatprep.subr.bf16.mxu0 0
          %3565 = vmatpush1.bf16.msra.mxu0 %v3542
          %3566 = vmatprep.subr.bf16.mxu0 0
          %3567 = vmatpush1.bf16.msra.mxu0 %v3543
          %3568 = vmatprep.subr.bf16.mxu0 0
          %3569 = vmatpush1.bf16.msra.mxu0 0
          %3570 = vmatprep.subr.bf16.mxu0 0
          %3571 = vmatpush1.bf16.msra.mxu0 0
          %3572 = vmatprep.subr.bf16.mxu0 0
          %3573 = vmatpush1.bf16.msra.mxu0 0
          %3574 = vmatprep.subr.bf16.mxu0 0
          %3575 = vmatpush1.bf16.msra.mxu0 0
          %3576 = vmatprep.subr.bf16.mxu0 0
          %3577 = vmatpush1.bf16.msra.mxu0 0
          %3578 = vmatprep.subr.bf16.mxu0 0
          %3579 = vmatpush1.bf16.msra.mxu0 0
          %3580 = vmatprep.subr.bf16.mxu0 0
          %3581 = vmatpush1.bf16.msra.mxu0 0
          %3582 = vmatprep.subr.bf16.mxu0 0
          %3583 = vmatpush1.bf16.msra.mxu0 0
          %3584 = vmatprep.mubr.bf16.mxu0 0
          %3585 = vmatmul.mubr.bf16.gmra.mrb[0].mxu0 %v3487
          %v3586 = vpop.f32.mrb[0].mxu0
          %v3587 = vadd.f32 0.0, %v3586
          %v3588 = vpop.f32.mrb[0].mxu0
          %v3589 = vpop.f32.mrb[0].mxu0
          %v3590 = vadd.f32 0.0, %v3589
          %v3591 = vpop.f32.mrb[0].mxu0
          %3592 = vdwg.mxu0
          %v3593 = vadd.f32 %v3372, %v3587
          %v3594 = vadd.f32 %v3373, %v3590
          %v3595 = vld [vmem:[%s850] sm:$0x1]
          %v3597 = vlaneseq
          %v3598 = vshrl.u32 %v3597, 7
          %v3599 = vsub.s32 0, %v3598
          %v3600 = vrot.slane %v3595, %v3599
          %v3602 = vadd.f32 %v3593, %v3600
          %v3603 = vadd.f32 %v3594, %v3600
          %v3604 = vld [vmem:[%s858] sm:$0x1]
          %v3605 = vld [vmem:[%s866] sm:$0x1]
          %v3606 = vsel %vm1152, %v3602, 0.0
          %3607 = vadd.xlane.f32.xlu0 %v3606
          %v3608 = vpop.xlane.xlu0 %3607
          %v3609 = vsel %vm1152, %v3603, 0.0
          %3610 = vadd.xlane.f32.xlu0 %v3609
          %v3611 = vpop.xlane.xlu0 %3610
          %v3612 = vmul.f32 %v3608, %v1165
          %v3613 = vmul.f32 %v3611, %v1165
          %v3614 = vsub.f32 %v3602, %v3612
          %v3615 = vsub.f32 %v3603, %v3613
          %v3616 = vmul.f32 %v3614, %v3614
          %v3617 = vmul.f32 %v3615, %v3615
          %v3618 = vsel %vm1152, %v3616, 0.0
          %3619 = vadd.xlane.f32.xlu0 %v3618
          %v3620 = vpop.xlane.xlu0 %3619
          %v3621 = vsel %vm1152, %v3617, 0.0
          %3622 = vadd.xlane.f32.xlu0 %v3621
          %v3623 = vpop.xlane.xlu0 %3622
          %v3624 = vmul.f32 %v3620, %v1165
          %v3625 = vmul.f32 %v3623, %v1165
          %v3626 = vadd.f32 %v3624, 1e-06
          %v3627 = vadd.f32 %v3625, 1e-06
          %v3628 = vrsqrt.pop %v3626
          %v3629 = vrsqrt.pop %v3627
          %v3630 = vmul.f32 %v3614, %v3628
          %v3631 = vmul.f32 %v3615, %v3629
          %v3633 = vlaneseq
          %v3634 = vshrl.u32 %v3633, 7
          %v3635 = vsub.s32 0, %v3634
          %v3636 = vrot.slane %v3604, %v3635
          %v3638 = vmul.f32 %v3630, %v3636
          %v3639 = vmul.f32 %v3631, %v3636
          %v3641 = vlaneseq
          %v3642 = vshrl.u32 %v3641, 7
          %v3643 = vsub.s32 0, %v3642
          %v3644 = vrot.slane %v3605, %v3643
          %v3646 = vadd.f32 %v3638, %v3644
          %v3647 = vadd.f32 %v3639, %v3644
          %v3648 = vpack.c.bf16 %v3647, %v3646
          %s3649 = scalar_lea.vmem [#allocation2], 8
          %3650 = vst.msk [vmem:[%s3649] sm:$0xff] %vm1152, %v3648
          %v3651 = vld [vmem:[%s901] sm:$0x1]
          %v3653 = vlaneseq
          %v3654 = vshrl.u32 %v3653, 7
          %v3655 = vsub.s32 0, %v3654
          %v3656 = vrot.slane %v3651, %v3655
          %v3658 = vadd.f32 %v3602, %v3656
          %v3659 = vadd.f32 %v3603, %v3656
          %s3660 = scalar_lea.vmem [#allocation23], 16
          %3661 = vst.msk [vmem:[%s3660] sm:$0xff] %vm1152, %v3658
          %3662 = vst.msk [vmem:[%s3660 + $0x8] sm:$0xff] %vm1152, %v3659
        $region156: #{tpu_custom_call.1} parent=83 // pred_fallthru
          _
        %v3663 = vld [vmem:[#allocation2] sm:$0xff]
        %v3664 = vld [vmem:[#allocation2 + $0x8] sm:$0xff]
        %v3665 = vld [vmem:[%s875] sm:$0xff]
        %v3666 = vld [vmem:[%s875 + $0x8] sm:$0xff]
        %v3667 = vld [vmem:[%s875 + $0x10] sm:$0xff]
        %v3668 = vld [vmem:[%s875 + $0x18] sm:$0xff]
        %v3669 = vld [vmem:[%s875 + $0x20] sm:$0xff]
        %v3670 = vld [vmem:[%s875 + $0x28] sm:$0xff]
        %v3671 = vld [vmem:[%s875 + $0x30] sm:$0xff]
        %v3672 = vld [vmem:[%s875 + $0x38] sm:$0xff]
        %v3673 = vld [vmem:[%s884] sm:$0xf]
        %v3675 = vlaneseq
        %v3676 = vshrl.u32 %v3675, 7
        %v3677 = vsub.s32 0, %v3676
        %v3678 = vrot.slane %v3673, %v3677
        %v3679 = vlaneseq
        %v3680 = vshrl.u32 %v3679, 7
        %v3681 = vsub.s32 1, %v3680
        %v3682 = vrot.slane %v3673, %v3681
        %v3683 = vlaneseq
        %v3684 = vshrl.u32 %v3683, 7
        %v3685 = vsub.s32 2, %v3684
        %v3686 = vrot.slane %v3673, %v3685
        %v3687 = vlaneseq
        %v3688 = vshrl.u32 %v3687, 7
        %v3689 = vsub.s32 3, %v3688
        %v3690 = vrot.slane %v3673, %v3689
        %v3703 = vunpack.c.l.b16 %v3665
        %v3704 = vunpack.c.h.b16 %v3665
        %v3705 = vunpack.c.l.b16 %v3666
        %v3706 = vunpack.c.h.b16 %v3666
        %v3707 = vunpack.c.l.b16 %v3667
        %v3708 = vunpack.c.h.b16 %v3667
        %v3709 = vunpack.c.l.b16 %v3668
        %v3710 = vunpack.c.h.b16 %v3668
        %v3711 = vunpack.c.l.b16 %v3669
        %v3712 = vunpack.c.h.b16 %v3669
        %v3713 = vunpack.c.l.b16 %v3670
        %v3714 = vunpack.c.h.b16 %v3670
        %v3715 = vunpack.c.l.b16 %v3671
        %v3716 = vunpack.c.h.b16 %v3671
        %v3717 = vunpack.c.l.b16 %v3672
        %v3718 = vunpack.c.h.b16 %v3672
        %v3719 = vpack.c.b16 %v3707, %v3703
        %v3720 = vpack.c.b16 %v3708, %v3704
        %v3721 = vpack.c.b16 %v3709, %v3705
        %v3722 = vpack.c.b16 %v3710, %v3706
        %v3723 = vpack.c.b16 %v3715, %v3711
        %v3724 = vpack.c.b16 %v3716, %v3712
        %v3725 = vpack.c.b16 %v3717, %v3713
        %v3726 = vpack.c.b16 %v3718, %v3714
        %vm3735 = vcmask 261120
        %v3737 = vsel %vm3735, %v3663, 0
        %v3740 = vsel %vm3735, %v3664, 0
        %3742 = vmatprep.subr.bf16.mxu0 %v3720
        %3743 = vmatpush1.bf16.msra.mxu0 %v3719
        %3744 = vmatprep.subr.bf16.mxu0 %v3724
        %3745 = vmatpush1.bf16.msra.mxu0 %v3723
        %3746 = vmatprep.subr.bf16.mxu0 0
        %3747 = vmatpush1.bf16.msra.mxu0 0
        %3748 = vmatprep.subr.bf16.mxu0 0
        %3749 = vmatpush1.bf16.msra.mxu0 0
        %3750 = vmatprep.subr.bf16.mxu0 0
        %3751 = vmatpush1.bf16.msra.mxu0 0
        %3752 = vmatprep.subr.bf16.mxu0 0
        %3753 = vmatpush1.bf16.msra.mxu0 0
        %3754 = vmatprep.subr.bf16.mxu0 0
        %3755 = vmatpush1.bf16.msra.mxu0 0
        %3756 = vmatprep.subr.bf16.mxu0 0
        %3757 = vmatpush1.bf16.msra.mxu0 0
        %3758 = vmatprep.subr.bf16.mxu0 0
        %3759 = vmatpush1.bf16.msra.mxu0 0
        %3760 = vmatprep.subr.bf16.mxu0 0
        %3761 = vmatpush1.bf16.msra.mxu0 0
        %3762 = vmatprep.subr.bf16.mxu0 0
        %3763 = vmatpush1.bf16.msra.mxu0 0
        %3764 = vmatprep.subr.bf16.mxu0 0
        %3765 = vmatpush1.bf16.msra.mxu0 0
        %3766 = vmatprep.subr.bf16.mxu0 0
        %3767 = vmatpush1.bf16.msra.mxu0 0
        %3768 = vmatprep.subr.bf16.mxu0 0
        %3769 = vmatpush1.bf16.msra.mxu0 0
        %3770 = vmatprep.subr.bf16.mxu0 0
        %3771 = vmatpush1.bf16.msra.mxu0 0
        %3772 = vmatprep.subr.bf16.mxu0 0
        %3773 = vmatpush1.bf16.msra.mxu0 0
        %3774 = vmatprep.mubr.bf16.mxu0 0
        %3775 = vmatmul.mubr.bf16.gmra.mrb[0].mxu0 %v3737
        %v3776 = vpop.f32.mrb[0].mxu0
        %v3777 = vadd.f32 %v3678, %v3776
        %v3778 = vpop.f32.mrb[0].mxu0
        %v3779 = vadd.f32 %v3682, %v3778
        %v3780 = vpop.f32.mrb[0].mxu0
        %v3781 = vadd.f32 %v3678, %v3780
        %v3782 = vpop.f32.mrb[0].mxu0
        %v3783 = vadd.f32 %v3682, %v3782
        %3784 = vmatprep.mubr.bf16.mxu0 0
        %3785 = vmatmul.mubr.bf16.gmra.mrb[0].mxu0 %v3740
        %v3786 = vpop.f32.mrb[0].mxu0
        %v3787 = vadd.f32 %v3678, %v3786
        %v3788 = vpop.f32.mrb[0].mxu0
        %v3789 = vadd.f32 %v3682, %v3788
        %v3790 = vpop.f32.mrb[0].mxu0
        %v3791 = vadd.f32 %v3678, %v3790
        %v3792 = vpop.f32.mrb[0].mxu0
        %v3793 = vadd.f32 %v3682, %v3792
        %3794 = vdwg.mxu0
        %3795 = vmatprep.subr.bf16.mxu0 %v3722
        %3796 = vmatpush1.bf16.msra.mxu0 %v3721
        %3797 = vmatprep.subr.bf16.mxu0 %v3726
        %3798 = vmatpush1.bf16.msra.mxu0 %v3725
        %3799 = vmatprep.subr.bf16.mxu0 0
        %3800 = vmatpush1.bf16.msra.mxu0 0
        %3801 = vmatprep.subr.bf16.mxu0 0
        %3802 = vmatpush1.bf16.msra.mxu0 0
        %3803 = vmatprep.subr.bf16.mxu0 0
        %3804 = vmatpush1.bf16.msra.mxu0 0
        %3805 = vmatprep.subr.bf16.mxu0 0
        %3806 = vmatpush1.bf16.msra.mxu0 0
        %3807 = vmatprep.subr.bf16.mxu0 0
        %3808 = vmatpush1.bf16.msra.mxu0 0
        %3809 = vmatprep.subr.bf16.mxu0 0
        %3810 = vmatpush1.bf16.msra.mxu0 0
        %3811 = vmatprep.subr.bf16.mxu0 0
        %3812 = vmatpush1.bf16.msra.mxu0 0
        %3813 = vmatprep.subr.bf16.mxu0 0
        %3814 = vmatpush1.bf16.msra.mxu0 0
        %3815 = vmatprep.subr.bf16.mxu0 0
        %3816 = vmatpush1.bf16.msra.mxu0 0
        %3817 = vmatprep.subr.bf16.mxu0 0
        %3818 = vmatpush1.bf16.msra.mxu0 0
        %3819 = vmatprep.subr.bf16.mxu0 0
        %3820 = vmatpush1.bf16.msra.mxu0 0
        %3821 = vmatprep.subr.bf16.mxu0 0
        %3822 = vmatpush1.bf16.msra.mxu0 0
        %3823 = vmatprep.subr.bf16.mxu0 0
        %3824 = vmatpush1.bf16.msra.mxu0 0
        %3825 = vmatprep.subr.bf16.mxu0 0
        %3826 = vmatpush1.bf16.msra.mxu0 0
        %3827 = vmatprep.mubr.bf16.mxu0 0
        %3828 = vmatmul.mubr.bf16.gmra.mrb[0].mxu0 %v3737
        %v3829 = vpop.f32.mrb[0].mxu0
        %v3830 = vadd.f32 %v3686, %v3829
        %v3831 = vpop.f32.mrb[0].mxu0
        %v3832 = vadd.f32 %v3690, %v3831
        %v3833 = vpop.f32.mrb[0].mxu0
        %v3834 = vadd.f32 %v3686, %v3833
        %v3835 = vpop.f32.mrb[0].mxu0
        %v3836 = vadd.f32 %v3690, %v3835
        %3837 = vmatprep.mubr.bf16.mxu0 0
        %3838 = vmatmul.mubr.bf16.gmra.mrb[0].mxu0 %v3740
        %v3839 = vpop.f32.mrb[0].mxu0
        %v3840 = vadd.f32 %v3686, %v3839
        %v3841 = vpop.f32.mrb[0].mxu0
        %v3842 = vadd.f32 %v3690, %v3841
        %v3843 = vpop.f32.mrb[0].mxu0
        %v3844 = vadd.f32 %v3686, %v3843
        %v3845 = vpop.f32.mrb[0].mxu0
        %v3846 = vadd.f32 %v3690, %v3845
        %3847 = vdwg.mxu0
        %v3848 = vmul.f32 %v3777, 0.5
        %v3849 = vmul.f32 %v3779, 0.5
        %v3850 = vmul.f32 %v3830, 0.5
        %v3851 = vmul.f32 %v3832, 0.5
        %v3852 = vmul.f32 %v3781, 0.5
        %v3853 = vmul.f32 %v3783, 0.5
        %v3854 = vmul.f32 %v3834, 0.5
        %v3855 = vmul.f32 %v3836, 0.5
        %v3856 = vmul.f32 %v3787, 0.5
        %v3857 = vmul.f32 %v3789, 0.5
        %v3858 = vmul.f32 %v3840, 0.5
        %v3859 = vmul.f32 %v3842, 0.5
        %v3860 = vmul.f32 %v3791, 0.5
        %v3861 = vmul.f32 %v3793, 0.5
        %v3862 = vmul.f32 %v3844, 0.5
        %v3863 = vmul.f32 %v3846, 0.5
        %v3864 = vmul.f32 %v3777, 0.044715
        %v3865 = vmul.f32 %v3779, 0.044715
        %v3866 = vmul.f32 %v3830, 0.044715
        %v3867 = vmul.f32 %v3832, 0.044715
        %v3868 = vmul.f32 %v3781, 0.044715
        %v3869 = vmul.f32 %v3783, 0.044715
        %v3870 = vmul.f32 %v3834, 0.044715
        %v3871 = vmul.f32 %v3836, 0.044715
        %v3872 = vmul.f32 %v3787, 0.044715
        %v3873 = vmul.f32 %v3789, 0.044715
        %v3874 = vmul.f32 %v3840, 0.044715
        %v3875 = vmul.f32 %v3842, 0.044715
        %v3876 = vmul.f32 %v3791, 0.044715
        %v3877 = vmul.f32 %v3793, 0.044715
        %v3878 = vmul.f32 %v3844, 0.044715
        %v3879 = vmul.f32 %v3846, 0.044715
        %v3880 = vmul.f32 %v3864, %v3777
        %v3881 = vmul.f32 %v3865, %v3779
        %v3882 = vmul.f32 %v3866, %v3830
        %v3883 = vmul.f32 %v3867, %v3832
        %v3884 = vmul.f32 %v3868, %v3781
        %v3885 = vmul.f32 %v3869, %v3783
        %v3886 = vmul.f32 %v3870, %v3834
        %v3887 = vmul.f32 %v3871, %v3836
        %v3888 = vmul.f32 %v3872, %v3787
        %v3889 = vmul.f32 %v3873, %v3789
        %v3890 = vmul.f32 %v3874, %v3840
        %v3891 = vmul.f32 %v3875, %v3842
        %v3892 = vmul.f32 %v3876, %v3791
        %v3893 = vmul.f32 %v3877, %v3793
        %v3894 = vmul.f32 %v3878, %v3844
        %v3895 = vmul.f32 %v3879, %v3846
        %v3896 = vmul.f32 %v3880, %v3777
        %v3897 = vmul.f32 %v3881, %v3779
        %v3898 = vmul.f32 %v3882, %v3830
        %v3899 = vmul.f32 %v3883, %v3832
        %v3900 = vmul.f32 %v3884, %v3781
        %v3901 = vmul.f32 %v3885, %v3783
        %v3902 = vmul.f32 %v3886, %v3834
        %v3903 = vmul.f32 %v3887, %v3836
        %v3904 = vmul.f32 %v3888, %v3787
        %v3905 = vmul.f32 %v3889, %v3789
        %v3906 = vmul.f32 %v3890, %v3840
        %v3907 = vmul.f32 %v3891, %v3842
        %v3908 = vmul.f32 %v3892, %v3791
        %v3909 = vmul.f32 %v3893, %v3793
        %v3910 = vmul.f32 %v3894, %v3844
        %v3911 = vmul.f32 %v3895, %v3846
        %v3912 = vadd.f32 %v3777, %v3896
        %v3913 = vadd.f32 %v3779, %v3897
        %v3914 = vadd.f32 %v3830, %v3898
        %v3915 = vadd.f32 %v3832, %v3899
        %v3916 = vadd.f32 %v3781, %v3900
        %v3917 = vadd.f32 %v3783, %v3901
        %v3918 = vadd.f32 %v3834, %v3902
        %v3919 = vadd.f32 %v3836, %v3903
        %v3920 = vadd.f32 %v3787, %v3904
        %v3921 = vadd.f32 %v3789, %v3905
        %v3922 = vadd.f32 %v3840, %v3906
        %v3923 = vadd.f32 %v3842, %v3907
        %v3924 = vadd.f32 %v3791, %v3908
        %v3925 = vadd.f32 %v3793, %v3909
        %v3926 = vadd.f32 %v3844, %v3910
        %v3927 = vadd.f32 %v3846, %v3911
        %v3928 = vmul.f32 %v3912, 0.7978845
        %v3929 = vmul.f32 %v3913, 0.7978845
        %v3930 = vmul.f32 %v3914, 0.7978845
        %v3931 = vmul.f32 %v3915, 0.7978845
        %v3932 = vmul.f32 %v3916, 0.7978845
        %v3933 = vmul.f32 %v3917, 0.7978845
        %v3934 = vmul.f32 %v3918, 0.7978845
        %v3935 = vmul.f32 %v3919, 0.7978845
        %v3936 = vmul.f32 %v3920, 0.7978845
        %v3937 = vmul.f32 %v3921, 0.7978845
        %v3938 = vmul.f32 %v3922, 0.7978845
        %v3939 = vmul.f32 %v3923, 0.7978845
        %v3940 = vmul.f32 %v3924, 0.7978845
        %v3941 = vmul.f32 %v3925, 0.7978845
        %v3942 = vmul.f32 %v3926, 0.7978845
        %v3943 = vmul.f32 %v3927, 0.7978845
        %v3944 = vtanh.pop %v3928
        %v3945 = vtanh.pop %v3929
        %v3946 = vtanh.pop %v3930
        %v3947 = vtanh.pop %v3931
        %v3948 = vtanh.pop %v3932
        %v3949 = vtanh.pop %v3933
        %v3950 = vtanh.pop %v3934
        %v3951 = vtanh.pop %v3935
        %v3952 = vtanh.pop %v3936
        %v3953 = vtanh.pop %v3937
        %v3954 = vtanh.pop %v3938
        %v3955 = vtanh.pop %v3939
        %v3956 = vtanh.pop %v3940
        %v3957 = vtanh.pop %v3941
        %v3958 = vtanh.pop %v3942
        %v3959 = vtanh.pop %v3943
        %v3960 = vadd.f32 %v3944, 1.0
        %v3961 = vadd.f32 %v3945, 1.0
        %v3962 = vadd.f32 %v3946, 1.0
        %v3963 = vadd.f32 %v3947, 1.0
        %v3964 = vadd.f32 %v3948, 1.0
        %v3965 = vadd.f32 %v3949, 1.0
        %v3966 = vadd.f32 %v3950, 1.0
        %v3967 = vadd.f32 %v3951, 1.0
        %v3968 = vadd.f32 %v3952, 1.0
        %v3969 = vadd.f32 %v3953, 1.0
        %v3970 = vadd.f32 %v3954, 1.0
        %v3971 = vadd.f32 %v3955, 1.0
        %v3972 = vadd.f32 %v3956, 1.0
        %v3973 = vadd.f32 %v3957, 1.0
        %v3974 = vadd.f32 %v3958, 1.0
        %v3975 = vadd.f32 %v3959, 1.0
        %v3976 = vmul.f32 %v3848, %v3960
        %v3977 = vmul.f32 %v3849, %v3961
        %v3978 = vmul.f32 %v3850, %v3962
        %v3979 = vmul.f32 %v3851, %v3963
        %v3980 = vmul.f32 %v3852, %v3964
        %v3981 = vmul.f32 %v3853, %v3965
        %v3982 = vmul.f32 %v3854, %v3966
        %v3983 = vmul.f32 %v3855, %v3967
        %v3984 = vmul.f32 %v3856, %v3968
        %v3985 = vmul.f32 %v3857, %v3969
        %v3986 = vmul.f32 %v3858, %v3970
        %v3987 = vmul.f32 %v3859, %v3971
        %v3988 = vmul.f32 %v3860, %v3972
        %v3989 = vmul.f32 %v3861, %v3973
        %v3990 = vmul.f32 %v3862, %v3974
        %v3991 = vmul.f32 %v3863, %v3975
        %v3992 = vpack.c.bf16 %v3980, %v3976
        %v3993 = vpack.c.bf16 %v3981, %v3977
        %v3994 = vpack.c.bf16 %v3982, %v3978
        %v3995 = vpack.c.bf16 %v3983, %v3979
        %v3996 = vpack.c.bf16 %v3988, %v3984
        %v3997 = vpack.c.bf16 %v3989, %v3985
        %v3998 = vpack.c.bf16 %v3990, %v3986
        %v3999 = vpack.c.bf16 %v3991, %v3987
        %v4000 = vld [vmem:[%s893] sm:$0xf]
        %v4001 = vld [vmem:[%s893 + $0x4] sm:$0xf]
        %v4002 = vld [vmem:[%s893 + $0x8] sm:$0xf]
        %v4003 = vld [vmem:[%s893 + $0xc] sm:$0xf]
        %v4004 = vld [vmem:[%s893 + $0x10] sm:$0xf]
        %v4005 = vld [vmem:[%s893 + $0x14] sm:$0xf]
        %v4006 = vld [vmem:[%s893 + $0x18] sm:$0xf]
        %v4007 = vld [vmem:[%s893 + $0x1c] sm:$0xf]
        %v4008 = vld [vmem:[%s893 + $0x20] sm:$0xf]
        %v4009 = vld [vmem:[%s893 + $0x24] sm:$0xf]
        %v4010 = vld [vmem:[%s893 + $0x28] sm:$0xf]
        %v4011 = vld [vmem:[%s893 + $0x2c] sm:$0xf]
        %v4012 = vld [vmem:[%s893 + $0x30] sm:$0xf]
        %v4013 = vld [vmem:[%s893 + $0x34] sm:$0xf]
        %v4014 = vld [vmem:[%s893 + $0x38] sm:$0xf]
        %v4015 = vld [vmem:[%s893 + $0x3c] sm:$0xf]
        %v4016 = vld [vmem:[%s893 + $0x40] sm:$0xf]
        %v4017 = vld [vmem:[%s893 + $0x44] sm:$0xf]
        %v4018 = vld [vmem:[%s893 + $0x48] sm:$0xf]
        %v4019 = vld [vmem:[%s893 + $0x4c] sm:$0xf]
        %v4020 = vld [vmem:[%s893 + $0x50] sm:$0xf]
        %v4021 = vld [vmem:[%s893 + $0x54] sm:$0xf]
        %v4022 = vld [vmem:[%s893 + $0x58] sm:$0xf]
        %v4023 = vld [vmem:[%s893 + $0x5c] sm:$0xf]
        %v4024 = vld [vmem:[%s893 + $0x60] sm:$0xf]
        %v4025 = vld [vmem:[%s893 + $0x64] sm:$0xf]
        %v4026 = vld [vmem:[%s893 + $0x68] sm:$0xf]
        %v4027 = vld [vmem:[%s893 + $0x6c] sm:$0xf]
        %v4028 = vld [vmem:[%s893 + $0x70] sm:$0xf]
        %v4029 = vld [vmem:[%s893 + $0x74] sm:$0xf]
        %v4030 = vld [vmem:[%s893 + $0x78] sm:$0xf]
        %v4031 = vld [vmem:[%s893 + $0x7c] sm:$0xf]
        %v4032 = vld [vmem:[%s893 + $0x80] sm:$0xf]
        %v4033 = vld [vmem:[%s893 + $0x84] sm:$0xf]
        %v4034 = vld [vmem:[%s893 + $0x88] sm:$0xf]
        %v4035 = vld [vmem:[%s893 + $0x8c] sm:$0xf]
        %v4036 = vld [vmem:[%s893 + $0x90] sm:$0xf]
        %v4037 = vld [vmem:[%s893 + $0x94] sm:$0xf]
        %v4038 = vld [vmem:[%s893 + $0x98] sm:$0xf]
        %v4039 = vld [vmem:[%s893 + $0x9c] sm:$0xf]
        %v4040 = vld [vmem:[%s893 + $0xa0] sm:$0xf]
        %v4041 = vld [vmem:[%s893 + $0xa4] sm:$0xf]
        %v4042 = vld [vmem:[%s893 + $0xa8] sm:$0xf]
        %v4043 = vld [vmem:[%s893 + $0xac] sm:$0xf]
        %v4044 = vld [vmem:[%s893 + $0xb0] sm:$0xf]
        %v4045 = vld [vmem:[%s893 + $0xb4] sm:$0xf]
        %v4046 = vld [vmem:[%s893 + $0xb8] sm:$0xf]
        %v4047 = vld [vmem:[%s893 + $0xbc] sm:$0xf]
        %v4048 = vld [vmem:[%s893 + $0xc0] sm:$0xf]
        %v4049 = vld [vmem:[%s893 + $0xc4] sm:$0xf]
        %v4050 = vld [vmem:[%s893 + $0xc8] sm:$0xf]
        %v4051 = vld [vmem:[%s893 + $0xcc] sm:$0xf]
        %v4052 = vld [vmem:[%s893 + $0xd0] sm:$0xf]
        %v4053 = vld [vmem:[%s893 + $0xd4] sm:$0xf]
        %v4054 = vld [vmem:[%s893 + $0xd8] sm:$0xf]
        %v4055 = vld [vmem:[%s893 + $0xdc] sm:$0xf]
        %v4056 = vld [vmem:[%s893 + $0xe0] sm:$0xf]
        %v4057 = vld [vmem:[%s893 + $0xe4] sm:$0xf]
        %v4058 = vld [vmem:[%s893 + $0xe8] sm:$0xf]
        %v4059 = vld [vmem:[%s893 + $0xec] sm:$0xf]
        %v4060 = vld [vmem:[%s893 + $0xf0] sm:$0xf]
        %v4061 = vld [vmem:[%s893 + $0xf4] sm:$0xf]
        %v4062 = vld [vmem:[%s893 + $0xf8] sm:$0xf]
        %v4063 = vld [vmem:[%s893 + $0xfc] sm:$0xf]
        %v4128 = vunpack.c.l.b16 %v4000
        %v4129 = vunpack.c.l.b16 %v4001
        %v4130 = vunpack.c.l.b16 %v4002
        %v4131 = vunpack.c.l.b16 %v4003
        %v4132 = vunpack.c.l.b16 %v4004
        %v4133 = vunpack.c.l.b16 %v4005
        %v4134 = vunpack.c.l.b16 %v4006
        %v4135 = vunpack.c.l.b16 %v4007
        %v4136 = vunpack.c.l.b16 %v4008
        %v4137 = vunpack.c.l.b16 %v4009
        %v4138 = vunpack.c.l.b16 %v4010
        %v4139 = vunpack.c.l.b16 %v4011
        %v4140 = vunpack.c.l.b16 %v4012
        %v4141 = vunpack.c.l.b16 %v4013
        %v4142 = vunpack.c.l.b16 %v4014
        %v4143 = vunpack.c.l.b16 %v4015
        %v4144 = vunpack.c.l.b16 %v4016
        %v4145 = vunpack.c.l.b16 %v4017
        %v4146 = vunpack.c.l.b16 %v4018
        %v4147 = vunpack.c.l.b16 %v4019
        %v4148 = vunpack.c.l.b16 %v4020
        %v4149 = vunpack.c.l.b16 %v4021
        %v4150 = vunpack.c.l.b16 %v4022
        %v4151 = vunpack.c.l.b16 %v4023
        %v4152 = vunpack.c.l.b16 %v4024
        %v4153 = vunpack.c.l.b16 %v4025
        %v4154 = vunpack.c.l.b16 %v4026
        %v4155 = vunpack.c.l.b16 %v4027
        %v4156 = vunpack.c.l.b16 %v4028
        %v4157 = vunpack.c.l.b16 %v4029
        %v4158 = vunpack.c.l.b16 %v4030
        %v4159 = vunpack.c.l.b16 %v4031
        %v4160 = vunpack.c.l.b16 %v4032
        %v4161 = vunpack.c.l.b16 %v4033
        %v4162 = vunpack.c.l.b16 %v4034
        %v4163 = vunpack.c.l.b16 %v4035
        %v4164 = vunpack.c.l.b16 %v4036
        %v4165 = vunpack.c.l.b16 %v4037
        %v4166 = vunpack.c.l.b16 %v4038
        %v4167 = vunpack.c.l.b16 %v4039
        %v4168 = vunpack.c.l.b16 %v4040
        %v4169 = vunpack.c.l.b16 %v4041
        %v4170 = vunpack.c.l.b16 %v4042
        %v4171 = vunpack.c.l.b16 %v4043
        %v4172 = vunpack.c.l.b16 %v4044
        %v4173 = vunpack.c.l.b16 %v4045
        %v4174 = vunpack.c.l.b16 %v4046
        %v4175 = vunpack.c.l.b16 %v4047
        %v4176 = vunpack.c.l.b16 %v4048
        %v4177 = vunpack.c.l.b16 %v4049
        %v4178 = vunpack.c.l.b16 %v4050
        %v4179 = vunpack.c.l.b16 %v4051
        %v4180 = vunpack.c.l.b16 %v4052
        %v4181 = vunpack.c.l.b16 %v4053
        %v4182 = vunpack.c.l.b16 %v4054
        %v4183 = vunpack.c.l.b16 %v4055
        %v4184 = vunpack.c.l.b16 %v4056
        %v4185 = vunpack.c.l.b16 %v4057
        %v4186 = vunpack.c.l.b16 %v4058
        %v4187 = vunpack.c.l.b16 %v4059
        %v4188 = vunpack.c.l.b16 %v4060
        %v4189 = vunpack.c.l.b16 %v4061
        %v4190 = vunpack.c.l.b16 %v4062
        %v4191 = vunpack.c.l.b16 %v4063
        %v4192 = vpack.c.b16 %v4129, %v4128
        %v4193 = vpack.c.b16 %v4131, %v4130
        %v4194 = vpack.c.b16 %v4133, %v4132
        %v4195 = vpack.c.b16 %v4135, %v4134
        %v4196 = vpack.c.b16 %v4137, %v4136
        %v4197 = vpack.c.b16 %v4139, %v4138
        %v4198 = vpack.c.b16 %v4141, %v4140
        %v4199 = vpack.c.b16 %v4143, %v4142
        %v4200 = vpack.c.b16 %v4145, %v4144
        %v4201 = vpack.c.b16 %v4147, %v4146
        %v4202 = vpack.c.b16 %v4149, %v4148
        %v4203 = vpack.c.b16 %v4151, %v4150
        %v4204 = vpack.c.b16 %v4153, %v4152
        %v4205 = vpack.c.b16 %v4155, %v4154
        %v4206 = vpack.c.b16 %v4157, %v4156
        %v4207 = vpack.c.b16 %v4159, %v4158
        %v4208 = vpack.c.b16 %v4161, %v4160
        %v4209 = vpack.c.b16 %v4163, %v4162
        %v4210 = vpack.c.b16 %v4165, %v4164
        %v4211 = vpack.c.b16 %v4167, %v4166
        %v4212 = vpack.c.b16 %v4169, %v4168
        %v4213 = vpack.c.b16 %v4171, %v4170
        %v4214 = vpack.c.b16 %v4173, %v4172
        %v4215 = vpack.c.b16 %v4175, %v4174
        %v4216 = vpack.c.b16 %v4177, %v4176
        %v4217 = vpack.c.b16 %v4179, %v4178
        %v4218 = vpack.c.b16 %v4181, %v4180
        %v4219 = vpack.c.b16 %v4183, %v4182
        %v4220 = vpack.c.b16 %v4185, %v4184
        %v4221 = vpack.c.b16 %v4187, %v4186
        %v4222 = vpack.c.b16 %v4189, %v4188
        %v4223 = vpack.c.b16 %v4191, %v4190
        %4256 = vmatprep.subr.bf16.mxu0 0
        %4257 = vmatpush1.bf16.msra.mxu0 %v4192
        %4258 = vmatprep.subr.bf16.mxu0 0
        %4259 = vmatpush1.bf16.msra.mxu0 %v4193
        %4260 = vmatprep.subr.bf16.mxu0 0
        %4261 = vmatpush1.bf16.msra.mxu0 %v4194
        %4262 = vmatprep.subr.bf16.mxu0 0
        %4263 = vmatpush1.bf16.msra.mxu0 %v4195
        %4264 = vmatprep.subr.bf16.mxu0 0
        %4265 = vmatpush1.bf16.msra.mxu0 %v4196
        %4266 = vmatprep.subr.bf16.mxu0 0
        %4267 = vmatpush1.bf16.msra.mxu0 %v4197
        %4268 = vmatprep.subr.bf16.mxu0 0
        %4269 = vmatpush1.bf16.msra.mxu0 %v4198
        %4270 = vmatprep.subr.bf16.mxu0 0
        %4271 = vmatpush1.bf16.msra.mxu0 %v4199
        %4272 = vmatprep.subr.bf16.mxu0 0
        %4273 = vmatpush1.bf16.msra.mxu0 %v4200
        %4274 = vmatprep.subr.bf16.mxu0 0
        %4275 = vmatpush1.bf16.msra.mxu0 %v4201
        %4276 = vmatprep.subr.bf16.mxu0 0
        %4277 = vmatpush1.bf16.msra.mxu0 %v4202
        %4278 = vmatprep.subr.bf16.mxu0 0
        %4279 = vmatpush1.bf16.msra.mxu0 %v4203
        %4280 = vmatprep.subr.bf16.mxu0 0
        %4281 = vmatpush1.bf16.msra.mxu0 %v4204
        %4282 = vmatprep.subr.bf16.mxu0 0
        %4283 = vmatpush1.bf16.msra.mxu0 %v4205
        %4284 = vmatprep.subr.bf16.mxu0 0
        %4285 = vmatpush1.bf16.msra.mxu0 %v4206
        %4286 = vmatprep.subr.bf16.mxu0 0
        %4287 = vmatpush1.bf16.msra.mxu0 %v4207
        %4288 = vmatprep.mubr.bf16.mxu0 %v3993
        %4289 = vmatmul.mubr.bf16.gmra.mrb[0].mxu0 %v3992
        %v4290 = vpop.f32.mrb[0].mxu0
        %v4291 = vadd.f32 0.0, %v4290
        %v4292 = vpop.f32.mrb[0].mxu0
        %v4293 = vpop.f32.mrb[0].mxu0
        %v4294 = vadd.f32 0.0, %v4293
        %v4295 = vpop.f32.mrb[0].mxu0
        %4296 = vmatprep.mubr.bf16.mxu0 %v3997
        %4297 = vmatmul.mubr.bf16.gmra.mrb[0].mxu0 %v3996
        %v4298 = vpop.f32.mrb[0].mxu0
        %v4299 = vadd.f32 0.0, %v4298
        %v4300 = vpop.f32.mrb[0].mxu0
        %v4301 = vpop.f32.mrb[0].mxu0
        %v4302 = vadd.f32 0.0, %v4301
        %v4303 = vpop.f32.mrb[0].mxu0
        %4304 = vdwg.mxu0
        %4305 = vmatprep.subr.bf16.mxu0 0
        %4306 = vmatpush1.bf16.msra.mxu0 %v4208
        %4307 = vmatprep.subr.bf16.mxu0 0
        %4308 = vmatpush1.bf16.msra.mxu0 %v4209
        %4309 = vmatprep.subr.bf16.mxu0 0
        %4310 = vmatpush1.bf16.msra.mxu0 %v4210
        %4311 = vmatprep.subr.bf16.mxu0 0
        %4312 = vmatpush1.bf16.msra.mxu0 %v4211
        %4313 = vmatprep.subr.bf16.mxu0 0
        %4314 = vmatpush1.bf16.msra.mxu0 %v4212
        %4315 = vmatprep.subr.bf16.mxu0 0
        %4316 = vmatpush1.bf16.msra.mxu0 %v4213
        %4317 = vmatprep.subr.bf16.mxu0 0
        %4318 = vmatpush1.bf16.msra.mxu0 %v4214
        %4319 = vmatprep.subr.bf16.mxu0 0
        %4320 = vmatpush1.bf16.msra.mxu0 %v4215
        %4321 = vmatprep.subr.bf16.mxu0 0
        %4322 = vmatpush1.bf16.msra.mxu0 %v4216
        %4323 = vmatprep.subr.bf16.mxu0 0
        %4324 = vmatpush1.bf16.msra.mxu0 %v4217
        %4325 = vmatprep.subr.bf16.mxu0 0
        %4326 = vmatpush1.bf16.msra.mxu0 %v4218
        %4327 = vmatprep.subr.bf16.mxu0 0
        %4328 = vmatpush1.bf16.msra.mxu0 %v4219
        %4329 = vmatprep.subr.bf16.mxu0 0
        %4330 = vmatpush1.bf16.msra.mxu0 %v4220
        %4331 = vmatprep.subr.bf16.mxu0 0
        %4332 = vmatpush1.bf16.msra.mxu0 %v4221
        %4333 = vmatprep.subr.bf16.mxu0 0
        %4334 = vmatpush1.bf16.msra.mxu0 %v4222
        %4335 = vmatprep.subr.bf16.mxu0 0
        %4336 = vmatpush1.bf16.msra.mxu0 %v4223
        %4337 = vmatprep.mubr.bf16.mxu0 %v3995
        %4338 = vmatmul.mubr.bf16.gmra.mrb[0].mxu0 %v3994
        %v4339 = vpop.f32.mrb[0].mxu0
        %v4340 = vadd.f32 %v4291, %v4339
        %v4341 = vpop.f32.mrb[0].mxu0
        %v4342 = vpop.f32.mrb[0].mxu0
        %v4343 = vadd.f32 %v4294, %v4342
        %v4344 = vpop.f32.mrb[0].mxu0
        %4345 = vmatprep.mubr.bf16.mxu0 %v3999
        %4346 = vmatmul.mubr.bf16.gmra.mrb[0].mxu0 %v3998
        %v4347 = vpop.f32.mrb[0].mxu0
        %v4348 = vadd.f32 %v4299, %v4347
        %v4349 = vpop.f32.mrb[0].mxu0
        %v4350 = vpop.f32.mrb[0].mxu0
        %v4351 = vadd.f32 %v4302, %v4350
        %v4352 = vpop.f32.mrb[0].mxu0
        %4353 = vdwg.mxu0
        %v4354 = vld [vmem:[#allocation23] sm:$0xff]
        %v4355 = vld [vmem:[#allocation23 + $0x8] sm:$0xff]
        %v4356 = vld [vmem:[#allocation23 + $0x10] sm:$0xff]
        %v4357 = vld [vmem:[#allocation23 + $0x18] sm:$0xff]
        %v4358 = vadd.f32 %v4354, %v4340
        %v4359 = vadd.f32 %v4355, %v4343
        %v4360 = vadd.f32 %v4356, %v4348
        %v4361 = vadd.f32 %v4357, %v4351
        %4362 = vst.msk [vmem:[#allocation23] sm:$0xff] %vm3735, %v4358
        %4363 = vst.msk [vmem:[#allocation23 + $0x8] sm:$0xff] %vm3735, %v4359
        %4364 = vst.msk [vmem:[#allocation23 + $0x10] sm:$0xff] %vm3735, %v4360
        %4365 = vst.msk [vmem:[#allocation23 + $0x18] sm:$0xff] %vm3735, %v4361
        // Predicated region
        $region157: #{tpu_custom_call.1} parent=83 // pred_check
          %p4366 = pneg %p475
        $region158: #{tpu_custom_call.1} parent=83 // pred_check_branch
          %4368 = sbr.rel (%p4366) target = $region160
        $region159: #{tpu_custom_call.1} parent=83 // pred_region
          %s4369 = smul.u32 2, %s36
          %s4371 = ssub.s32 512, 512
          %4372 = vsyncadd [#allocation5], %s4371
          %s4373 = smul.addr %s4369, 2
          %s4374 = smul.addr %s4373, 128
          %s4375 = scalar_lea.hbm %s16, %s4374
          %s4376 = sshll.u32 [#allocation23], 4
          %s4377 = int_to_ptr.vmem [resolvable:$true] %s4376
          %4382 = dma.vmem_to_hbm [thread:$0]  %s4377, 512, %s4375, [#allocation5], 128, 128, 8
        $region160: #{tpu_custom_call.1} parent=83 // pred_fallthru
          _
        // Predicated region
        $region161: #{tpu_custom_call.1} parent=83 // pred_check
          %p4383 = pneg %p475
        $region162: #{tpu_custom_call.1} parent=83 // pred_check_branch
          %4385 = sbr.rel (%p4383) target = $region164
        $region163: #{tpu_custom_call.1} parent=83 // pred_region
          %4386 = dma.done [#allocation5], 512
        $region164: #{tpu_custom_call.1} parent=83 // pred_fallthru
          _
      $region84: #{tpu_custom_call.1} parent=5 // pred_fallthru
        _
      %p4387 = scmp.le.s32.totalorder 2, %s26
      // Predicated region
      $region165: #{tpu_custom_call.1} parent=5 // pred_check
        %p4388 = pneg %p4387
      $region166: #{tpu_custom_call.1} parent=5 // pred_check_branch
        %4390 = sbr.rel (%p4388) target = $region168
      $region167: #{tpu_custom_call.1} parent=5 // pred_region
        %s4391 = ssub.s32 %s26, 2
      $region168: #{tpu_custom_call.1} parent=5 // pred_fallthru
        _
    $region6: #{tpu_custom_call.1} parent=1 // loop_footer
      %s30 = sadd.s32 1, %s26
    $region7: #{tpu_custom_call.1} parent=1 // loop_footer_branch
      %25 = sbr.rel target = $region3
    $region8: #{tpu_custom_call.1} parent=1 // loop_exit
      _
    %4392 = vsyncpa [#allocation4], 1
    %s4393 = scalar_lea.sflag [#allocation4], 1
    %4394 = vsyncpa %s4393, 1
    %4395 = vsyncpa [#allocation7], 1
    %4396 = vsyncpa [#allocation10], 1
    %4397 = vsyncpa [#allocation5], 1
    %s4398 = scalar_lea.sflag [#allocation5], 1
    %4399 = vsyncpa %s4398, 1

</llo_original>
